<compile_context>
chip_gen: v6e
topology: v6e:2x2x1
jax: 0.10.0
libtpu: 0.0.40
codegen_flags: <defaults>
</compile_context>

<pallas_src>
import functools

import jax
import jax.numpy as jnp
from jax.experimental import pallas as pl
from jax.experimental.pallas import tpu as pltpu


# ----------------------------------------------------------------------------
# small helpers
# ----------------------------------------------------------------------------

def _round_up(x, n):
    return ((x + n - 1) // n) * n


def _sum_all(x):
    """(R, D) -> (1, 1) full reduction (keepdims form keeps stores simple)."""
    return jnp.sum(jnp.sum(x, axis=1, keepdims=True), axis=0, keepdims=True)


# ----------------------------------------------------------------------------
# Pallas kernels
# ----------------------------------------------------------------------------

def _conv_kernel(x_ref, w_ref, b_ref, *rest, taps, m, ho, wo, wps,
                 activation, slope, with_stats):
    """Implicit-GEMM conv for one sample.

    x_ref : (1, n_phase, Mpad, Cin)  phase-flattened padded input, bf16
    w_ref : (kh*kw, Cin, Cout)       bf16
    b_ref : (1, Cout)                f32
    rest  : out (1, m, Cout) [, csum (1,1,Cout), csq (1,1,Cout)], acc scratch (m, Cout)
    """
    acc_ref = rest[-1]
    out_refs = rest[:-1]
    acc_ref[...] = jnp.zeros_like(acc_ref)
    for idx, (ph, off) in enumerate(taps):
        a = x_ref[0, ph, off:off + m, :]                       # static slice -> (m, Cin)
        acc_ref[...] += jnp.dot(a, w_ref[idx], preferred_element_type=jnp.float32)
    acc = acc_ref[...]
    if with_stats:
        # per-sample channel sum / sum-of-squares over the *valid* (ho, wo) region only
        rows = jax.lax.broadcasted_iota(jnp.int32, (m, 1), 0)
        valid = jnp.logical_and(rows // wps < ho, rows % wps < wo).astype(jnp.float32)
        masked = acc * valid
        out_refs[1][0] = jnp.sum(masked, axis=0, keepdims=True)
        out_refs[2][0] = jnp.sum(masked * acc, axis=0, keepdims=True)
    acc = acc + b_ref[...]
    if activation == "leaky":
        acc = jnp.where(acc >= 0.0, acc, slope * acc)
    elif activation == "relu":
        acc = jnp.maximum(acc, 0.0)
    out_refs[0][0] = acc


def _affine_leaky_kernel(x_ref, s_ref, t_ref, o_ref, *, slope):
    """Fused BatchNorm-apply (per-channel scale/shift) + LeakyReLU, lane-dense NHWC."""
    y = x_ref[0] * s_ref[...] + t_ref[...]
    o_ref[0] = jnp.where(y >= 0.0, y, slope * y)


def _nll_diff_kernel(x_ref, y_ref, p_ref, lv_ref, rec_ref, nll_ref, diff_ref, *, pw):
    """Fused |x-y| (+ perceptual), NLL, and temporal l1_diff for one frame-group."""
    t = x_ref.shape[1]
    x = x_ref[0]                                   # (t, D)
    y = y_ref[0]
    rec = jnp.abs(x - y)
    if pw > 0.0:
        rec = rec + pw * p_ref[0]                  # (t, 1) broadcast
    lv = lv_ref[...]                               # (1, 1)
    nll = rec * jnp.exp(-lv) + lv
    rec_ref[...] = _sum_all(rec).reshape(1, 1, 1)
    nll_ref[...] = _sum_all(nll).reshape(1, 1, 1)
    d = (x_ref[0, :t - 1, :] - x_ref[0, 1:t, :]) - (y_ref[0, :t - 1, :] - y_ref[0, 1:t, :])
    diff_ref[...] = _sum_all(jnp.abs(d)).reshape(1, 1, 1)


def _kl_kernel(mu_ref, lv_ref, o_ref):
    mu = mu_ref[0]                                 # (1, L)
    lv = lv_ref[0]
    o_ref[...] = (0.5 * _sum_all(mu * mu + jnp.exp(lv) - 1.0 - lv)).reshape(1, 1, 1)


def _lpips_stage_kernel(fx_ref, fy_ref, w_ref, o_ref, *, inv_hw):
    fx = fx_ref[0]                                 # (HW, C)
    fy = fy_ref[0]
    nx = fx * pl.reciprocal(jnp.sqrt(jnp.sum(fx * fx, axis=1, keepdims=True)) + 1e-10,
                            approx=True)
    ny = fy * pl.reciprocal(jnp.sqrt(jnp.sum(fy * fy, axis=1, keepdims=True)) + 1e-10,
                            approx=True)
    d = nx - ny
    o_ref[...] = (_sum_all(d * d * w_ref[...]) * inv_hw).reshape(1, 1, 1)


# ----------------------------------------------------------------------------
# Convolution wrapper (phase-decomposed implicit GEMM, no im2col)
# ----------------------------------------------------------------------------

def _phase_flatten(x, kh, kw, stride, pad):
    """(N,H,W,C) -> (N, stride^2, Hps*Wps + halo, C) bf16 phase-flattened padded input."""
    n, h, w, c = x.shape
    ho = (h + 2 * pad - kh) // stride + 1
    wo = (w + 2 * pad - kw) // stride + 1
    hp = max(stride * (ho - 1) + kh, h + 2 * pad)
    wp = max(stride * (wo - 1) + kw, w + 2 * pad)
    hps = -(-hp // stride)
    wps = -(-wp // stride)
    hp2, wp2 = hps * stride, wps * stride
    xp = jnp.pad(x, ((0, 0), (pad, hp2 - h - pad), (pad, wp2 - w - pad), (0, 0)))
    ph = xp.reshape(n, hps, stride, wps, stride, c).transpose(0, 2, 4, 1, 3, 5)
    phf = ph.reshape(n, stride * stride, hps * wps, c)
    di_max, dj_max = (kh - 1) // stride, (kw - 1) // stride
    mpad = hps * wps + di_max * wps + dj_max
    phf = jnp.pad(phf, ((0, 0), (0, 0), (0, mpad - hps * wps), (0, 0)))
    return phf, ho, wo, hps, wps


def conv2d_flat(x, w, b, stride, pad=1, activation="none", slope=0.2, with_stats=False):
    """x: (N,H,W,Cin) NHWC; w: (kh,kw,Cin,Cout); b: (Cout,) or None.

    Returns (out_flat (N, Hps*Wps, Cout_p) f32, stats_or_None, meta).
    """
    n, _, _, cin = x.shape
    kh, kw, _, cout = w.shape
    cout_p = 128 if cout < 8 else cout          # lane-dense store for the Cout=1 head
    cin_p = max(cin, 8)

    phf, ho, wo, hps, wps = _phase_flatten(x.astype(jnp.bfloat16), kh, kw, stride, pad)
    nph = stride * stride
    m = hps * wps
    mpad = phf.shape[2]
    taps = tuple(((i % stride) * stride + (j % stride), (i // stride) * wps + (j // stride))
                 for i in range(kh) for j in range(kw))

    wmat = w.reshape(kh * kw, cin, cout)
    bias = b if b is not None else jnp.zeros((cout,), jnp.float32)
    if cout_p != cout:
        wmat = jnp.pad(wmat, ((0, 0), (0, 0), (0, cout_p - cout)))
        bias = jnp.pad(bias, (0, cout_p - cout))
    if cin_p != cin:
        wmat = jnp.pad(wmat, ((0, 0), (0, cin_p - cin), (0, 0)))
        phf = jnp.pad(phf, ((0, 0), (0, 0), (0, 0), (0, cin_p - cin)))
    wmat = wmat.astype(jnp.bfloat16)
    bias = bias.reshape(1, cout_p).astype(jnp.float32)

    out_shape = [jax.ShapeDtypeStruct((n, m, cout_p), jnp.float32)]
    out_specs = [pl.BlockSpec((1, m, cout_p), lambda i: (i, 0, 0))]
    if with_stats:
        out_shape += [jax.ShapeDtypeStruct((n, 1, cout_p), jnp.float32)] * 2
        out_specs += [pl.BlockSpec((1, 1, cout_p), lambda i: (i, 0, 0))] * 2

    # explicit VMEM budget (double-buffered in/out + resident weights + acc scratch)
    in_blk = nph * _round_up(mpad, 16) * max(_round_up(cin_p, 128), 128) * 2
    out_blk = _round_up(m, 8) * _round_up(cout_p, 128) * 4
    w_bytes = kh * kw * _round_up(cin_p, 16) * _round_up(cout_p, 128) * 2
    vmem_limit = int(min(max(2 * (in_blk + out_blk + w_bytes) + out_blk + (8 << 20),
                             32 << 20), 100 << 20))

    kern = functools.partial(_conv_kernel, taps=taps, m=m, ho=ho, wo=wo, wps=wps,
                             activation=activation, slope=slope, with_stats=with_stats)
    res = pl.pallas_call(
        kern,
        out_shape=tuple(out_shape),
        grid=(n,),
        in_specs=[pl.BlockSpec((1, nph, mpad, cin_p), lambda i: (i, 0, 0, 0)),
                  pl.BlockSpec((kh * kw, cin_p, cout_p), lambda i: (0, 0, 0)),
                  pl.BlockSpec((1, cout_p), lambda i: (0, 0))],
        out_specs=tuple(out_specs),
        scratch_shapes=[pltpu.VMEM((m, cout_p), jnp.float32)],
        compiler_params=pltpu.CompilerParams(dimension_semantics=("parallel",),
                                             vmem_limit_bytes=vmem_limit),
    )(phf, wmat, bias)

    meta = (n, ho, wo, hps, wps, cout, cout_p)
    if with_stats:
        return res[0], (res[1], res[2]), meta
    return res[0], None, meta


def _unpad_conv(out_flat, meta):
    n, ho, wo, hps, wps, cout, cout_p = meta
    return out_flat.reshape(n, hps, wps, cout_p)[:, :ho, :wo, :cout]


def conv2d(x, w, b, stride, pad=1, activation="none"):
    out_flat, _, meta = conv2d_flat(x, w, b, stride, pad=pad, activation=activation)
    return _unpad_conv(out_flat, meta)


def _affine_leaky(x_flat, scale, shift, slope=0.2):
    n, m, c = x_flat.shape
    return pl.pallas_call(
        functools.partial(_affine_leaky_kernel, slope=slope),
        out_shape=jax.ShapeDtypeStruct((n, m, c), jnp.float32),
        grid=(n,),
        in_specs=[pl.BlockSpec((1, m, c), lambda i: (i, 0, 0)),
                  pl.BlockSpec((1, c), lambda i: (0, 0)),
                  pl.BlockSpec((1, c), lambda i: (0, 0))],
        out_specs=pl.BlockSpec((1, m, c), lambda i: (i, 0, 0)),
        compiler_params=pltpu.CompilerParams(dimension_semantics=("parallel",)),
    )(x_flat, scale.reshape(1, c).astype(jnp.float32),
      shift.reshape(1, c).astype(jnp.float32))


# ----------------------------------------------------------------------------
# Discriminator (NLayerDiscriminator, BatchNorm training-mode stats) and LPIPS
# ----------------------------------------------------------------------------

def nlayer_discriminator(x_nhwc, p):
    # layer 0: conv(bias) + leaky (fused into the conv epilogue)
    h = conv2d(x_nhwc, p["disc_w0"], p["disc_b0"], stride=2, activation="leaky")
    # layers 1..3: conv(no bias) -> BN(train stats, computed in conv epilogue) -> leaky
    for i, stride in ((1, 2), (2, 2), (3, 1)):
        flat, (csum, csq), meta = conv2d_flat(h, p[f"disc_w{i}"], None, stride=stride,
                                              activation="none", with_stats=True)
        n, ho, wo, hps, wps, cout, cout_p = meta
        cnt = float(n * ho * wo)
        mean = jnp.sum(csum, axis=(0, 1)) / cnt
        var = jnp.maximum(jnp.sum(csq, axis=(0, 1)) / cnt - mean * mean, 0.0)
        scale = p[f"disc_bn{i}_g"] / jnp.sqrt(var + 1e-5)
        shift = p[f"disc_bn{i}_b"] - mean * scale
        flat = _affine_leaky(flat, scale, shift)
        h = flat.reshape(n, hps, wps, cout_p)[:, :ho, :wo, :cout]
    # final 1-channel head (Cout padded to 128 lanes inside conv2d_flat, sliced here)
    logits_flat, _, meta = conv2d_flat(h, p["disc_w4"], p["disc_b4"], stride=1,
                                       activation="none")
    return _unpad_conv(logits_flat, meta)          # (N, 2, 2, 1)


# TODO(synk): LPIPS backbone is a reduced 3-stage conv feature extractor with synthetic
# deterministic weights; the reference uses a frozen pretrained VGG16.
LPIPS_SHIFT = jnp.array([-0.030, -0.088, -0.188], jnp.float32).reshape(1, 1, 1, 3)
LPIPS_SCALE = jnp.array([0.458, 0.448, 0.450], jnp.float32).reshape(1, 1, 1, 3)


def lpips_features(x_nhwc, p):
    h = (x_nhwc - LPIPS_SHIFT) / LPIPS_SCALE
    feats = []
    for i in range(3):
        h = conv2d(h, p[f"lp_w{i}"], p[f"lp_b{i}"], stride=2, activation="relu")
        feats.append(h)
    return feats


def lpips_loss(x_nhwc, y_nhwc, p):
    fx = lpips_features(x_nhwc, p)
    fy = lpips_features(y_nhwc, p)
    bt = x_nhwc.shape[0]
    total = jnp.zeros((bt, 1, 1), jnp.float32)
    for i in range(3):
        _, hh, ww, cc = fx[i].shape
        hw = hh * ww
        fxr = fx[i].reshape(bt, hw, cc)
        fyr = fy[i].reshape(bt, hw, cc)
        stage = pl.pallas_call(
            functools.partial(_lpips_stage_kernel, inv_hw=1.0 / hw),
            out_shape=jax.ShapeDtypeStruct((bt, 1, 1), jnp.float32),
            grid=(bt,),
            in_specs=[pl.BlockSpec((1, hw, cc), lambda i: (i, 0, 0)),
                      pl.BlockSpec((1, hw, cc), lambda i: (i, 0, 0)),
                      pl.BlockSpec((1, cc), lambda i: (0, 0))],
            out_specs=pl.BlockSpec((1, 1, 1), lambda i: (i, 0, 0)),
            compiler_params=pltpu.CompilerParams(dimension_semantics=("parallel",)),
        )(fxr, fyr, p[f"lp_lin{i}"])
        total = total + stage
    return total.reshape(bt)                        # per-frame perceptual loss


# ----------------------------------------------------------------------------
# LPIPSWithDiscriminator forward
# ----------------------------------------------------------------------------

def lpips_with_discriminator_forward(params, inputs, reconstructions,
                                     post_mean, post_logvar,
                                     optimizer_idx, global_step, cfg, split="train"):
    bt, c, h, w = inputs.shape
    t = cfg["num_frames"]
    b = bt // t

    # single NCHW -> NHWC transpose; everything downstream is channels-last
    x = jnp.transpose(inputs, (0, 2, 3, 1))
    y = jnp.transpose(reconstructions, (0, 2, 3, 1))

    pw = float(cfg["perceptual_weight"])
    if pw > 0:
        p_loss = lpips_loss(x, y, params)           # (bt,)
    else:
        p_loss = jnp.zeros((bt,), jnp.float32)

    # --- fused rec / NLL / temporal l1_diff (one streaming pass, lane-dense) ---
    d_per_frame = c * h * w
    xg = x.reshape(b, t, d_per_frame)
    yg = y.reshape(b, t, d_per_frame)
    pg = p_loss.reshape(b, t, 1)
    rec_s, nll_s, diff_s = pl.pallas_call(
        functools.partial(_nll_diff_kernel, pw=pw),
        out_shape=tuple(jax.ShapeDtypeStruct((b, 1, 1), jnp.float32) for _ in range(3)),
        grid=(b,),
        in_specs=[pl.BlockSpec((1, t, d_per_frame), lambda i: (i, 0, 0)),
                  pl.BlockSpec((1, t, d_per_frame), lambda i: (i, 0, 0)),
                  pl.BlockSpec((1, t, 1), lambda i: (i, 0, 0)),
                  pl.BlockSpec((1, 1), lambda i: (0, 0))],
        out_specs=tuple(pl.BlockSpec((1, 1, 1), lambda i: (i, 0, 0)) for _ in range(3)),
        compiler_params=pltpu.CompilerParams(dimension_semantics=("parallel",)),
    )(xg, yg, pg, params["logvar"])

    n_elem = bt * d_per_frame
    rec_loss_mean = jnp.sum(rec_s) / n_elem
    nll_mean = jnp.sum(nll_s) / n_elem              # torch.mean(nll_loss)
    nll_loss = nll_mean / bt                        # torch.mean(nll)/nll.shape[0]
    weighted_nll_loss = nll_mean / bt               # weights=None path
    # NOTE: reference stores pixelloss_weight but never applies it in forward().
    n_diff = b * (t - 1)
    diff_mean = jnp.sum(diff_s) / (n_diff * d_per_frame)
    weighted_nll_loss = weighted_nll_loss + cfg["diffloss_weight"] * diff_mean / n_diff

    # TODO(synk): swc_loss (flow-warped temporal loss) omitted — with the default
    # flownet_config=None the reference module never instantiates self.flownet, so this
    # path is not runnable; optical-flow warping has no clean Pallas port here.

    # --- KL (Pallas, lane-dense per-sample) ---
    kl_loss = jnp.float32(0.0)
    if cfg["kl_weight"] > 0:
        latent_mu = post_mean.reshape(bt, 1, -1)
        latent_lv = post_logvar.reshape(bt, 1, -1)
        latent_l = latent_mu.shape[-1]
        kl_sums = pl.pallas_call(
            _kl_kernel,
            out_shape=jax.ShapeDtypeStruct((bt, 1, 1), jnp.float32),
            grid=(bt,),
            in_specs=[pl.BlockSpec((1, 1, latent_l), lambda i: (i, 0, 0)),
                      pl.BlockSpec((1, 1, latent_l), lambda i: (i, 0, 0))],
            out_specs=pl.BlockSpec((1, 1, 1), lambda i: (i, 0, 0)),
            compiler_params=pltpu.CompilerParams(dimension_semantics=("parallel",)),
        )(latent_mu, latent_lv)
        kl_loss = jnp.sum(kl_sums) / (bt * bt)      # torch.mean(kl)/kl.shape[0]

    disc_factor = cfg["disc_factor"] if global_step >= cfg["disc_start"] else 0.0

    if optimizer_idx == 0:
        logits_fake = nlayer_discriminator(y, params)
        g_loss = -jnp.mean(logits_fake)
        # TODO(synk): adaptive d_weight needs autograd wrt the generator's last_layer (not
        # available here); use the module's RuntimeError fallback 1.0*disc_weight.
        d_weight = (jnp.float32(1.0) * cfg["disc_weight"]
                    if cfg["disc_factor"] > 0.0 else jnp.float32(0.0))
        loss = weighted_nll_loss + cfg["kl_weight"] * kl_loss + d_weight * disc_factor * g_loss
        log = {
            f"{split}/total_loss": loss,
            f"{split}/logvar": params["logvar"][0, 0],
            f"{split}/kl_loss": kl_loss,
            f"{split}/nll_loss": nll_loss,
            f"{split}/rec_loss": rec_loss_mean,
            f"{split}/d_weight": d_weight,
            f"{split}/disc_factor": jnp.float32(disc_factor),
            f"{split}/g_loss": g_loss,
        }
        return loss, log

    if optimizer_idx == 1:
        logits_real = nlayer_discriminator(x, params)
        logits_fake = nlayer_discriminator(y, params)
        d_loss = disc_factor * 0.5 * (jnp.mean(jax.nn.relu(1.0 - logits_real)) +
                                      jnp.mean(jax.nn.relu(1.0 + logits_fake)))
        log = {
            f"{split}/disc_loss": d_loss,
            f"{split}/logits_real": jnp.mean(logits_real),
            f"{split}/logits_fake": jnp.mean(logits_fake),
        }
        return d_loss, log


# ----------------------------------------------------------------------------
# Deterministic synthetic parameters (NHWC weight layout: (kh, kw, Cin, Cout))
# ----------------------------------------------------------------------------

def init_params(key):
    ks = list(jax.random.split(key, 16))
    p = {}
    disc_ch = [(3, 64), (64, 128), (128, 256), (256, 512), (512, 1)]
    for i, (cin, cout) in enumerate(disc_ch):
        p[f"disc_w{i}"] = 0.02 * jax.random.normal(ks[i], (4, 4, cin, cout), jnp.float32)
        p[f"disc_b{i}"] = jnp.zeros((cout,), jnp.float32)
    for j, (i, cch) in enumerate([(1, 128), (2, 256), (3, 512)]):
        p[f"disc_bn{i}_g"] = 1.0 + 0.02 * jax.random.normal(ks[5 + j], (cch,), jnp.float32)
        p[f"disc_bn{i}_b"] = jnp.zeros((cch,), jnp.float32)
    lp_ch = [(3, 16), (16, 32), (32, 64)]
    for i, (cin, cout) in enumerate(lp_ch):
        p[f"lp_w{i}"] = (jax.random.normal(ks[8 + i], (3, 3, cin, cout), jnp.float32)
                         / jnp.sqrt(cin * 9.0))
        p[f"lp_b{i}"] = jnp.zeros((cout,), jnp.float32)
        p[f"lp_lin{i}"] = jax.random.uniform(ks[11 + i], (1, cout), jnp.float32)
    p["logvar"] = jnp.zeros((1, 1), jnp.float32)     # logvar_init = 0.0
    return p


# ----------------------------------------------------------------------------
if __name__ == "__main__":
    key = jax.random.PRNGKey(0)
    k1, k2, k3, k4, kp = jax.random.split(key, 5)

    b, t, C, H, W = 2, 5, 3, 32, 32          # num_frames = 5 -> batch of b*t frames
    bt = b * t
    inputs = jax.random.normal(k1, (bt, C, H, W), jnp.float32)
    reconstructions = inputs + 0.1 * jax.random.normal(k2, (bt, C, H, W), jnp.float32)
    post_mean = jax.random.normal(k3, (bt, 4, 4, 4), jnp.float32)
    post_logvar = 0.1 * jax.random.normal(k4, (bt, 4, 4, 4), jnp.float32)

    params = init_params(kp)
    cfg = dict(num_frames=t, kl_weight=1.0, pixelloss_weight=1.0, diffloss_weight=1.0,
               temploss_weight=1.0, perceptual_weight=1.0, disc_factor=1.0,
               disc_weight=1.0, disc_start=0)

    loss_g, log_g = lpips_with_discriminator_forward(
        params, inputs, reconstructions, post_mean, post_logvar,
        optimizer_idx=0, global_step=10, cfg=cfg)
    loss_d, log_d = lpips_with_discriminator_forward(
        params, inputs, reconstructions, post_mean, post_logvar,
        optimizer_idx=1, global_step=10, cfg=cfg)

    jax.block_until_ready((loss_g, log_g, loss_d, log_d))
    assert jnp.isfinite(loss_g) and jnp.isfinite(loss_d)
    print("KERNEL_OK")
</pallas_src>

<mosaic_0001>
module attributes {stable_mosaic.version = 11 : i64} {
  func.func @_conv_kernel(%arg0: i32, %arg1: memref<1x4x307x8xbf16, #tpu.memory_space<vmem>>, %arg2: memref<9x8x16xbf16, #tpu.memory_space<vmem>>, %arg3: memref<1x16xf32, #tpu.memory_space<vmem>>, %arg4: memref<1x289x16xf32, #tpu.memory_space<vmem>>, %arg5: memref<289x16xf32, #tpu.memory_space<vmem>>) attributes {dimension_semantics = [#tpu.dimension_semantics<parallel>], iteration_bounds = array<i64: 10>, scalar_prefetch = 0 : i64, scratch_operands = 1 : i64, tpu.core_type = #tpu.core_type<tc>, window_params = [{transform_indices = @transform_0, window_bounds = array<i64: 1, 4, 307, 8>}, {pipeline_mode = #tpu.pipeline_mode<synchronous>, transform_indices = @transform_1, window_bounds = array<i64: 9, 8, 16>}, {pipeline_mode = #tpu.pipeline_mode<synchronous>, transform_indices = @transform_2, window_bounds = array<i64: 1, 16>}, {transform_indices = @transform_3, window_bounds = array<i64: 1, 289, 16>}]} {
    %cst = arith.constant 0.000000e+00 : f32
    %0 = vector.broadcast %cst : f32 to vector<289x16xf32>
    %c0 = arith.constant 0 : index
    %c0_0 = arith.constant 0 : index
    %1 = vector.load %arg5[%c0, %c0_0] : memref<289x16xf32, #tpu.memory_space<vmem>>, vector<289x16xf32>
    tpu.vector_store %arg5[%c0, %c0_0], %0 {strides = array<i32>} : memref<289x16xf32, #tpu.memory_space<vmem>>, vector<289x16xf32>,
    %c0_1 = arith.constant 0 : index
    %c0_2 = arith.constant 0 : index
    %c0_3 = arith.constant 0 : index
    %c0_4 = arith.constant 0 : index
    %2 = vector.load %arg1[%c0_1, %c0_2, %c0_3, %c0_4] : memref<1x4x307x8xbf16, #tpu.memory_space<vmem>>, vector<1x1x289x8xbf16>
    %3 = vector.shape_cast %2 : vector<1x1x289x8xbf16> to vector<289x8xbf16>
    %c0_5 = arith.constant 0 : index
    %c0_6 = arith.constant 0 : index
    %4 = vector.load %arg5[%c0_5, %c0_6] : memref<289x16xf32, #tpu.memory_space<vmem>>, vector<289x16xf32>
    %c0_7 = arith.constant 0 : index
    %c0_8 = arith.constant 0 : index
    %c0_9 = arith.constant 0 : index
    %5 = vector.load %arg2[%c0_7, %c0_8, %c0_9] : memref<9x8x16xbf16, #tpu.memory_space<vmem>>, vector<1x8x16xbf16>
    %6 = vector.shape_cast %5 : vector<1x8x16xbf16> to vector<8x16xbf16>
    %cst_10 = arith.constant dense<0.000000e+00> : vector<289x16xf32>
    %7 = tpu.matmul %3, %6, %cst_10 {dimension_numbers = #tpu.dot_dimension_numbers<[1], [0], [0], [1], [0, 0, 1, 1], [], []>} : vector<289x8xbf16>, vector<8x16xbf16>, vector<289x16xf32> -> vector<289x16xf32>
    %8 = arith.addf %4, %7 : vector<289x16xf32>
    %c0_11 = arith.constant 0 : index
    %c0_12 = arith.constant 0 : index
    %9 = vector.load %arg5[%c0_11, %c0_12] : memref<289x16xf32, #tpu.memory_space<vmem>>, vector<289x16xf32>
    tpu.vector_store %arg5[%c0_11, %c0_12], %8 {strides = array<i32>} : memref<289x16xf32, #tpu.memory_space<vmem>>, vector<289x16xf32>,
    %c0_13 = arith.constant 0 : index
    %c1 = arith.constant 1 : index
    %c0_14 = arith.constant 0 : index
    %c0_15 = arith.constant 0 : index
    %10 = vector.load %arg1[%c0_13, %c1, %c0_14, %c0_15] : memref<1x4x307x8xbf16, #tpu.memory_space<vmem>>, vector<1x1x289x8xbf16>
    %11 = vector.shape_cast %10 : vector<1x1x289x8xbf16> to vector<289x8xbf16>
    %c0_16 = arith.constant 0 : index
    %c0_17 = arith.constant 0 : index
    %12 = vector.load %arg5[%c0_16, %c0_17] : memref<289x16xf32, #tpu.memory_space<vmem>>, vector<289x16xf32>
    %c1_18 = arith.constant 1 : index
    %c0_19 = arith.constant 0 : index
    %c0_20 = arith.constant 0 : index
    %13 = vector.load %arg2[%c1_18, %c0_19, %c0_20] : memref<9x8x16xbf16, #tpu.memory_space<vmem>>, vector<1x8x16xbf16>
    %14 = vector.shape_cast %13 : vector<1x8x16xbf16> to vector<8x16xbf16>
    %cst_21 = arith.constant dense<0.000000e+00> : vector<289x16xf32>
    %15 = tpu.matmul %11, %14, %cst_21 {dimension_numbers = #tpu.dot_dimension_numbers<[1], [0], [0], [1], [0, 0, 1, 1], [], []>} : vector<289x8xbf16>, vector<8x16xbf16>, vector<289x16xf32> -> vector<289x16xf32>
    %16 = arith.addf %12, %15 : vector<289x16xf32>
    %c0_22 = arith.constant 0 : index
    %c0_23 = arith.constant 0 : index
    %17 = vector.load %arg5[%c0_22, %c0_23] : memref<289x16xf32, #tpu.memory_space<vmem>>, vector<289x16xf32>
    tpu.vector_store %arg5[%c0_22, %c0_23], %16 {strides = array<i32>} : memref<289x16xf32, #tpu.memory_space<vmem>>, vector<289x16xf32>,
    %c0_24 = arith.constant 0 : index
    %c0_25 = arith.constant 0 : index
    %c1_26 = arith.constant 1 : index
    %c0_27 = arith.constant 0 : index
    %18 = vector.load %arg1[%c0_24, %c0_25, %c1_26, %c0_27] : memref<1x4x307x8xbf16, #tpu.memory_space<vmem>>, vector<1x1x289x8xbf16>
    %19 = vector.shape_cast %18 : vector<1x1x289x8xbf16> to vector<289x8xbf16>
    %c0_28 = arith.constant 0 : index
    %c0_29 = arith.constant 0 : index
    %20 = vector.load %arg5[%c0_28, %c0_29] : memref<289x16xf32, #tpu.memory_space<vmem>>, vector<289x16xf32>
    %c2 = arith.constant 2 : index
    %c0_30 = arith.constant 0 : index
    %c0_31 = arith.constant 0 : index
    %21 = vector.load %arg2[%c2, %c0_30, %c0_31] : memref<9x8x16xbf16, #tpu.memory_space<vmem>>, vector<1x8x16xbf16>
    %22 = vector.shape_cast %21 : vector<1x8x16xbf16> to vector<8x16xbf16>
    %cst_32 = arith.constant dense<0.000000e+00> : vector<289x16xf32>
    %23 = tpu.matmul %19, %22, %cst_32 {dimension_numbers = #tpu.dot_dimension_numbers<[1], [0], [0], [1], [0, 0, 1, 1], [], []>} : vector<289x8xbf16>, vector<8x16xbf16>, vector<289x16xf32> -> vector<289x16xf32>
    %24 = arith.addf %20, %23 : vector<289x16xf32>
    %c0_33 = arith.constant 0 : index
    %c0_34 = arith.constant 0 : index
    %25 = vector.load %arg5[%c0_33, %c0_34] : memref<289x16xf32, #tpu.memory_space<vmem>>, vector<289x16xf32>
    tpu.vector_store %arg5[%c0_33, %c0_34], %24 {strides = array<i32>} : memref<289x16xf32, #tpu.memory_space<vmem>>, vector<289x16xf32>,
    %c0_35 = arith.constant 0 : index
    %c2_36 = arith.constant 2 : index
    %c0_37 = arith.constant 0 : index
    %c0_38 = arith.constant 0 : index
    %26 = vector.load %arg1[%c0_35, %c2_36, %c0_37, %c0_38] : memref<1x4x307x8xbf16, #tpu.memory_space<vmem>>, vector<1x1x289x8xbf16>
    %27 = vector.shape_cast %26 : vector<1x1x289x8xbf16> to vector<289x8xbf16>
    %c0_39 = arith.constant 0 : index
    %c0_40 = arith.constant 0 : index
    %28 = vector.load %arg5[%c0_39, %c0_40] : memref<289x16xf32, #tpu.memory_space<vmem>>, vector<289x16xf32>
    %c3 = arith.constant 3 : index
    %c0_41 = arith.constant 0 : index
    %c0_42 = arith.constant 0 : index
    %29 = vector.load %arg2[%c3, %c0_41, %c0_42] : memref<9x8x16xbf16, #tpu.memory_space<vmem>>, vector<1x8x16xbf16>
    %30 = vector.shape_cast %29 : vector<1x8x16xbf16> to vector<8x16xbf16>
    %cst_43 = arith.constant dense<0.000000e+00> : vector<289x16xf32>
    %31 = tpu.matmul %27, %30, %cst_43 {dimension_numbers = #tpu.dot_dimension_numbers<[1], [0], [0], [1], [0, 0, 1, 1], [], []>} : vector<289x8xbf16>, vector<8x16xbf16>, vector<289x16xf32> -> vector<289x16xf32>
    %32 = arith.addf %28, %31 : vector<289x16xf32>
    %c0_44 = arith.constant 0 : index
    %c0_45 = arith.constant 0 : index
    %33 = vector.load %arg5[%c0_44, %c0_45] : memref<289x16xf32, #tpu.memory_space<vmem>>, vector<289x16xf32>
    tpu.vector_store %arg5[%c0_44, %c0_45], %32 {strides = array<i32>} : memref<289x16xf32, #tpu.memory_space<vmem>>, vector<289x16xf32>,
    %c0_46 = arith.constant 0 : index
    %c3_47 = arith.constant 3 : index
    %c0_48 = arith.constant 0 : index
    %c0_49 = arith.constant 0 : index
    %34 = vector.load %arg1[%c0_46, %c3_47, %c0_48, %c0_49] : memref<1x4x307x8xbf16, #tpu.memory_space<vmem>>, vector<1x1x289x8xbf16>
    %35 = vector.shape_cast %34 : vector<1x1x289x8xbf16> to vector<289x8xbf16>
    %c0_50 = arith.constant 0 : index
    %c0_51 = arith.constant 0 : index
    %36 = vector.load %arg5[%c0_50, %c0_51] : memref<289x16xf32, #tpu.memory_space<vmem>>, vector<289x16xf32>
    %c4 = arith.constant 4 : index
    %c0_52 = arith.constant 0 : index
    %c0_53 = arith.constant 0 : index
    %37 = vector.load %arg2[%c4, %c0_52, %c0_53] : memref<9x8x16xbf16, #tpu.memory_space<vmem>>, vector<1x8x16xbf16>
    %38 = vector.shape_cast %37 : vector<1x8x16xbf16> to vector<8x16xbf16>
    %cst_54 = arith.constant dense<0.000000e+00> : vector<289x16xf32>
    %39 = tpu.matmul %35, %38, %cst_54 {dimension_numbers = #tpu.dot_dimension_numbers<[1], [0], [0], [1], [0, 0, 1, 1], [], []>} : vector<289x8xbf16>, vector<8x16xbf16>, vector<289x16xf32> -> vector<289x16xf32>
    %40 = arith.addf %36, %39 : vector<289x16xf32>
    %c0_55 = arith.constant 0 : index
    %c0_56 = arith.constant 0 : index
    %41 = vector.load %arg5[%c0_55, %c0_56] : memref<289x16xf32, #tpu.memory_space<vmem>>, vector<289x16xf32>
    tpu.vector_store %arg5[%c0_55, %c0_56], %40 {strides = array<i32>} : memref<289x16xf32, #tpu.memory_space<vmem>>, vector<289x16xf32>,
    %c0_57 = arith.constant 0 : index
    %c2_58 = arith.constant 2 : index
    %c1_59 = arith.constant 1 : index
    %c0_60 = arith.constant 0 : index
    %42 = vector.load %arg1[%c0_57, %c2_58, %c1_59, %c0_60] : memref<1x4x307x8xbf16, #tpu.memory_space<vmem>>, vector<1x1x289x8xbf16>
    %43 = vector.shape_cast %42 : vector<1x1x289x8xbf16> to vector<289x8xbf16>
    %c0_61 = arith.constant 0 : index
    %c0_62 = arith.constant 0 : index
    %44 = vector.load %arg5[%c0_61, %c0_62] : memref<289x16xf32, #tpu.memory_space<vmem>>, vector<289x16xf32>
    %c5 = arith.constant 5 : index
    %c0_63 = arith.constant 0 : index
    %c0_64 = arith.constant 0 : index
    %45 = vector.load %arg2[%c5, %c0_63, %c0_64] : memref<9x8x16xbf16, #tpu.memory_space<vmem>>, vector<1x8x16xbf16>
    %46 = vector.shape_cast %45 : vector<1x8x16xbf16> to vector<8x16xbf16>
    %cst_65 = arith.constant dense<0.000000e+00> : vector<289x16xf32>
    %47 = tpu.matmul %43, %46, %cst_65 {dimension_numbers = #tpu.dot_dimension_numbers<[1], [0], [0], [1], [0, 0, 1, 1], [], []>} : vector<289x8xbf16>, vector<8x16xbf16>, vector<289x16xf32> -> vector<289x16xf32>
    %48 = arith.addf %44, %47 : vector<289x16xf32>
    %c0_66 = arith.constant 0 : index
    %c0_67 = arith.constant 0 : index
    %49 = vector.load %arg5[%c0_66, %c0_67] : memref<289x16xf32, #tpu.memory_space<vmem>>, vector<289x16xf32>
    tpu.vector_store %arg5[%c0_66, %c0_67], %48 {strides = array<i32>} : memref<289x16xf32, #tpu.memory_space<vmem>>, vector<289x16xf32>,
    %c0_68 = arith.constant 0 : index
    %c0_69 = arith.constant 0 : index
    %c17 = arith.constant 17 : index
    %c0_70 = arith.constant 0 : index
    %50 = vector.load %arg1[%c0_68, %c0_69, %c17, %c0_70] : memref<1x4x307x8xbf16, #tpu.memory_space<vmem>>, vector<1x1x289x8xbf16>
    %51 = vector.shape_cast %50 : vector<1x1x289x8xbf16> to vector<289x8xbf16>
    %c0_71 = arith.constant 0 : index
    %c0_72 = arith.constant 0 : index
    %52 = vector.load %arg5[%c0_71, %c0_72] : memref<289x16xf32, #tpu.memory_space<vmem>>, vector<289x16xf32>
    %c6 = arith.constant 6 : index
    %c0_73 = arith.constant 0 : index
    %c0_74 = arith.constant 0 : index
    %53 = vector.load %arg2[%c6, %c0_73, %c0_74] : memref<9x8x16xbf16, #tpu.memory_space<vmem>>, vector<1x8x16xbf16>
    %54 = vector.shape_cast %53 : vector<1x8x16xbf16> to vector<8x16xbf16>
    %cst_75 = arith.constant dense<0.000000e+00> : vector<289x16xf32>
    %55 = tpu.matmul %51, %54, %cst_75 {dimension_numbers = #tpu.dot_dimension_numbers<[1], [0], [0], [1], [0, 0, 1, 1], [], []>} : vector<289x8xbf16>, vector<8x16xbf16>, vector<289x16xf32> -> vector<289x16xf32>
    %56 = arith.addf %52, %55 : vector<289x16xf32>
    %c0_76 = arith.constant 0 : index
    %c0_77 = arith.constant 0 : index
    %57 = vector.load %arg5[%c0_76, %c0_77] : memref<289x16xf32, #tpu.memory_space<vmem>>, vector<289x16xf32>
    tpu.vector_store %arg5[%c0_76, %c0_77], %56 {strides = array<i32>} : memref<289x16xf32, #tpu.memory_space<vmem>>, vector<289x16xf32>,
    %c0_78 = arith.constant 0 : index
    %c1_79 = arith.constant 1 : index
    %c17_80 = arith.constant 17 : index
    %c0_81 = arith.constant 0 : index
    %58 = vector.load %arg1[%c0_78, %c1_79, %c17_80, %c0_81] : memref<1x4x307x8xbf16, #tpu.memory_space<vmem>>, vector<1x1x289x8xbf16>
    %59 = vector.shape_cast %58 : vector<1x1x289x8xbf16> to vector<289x8xbf16>
    %c0_82 = arith.constant 0 : index
    %c0_83 = arith.constant 0 : index
    %60 = vector.load %arg5[%c0_82, %c0_83] : memref<289x16xf32, #tpu.memory_space<vmem>>, vector<289x16xf32>
    %c7 = arith.constant 7 : index
    %c0_84 = arith.constant 0 : index
    %c0_85 = arith.constant 0 : index
    %61 = vector.load %arg2[%c7, %c0_84, %c0_85] : memref<9x8x16xbf16, #tpu.memory_space<vmem>>, vector<1x8x16xbf16>
    %62 = vector.shape_cast %61 : vector<1x8x16xbf16> to vector<8x16xbf16>
    %cst_86 = arith.constant dense<0.000000e+00> : vector<289x16xf32>
    %63 = tpu.matmul %59, %62, %cst_86 {dimension_numbers = #tpu.dot_dimension_numbers<[1], [0], [0], [1], [0, 0, 1, 1], [], []>} : vector<289x8xbf16>, vector<8x16xbf16>, vector<289x16xf32> -> vector<289x16xf32>
    %64 = arith.addf %60, %63 : vector<289x16xf32>
    %c0_87 = arith.constant 0 : index
    %c0_88 = arith.constant 0 : index
    %65 = vector.load %arg5[%c0_87, %c0_88] : memref<289x16xf32, #tpu.memory_space<vmem>>, vector<289x16xf32>
    tpu.vector_store %arg5[%c0_87, %c0_88], %64 {strides = array<i32>} : memref<289x16xf32, #tpu.memory_space<vmem>>, vector<289x16xf32>,
    %c0_89 = arith.constant 0 : index
    %c0_90 = arith.constant 0 : index
    %c18 = arith.constant 18 : index
    %c0_91 = arith.constant 0 : index
    %66 = vector.load %arg1[%c0_89, %c0_90, %c18, %c0_91] : memref<1x4x307x8xbf16, #tpu.memory_space<vmem>>, vector<1x1x289x8xbf16>
    %67 = vector.shape_cast %66 : vector<1x1x289x8xbf16> to vector<289x8xbf16>
    %c0_92 = arith.constant 0 : index
    %c0_93 = arith.constant 0 : index
    %68 = vector.load %arg5[%c0_92, %c0_93] : memref<289x16xf32, #tpu.memory_space<vmem>>, vector<289x16xf32>
    %c8 = arith.constant 8 : index
    %c0_94 = arith.constant 0 : index
    %c0_95 = arith.constant 0 : index
    %69 = vector.load %arg2[%c8, %c0_94, %c0_95] : memref<9x8x16xbf16, #tpu.memory_space<vmem>>, vector<1x8x16xbf16>
    %70 = vector.shape_cast %69 : vector<1x8x16xbf16> to vector<8x16xbf16>
    %cst_96 = arith.constant dense<0.000000e+00> : vector<289x16xf32>
    %71 = tpu.matmul %67, %70, %cst_96 {dimension_numbers = #tpu.dot_dimension_numbers<[1], [0], [0], [1], [0, 0, 1, 1], [], []>} : vector<289x8xbf16>, vector<8x16xbf16>, vector<289x16xf32> -> vector<289x16xf32>
    %72 = arith.addf %68, %71 : vector<289x16xf32>
    %c0_97 = arith.constant 0 : index
    %c0_98 = arith.constant 0 : index
    %73 = vector.load %arg5[%c0_97, %c0_98] : memref<289x16xf32, #tpu.memory_space<vmem>>, vector<289x16xf32>
    tpu.vector_store %arg5[%c0_97, %c0_98], %72 {strides = array<i32>} : memref<289x16xf32, #tpu.memory_space<vmem>>, vector<289x16xf32>,
    %c0_99 = arith.constant 0 : index
    %c0_100 = arith.constant 0 : index
    %74 = vector.load %arg5[%c0_99, %c0_100] : memref<289x16xf32, #tpu.memory_space<vmem>>, vector<289x16xf32>
    %c0_101 = arith.constant 0 : index
    %c0_102 = arith.constant 0 : index
    %75 = vector.load %arg3[%c0_101, %c0_102] : memref<1x16xf32, #tpu.memory_space<vmem>>, vector<1x16xf32>
    %76 = vector.broadcast %75 : vector<1x16xf32> to vector<289x16xf32>
    %77 = arith.addf %74, %76 : vector<289x16xf32>
    %cst_103 = arith.constant 0.000000e+00 : f32
    %78 = vector.broadcast %cst_103 : f32 to vector<289x16xf32>
    %79 = arith.maximumf %77, %78 : vector<289x16xf32>
    %c0_104 = arith.constant 0 : index
    %c0_105 = arith.constant 0 : index
    %c0_106 = arith.constant 0 : index
    %80 = vector.load %arg4[%c0_104, %c0_105, %c0_106] : memref<1x289x16xf32, #tpu.memory_space<vmem>>, vector<1x289x16xf32>
    %81 = vector.shape_cast %80 : vector<1x289x16xf32> to vector<289x16xf32>
    %82 = vector.shape_cast %79 : vector<289x16xf32> to vector<1x289x16xf32>
    tpu.vector_store %arg4[%c0_104, %c0_105, %c0_106], %82 {strides = array<i32>} : memref<1x289x16xf32, #tpu.memory_space<vmem>>, vector<1x289x16xf32>,
    return
  }
  func.func @transform_0(%arg0: i32) -> (i32, i32, i32, i32) {
    %c0_i32 = arith.constant 0 : i32
    %c0_i32_0 = arith.constant 0 : i32
    %c0_i32_1 = arith.constant 0 : i32
    %c0_i32_2 = arith.constant 0 : i32
    return %arg0, %c0_i32, %c0_i32_0, %c0_i32_1 : i32, i32, i32, i32
  }
  func.func @transform_1(%arg0: i32) -> (i32, i32, i32) {
    %c0_i32 = arith.constant 0 : i32
    %c0_i32_0 = arith.constant 0 : i32
    %c0_i32_1 = arith.constant 0 : i32
    %c0_i32_2 = arith.constant 0 : i32
    return %c0_i32, %c0_i32_0, %c0_i32_1 : i32, i32, i32
  }
  func.func @transform_2(%arg0: i32) -> (i32, i32) {
    %c0_i32 = arith.constant 0 : i32
    %c0_i32_0 = arith.constant 0 : i32
    %c0_i32_1 = arith.constant 0 : i32
    return %c0_i32, %c0_i32_0 : i32, i32
  }
  func.func @transform_3(%arg0: i32) -> (i32, i32, i32) {
    %c0_i32 = arith.constant 0 : i32
    %c0_i32_0 = arith.constant 0 : i32
    %c0_i32_1 = arith.constant 0 : i32
    return %arg0, %c0_i32, %c0_i32_0 : i32, i32, i32
  }
}

</mosaic_0001>

<llo_original>
// kernel: tpu_custom_call.1
$region0: #{tpu_custom_call.1}
  #allocation0 [shape = 'u32[]', space=smem, size = 0x4, offset = 0x4, fixed_abs, tag = 'smem constant byte address 0x4 - core index']
  #allocation1 [shape = 'u32[144,128]{1,0:T(1,128)}', space=vmem, size = 0x12000, scoped, tag = 'internal scratch']
  #allocation2 [shape = 'f32[289,16]{1,0:T(8,128)}', space=vmem, size = 0x25000, scoped, tag = 'scratch operand']
  %s0 = inlined_call_operand.vmem [shape: bf16[10,4,307,8], index: 0, kind: input, shape index: {}]
  %s1 = inlined_call_operand.vmem [shape: bf16[9,8,16], index: 1, kind: input, shape index: {}]
  %s2 = inlined_call_operand.vmem [shape: f32[1,16], index: 2, kind: input, shape index: {}]
  %s3 = inlined_call_operand.vmem [shape: f32[10,289,16], index: 3, kind: output, shape index: {}]
  %s4 = sld [smem:[#allocation0]]
  $region45: #{tpu_custom_call.1} parent=0
    _
  %s6 = ssub.s32 1, %s4
  %s7 = scalar_select 0, %s6, %s4
  loop: start=0, step=1, limit=12
  $region2: #{tpu_custom_call.1} parent=0 // loop_pre_header
    _
  $region3: #{tpu_custom_call.1} parent=0 // loop_header
    %s9 = sphi 0, %s13
    %p10 = scmp.ge.s32.totalorder %s9, 12
    %s19 = sphi 0, %s21
    %s22 = sphi 0, %s19
    %s23 = sphi 0, %s22
    %s39 = sphi 0, %s23
    %s43 = sphi 0, %s43
    %s45 = sphi 0, %s43
    %s46 = sphi 0, %s45
    %s60 = sphi 0, %s46
    %s64 = sphi 0, %s64
    %s66 = sphi 0, %s64
    %s67 = sphi 0, %s66
    %s81 = sphi 0, %s67
    %s87 = sphi 0, %s89
    %s90 = sphi 0, %s87
    %s91 = sphi 0, %s90
    %s107 = sphi 0, %s91
  $region4: #{tpu_custom_call.1} parent=0 // loop_header_branch
    %12 = sbr.rel (%p10) target = $region8
  $region5: #{tpu_custom_call.1} parent=0 // loop_body
    %s14 = ssub.s32 %s9, 1
    %s15 = ssub.s32 %s9, 2
    %s16 = sadd.s32 %s9, 1
    %s17 = ssub.s32 %s9, %s16
    %p18 = scmp.eq.s32.totalorder %s17, 0
    %s20 = sadd.s32 %s19, 1
    %s21 = scalar_select %p18, %s19, %s20
    %p24 = pneg %p18
    %p25 = scmp.eq.s32.totalorder %s9, 9
    %p26 = por %p24, %p25
    %p27 = scmp.ne.s32.totalorder %s19, %s22
    %p28 = scmp.eq.s32.totalorder %s9, 0
    %p29 = por %p27, %p28
    %p30 = scmp.ne.s32.totalorder %s19, %s22
    %p31 = scmp.eq.s32.totalorder %s14, 9
    %p32 = por %p30, %p31
    %p33 = scmp.ne.s32.totalorder %s22, %s23
    %p34 = scmp.eq.s32.totalorder %s14, 0
    %p35 = por %p33, %p34
    %p36 = scmp.ne.s32.totalorder %s22, %s23
    %p37 = scmp.eq.s32.totalorder %s15, 9
    %p38 = por %p36, %p37
    %p40 = scmp.ne.s32.totalorder %s23, %s39
    %p41 = scmp.eq.s32.totalorder %s15, 0
    %p42 = por %p40, %p41
    %s44 = sadd.s32 %s43, 1
    %p47 = scmp.eq.s32.totalorder %s9, 9
    %p48 = scmp.ne.s32.totalorder %s43, %s45
    %p49 = scmp.eq.s32.totalorder %s9, 0
    %p50 = por %p48, %p49
    %p51 = scmp.ne.s32.totalorder %s43, %s45
    %p52 = scmp.eq.s32.totalorder %s14, 9
    %p53 = por %p51, %p52
    %p54 = scmp.ne.s32.totalorder %s45, %s46
    %p55 = scmp.eq.s32.totalorder %s14, 0
    %p56 = por %p54, %p55
    %p57 = scmp.ne.s32.totalorder %s45, %s46
    %p58 = scmp.eq.s32.totalorder %s15, 9
    %p59 = por %p57, %p58
    %p61 = scmp.ne.s32.totalorder %s46, %s60
    %p62 = scmp.eq.s32.totalorder %s15, 0
    %p63 = por %p61, %p62
    %s65 = sadd.s32 %s64, 1
    %p68 = scmp.eq.s32.totalorder %s9, 9
    %p69 = scmp.ne.s32.totalorder %s64, %s66
    %p70 = scmp.eq.s32.totalorder %s9, 0
    %p71 = por %p69, %p70
    %p72 = scmp.ne.s32.totalorder %s64, %s66
    %p73 = scmp.eq.s32.totalorder %s14, 9
    %p74 = por %p72, %p73
    %p75 = scmp.ne.s32.totalorder %s66, %s67
    %p76 = scmp.eq.s32.totalorder %s14, 0
    %p77 = por %p75, %p76
    %p78 = scmp.ne.s32.totalorder %s66, %s67
    %p79 = scmp.eq.s32.totalorder %s15, 9
    %p80 = por %p78, %p79
    %p82 = scmp.ne.s32.totalorder %s67, %s81
    %p83 = scmp.eq.s32.totalorder %s15, 0
    %p84 = por %p82, %p83
    %s85 = ssub.s32 %s9, %s16
    %p86 = scmp.eq.s32.totalorder %s85, 0
    %s88 = sadd.s32 %s87, 1
    %s89 = scalar_select %p86, %s87, %s88
    %p92 = pneg %p86
    %p93 = scmp.eq.s32.totalorder %s9, 9
    %p94 = por %p92, %p93
    %p95 = scmp.ne.s32.totalorder %s87, %s90
    %p96 = scmp.eq.s32.totalorder %s9, 0
    %p97 = por %p95, %p96
    %p98 = scmp.ne.s32.totalorder %s87, %s90
    %p99 = scmp.eq.s32.totalorder %s14, 9
    %p100 = por %p98, %p99
    %p101 = scmp.ne.s32.totalorder %s90, %s91
    %p102 = scmp.eq.s32.totalorder %s14, 0
    %p103 = por %p101, %p102
    %p104 = scmp.ne.s32.totalorder %s90, %s91
    %p105 = scmp.eq.s32.totalorder %s15, 9
    %p106 = por %p104, %p105
    %p108 = scmp.ne.s32.totalorder %s91, %s107
    %p109 = scmp.eq.s32.totalorder %s15, 0
    %p110 = por %p108, %p109
    %p111 = scmp.le.s32.totalorder 1, %s9
    %p112 = scmp.lt.s32.totalorder %s9, 11
    %p113 = pnand %p111, %p112
    %p114 = pneg %p113
    // Predicated region
    $region9: #{tpu_custom_call.1} parent=5 // pred_check
      _
    $region10: #{tpu_custom_call.1} parent=5 // pred_check_branch
      %116 = sbr.rel (%p113) target = $region12
    $region11: #{tpu_custom_call.1} parent=5 // pred_region
      %s117 = ssub.s32 %s9, 1
      // Predicated region
      $region13: #{tpu_custom_call.1} parent=11 // pred_check
        %p118 = pneg %p56
      $region14: #{tpu_custom_call.1} parent=11 // pred_check_branch
        %120 = sbr.rel (%p118) target = $region16
      $region15: #{tpu_custom_call.1} parent=11 // pred_region
        _
      $region16: #{tpu_custom_call.1} parent=11 // pred_fallthru
        _
      // Predicated region
      $region17: #{tpu_custom_call.1} parent=11 // pred_check
        %p121 = pneg %p77
      $region18: #{tpu_custom_call.1} parent=11 // pred_check_branch
        %123 = sbr.rel (%p121) target = $region20
      $region19: #{tpu_custom_call.1} parent=11 // pred_region
        _
      $region20: #{tpu_custom_call.1} parent=11 // pred_fallthru
        _
    $region12: #{tpu_custom_call.1} parent=5 // pred_fallthru
      _
    %p124 = scmp.lt.s32.totalorder %s9, 10
    // Predicated region
    $region21: #{tpu_custom_call.1} parent=5 // pred_check
      %p125 = pneg %p124
    $region22: #{tpu_custom_call.1} parent=5 // pred_check_branch
      %127 = sbr.rel (%p125) target = $region24
    $region23: #{tpu_custom_call.1} parent=5 // pred_region
      // Predicated region
      $region25: #{tpu_custom_call.1} parent=23 // pred_check
        %p128 = pneg %p29
      $region26: #{tpu_custom_call.1} parent=23 // pred_check_branch
        %130 = sbr.rel (%p128) target = $region28
      $region27: #{tpu_custom_call.1} parent=23 // pred_region
        %p131 = scmp.lt.s32.totalorder %s9, 9
        %s132 = scalar_select %p131, %s9, 9
        %s133 = smul.addr %s132, 156
        %s134 = smul.addr %s133, 4
        %s135 = scalar_lea.vmem %s0, %s134
      $region28: #{tpu_custom_call.1} parent=23 // pred_fallthru
        _
    $region24: #{tpu_custom_call.1} parent=5 // pred_fallthru
      _
    %p136 = scmp.le.s32.totalorder 1, %s9
    %p137 = scmp.lt.s32.totalorder %s9, 11
    %p138 = pnand %p136, %p137
    %p139 = pneg %p138
    // Predicated region
    $region29: #{tpu_custom_call.1} parent=5 // pred_check
      _
    $region30: #{tpu_custom_call.1} parent=5 // pred_check_branch
      %141 = sbr.rel (%p138) target = $region32
    $region31: #{tpu_custom_call.1} parent=5 // pred_region
      %s142 = ssub.s32 %s9, 1
      %p143 = scmp.lt.s32.totalorder %s14, 9
      %s144 = scalar_select %p143, %s14, 9
      %s145 = smul.addr %s144, 156
      %s146 = smul.addr %s145, 4
      %s147 = scalar_lea.vmem %s0, %s146
      %p148 = pneg %p35
      %p149 = pneg %p32
      %p150 = pneg %p56
      %p151 = pneg %p53
      %p152 = pneg %p77
      %p153 = pneg %p74
      %p154 = pneg %p103
      %p155 = pneg %p100
      %p156 = scmp.lt.s32.totalorder %s14, 9
      %s157 = scalar_select %p156, %s14, 9
      %s158 = smul.addr %s157, 37
      %s159 = smul.addr %s158, 8
      %s160 = scalar_lea.vmem %s3, %s159
      %p161 = scmp.lt.s32.totalorder %s14, 9
      %s162 = scalar_select %p161, %s14, 9
      %s163 = smul.addr %s162, 156
      %s164 = smul.addr %s163, 4
      %s165 = scalar_lea.vmem %s0, %s164
      %p166 = scmp.lt.s32.totalorder %s14, 9
      %s167 = scalar_select %p166, %s14, 9
      %s168 = smul.addr %s167, 37
      %s169 = smul.addr %s168, 8
      %s170 = scalar_lea.vmem %s3, %s169
      %vm172 = vcmask 130048
      %173 = vst.msk [vmem:[#allocation2] sm:$0xff] %vm172, 0.0
      %174 = vst.msk [vmem:[#allocation2 + $0x8] sm:$0xff] %vm172, 0.0
      %175 = vst.msk [vmem:[#allocation2 + $0x10] sm:$0xff] %vm172, 0.0
      %176 = vst.msk [vmem:[#allocation2 + $0x18] sm:$0xff] %vm172, 0.0
      %177 = vst.msk [vmem:[#allocation2 + $0x20] sm:$0xff] %vm172, 0.0
      %178 = vst.msk [vmem:[#allocation2 + $0x28] sm:$0xff] %vm172, 0.0
      %179 = vst.msk [vmem:[#allocation2 + $0x30] sm:$0xff] %vm172, 0.0
      %180 = vst.msk [vmem:[#allocation2 + $0x38] sm:$0xff] %vm172, 0.0
      %181 = vst.msk [vmem:[#allocation2 + $0x40] sm:$0xff] %vm172, 0.0
      %182 = vst.msk [vmem:[#allocation2 + $0x48] sm:$0xff] %vm172, 0.0
      %183 = vst.msk [vmem:[#allocation2 + $0x50] sm:$0xff] %vm172, 0.0
      %184 = vst.msk [vmem:[#allocation2 + $0x58] sm:$0xff] %vm172, 0.0
      %185 = vst.msk [vmem:[#allocation2 + $0x60] sm:$0xff] %vm172, 0.0
      %186 = vst.msk [vmem:[#allocation2 + $0x68] sm:$0xff] %vm172, 0.0
      %187 = vst.msk [vmem:[#allocation2 + $0x70] sm:$0xff] %vm172, 0.0
      %188 = vst.msk [vmem:[#allocation2 + $0x78] sm:$0xff] %vm172, 0.0
      %189 = vst.msk [vmem:[#allocation2 + $0x80] sm:$0xff] %vm172, 0.0
      %190 = vst.msk [vmem:[#allocation2 + $0x88] sm:$0xff] %vm172, 0.0
      %191 = vst.msk [vmem:[#allocation2 + $0x90] sm:$0xff] %vm172, 0.0
      %192 = vst.msk [vmem:[#allocation2 + $0x98] sm:$0xff] %vm172, 0.0
      %193 = vst.msk [vmem:[#allocation2 + $0xa0] sm:$0xff] %vm172, 0.0
      %194 = vst.msk [vmem:[#allocation2 + $0xa8] sm:$0xff] %vm172, 0.0
      %195 = vst.msk [vmem:[#allocation2 + $0xb0] sm:$0xff] %vm172, 0.0
      %196 = vst.msk [vmem:[#allocation2 + $0xb8] sm:$0xff] %vm172, 0.0
      %197 = vst.msk [vmem:[#allocation2 + $0xc0] sm:$0xff] %vm172, 0.0
      %198 = vst.msk [vmem:[#allocation2 + $0xc8] sm:$0xff] %vm172, 0.0
      %199 = vst.msk [vmem:[#allocation2 + $0xd0] sm:$0xff] %vm172, 0.0
      %200 = vst.msk [vmem:[#allocation2 + $0xd8] sm:$0xff] %vm172, 0.0
      %201 = vst.msk [vmem:[#allocation2 + $0xe0] sm:$0xff] %vm172, 0.0
      %202 = vst.msk [vmem:[#allocation2 + $0xe8] sm:$0xff] %vm172, 0.0
      %203 = vst.msk [vmem:[#allocation2 + $0xf0] sm:$0xff] %vm172, 0.0
      %204 = vst.msk [vmem:[#allocation2 + $0xf8] sm:$0xff] %vm172, 0.0
      %205 = vst.msk [vmem:[#allocation2 + $0x100] sm:$0xff] %vm172, 0.0
      %206 = vst.msk [vmem:[#allocation2 + $0x108] sm:$0xff] %vm172, 0.0
      %207 = vst.msk [vmem:[#allocation2 + $0x110] sm:$0xff] %vm172, 0.0
      %208 = vst.msk [vmem:[#allocation2 + $0x118] sm:$0xff] %vm172, 0.0
      %vm209 = vcmask 122880
      %210 = vst.msk [vmem:[#allocation2 + $0x120] sm:$0x1] %vm209, 0.0
      %v211 = vld [vmem:[%s165] sm:$0xf]
      %v212 = vld [vmem:[%s165 + $0x4] sm:$0xf]
      %v213 = vld [vmem:[%s165 + $0x8] sm:$0xf]
      %v214 = vld [vmem:[%s165 + $0xc] sm:$0xf]
      %v215 = vld [vmem:[%s165 + $0x10] sm:$0xf]
      %v216 = vld [vmem:[%s165 + $0x14] sm:$0xf]
      %v217 = vld [vmem:[%s165 + $0x18] sm:$0xf]
      %v218 = vld [vmem:[%s165 + $0x1c] sm:$0xf]
      %v219 = vld [vmem:[%s165 + $0x20] sm:$0xf]
      %v220 = vld [vmem:[%s165 + $0x24] sm:$0xf]
      %v221 = vld [vmem:[%s165 + $0x28] sm:$0xf]
      %v222 = vld [vmem:[%s165 + $0x2c] sm:$0xf]
      %v223 = vld [vmem:[%s165 + $0x30] sm:$0xf]
      %v224 = vld [vmem:[%s165 + $0x34] sm:$0xf]
      %v225 = vld [vmem:[%s165 + $0x38] sm:$0xf]
      %v226 = vld [vmem:[%s165 + $0x3c] sm:$0xf]
      %v227 = vld [vmem:[%s165 + $0x40] sm:$0xf]
      %v228 = vld [vmem:[%s165 + $0x44] sm:$0xf]
      %v229 = vld [vmem:[%s165 + $0x48] sm:$0xf]
      %v230 = vld [vmem:[%s165 + $0x4c] sm:$0xf]
      %v231 = vld [vmem:[%s165 + $0x50] sm:$0xf]
      %v232 = vld [vmem:[%s165 + $0x54] sm:$0xf]
      %v233 = vld [vmem:[%s165 + $0x58] sm:$0xf]
      %v234 = vld [vmem:[%s165 + $0x5c] sm:$0xf]
      %v235 = vld [vmem:[%s165 + $0x60] sm:$0xf]
      %v236 = vld [vmem:[%s165 + $0x64] sm:$0xf]
      %v237 = vld [vmem:[%s165 + $0x68] sm:$0xf]
      %v238 = vld [vmem:[%s165 + $0x6c] sm:$0xf]
      %v239 = vld [vmem:[%s165 + $0x70] sm:$0xf]
      %v240 = vld [vmem:[%s165 + $0x74] sm:$0xf]
      %v241 = vld [vmem:[%s165 + $0x78] sm:$0xf]
      %v242 = vld [vmem:[%s165 + $0x7c] sm:$0xf]
      %v243 = vld [vmem:[%s165 + $0x80] sm:$0xf]
      %v244 = vld [vmem:[%s165 + $0x84] sm:$0xf]
      %v245 = vld [vmem:[%s165 + $0x88] sm:$0xf]
      %v246 = vld [vmem:[%s165 + $0x8c] sm:$0xf]
      %v247 = vld [vmem:[%s165 + $0x90] sm:$0x1]
      %v248 = vld [vmem:[#allocation2] sm:$0xff]
      %v249 = vld [vmem:[#allocation2 + $0x8] sm:$0xff]
      %v250 = vld [vmem:[#allocation2 + $0x10] sm:$0xff]
      %v251 = vld [vmem:[#allocation2 + $0x18] sm:$0xff]
      %v252 = vld [vmem:[#allocation2 + $0x20] sm:$0xff]
      %v253 = vld [vmem:[#allocation2 + $0x28] sm:$0xff]
      %v254 = vld [vmem:[#allocation2 + $0x30] sm:$0xff]
      %v255 = vld [vmem:[#allocation2 + $0x38] sm:$0xff]
      %v256 = vld [vmem:[#allocation2 + $0x40] sm:$0xff]
      %v257 = vld [vmem:[#allocation2 + $0x48] sm:$0xff]
      %v258 = vld [vmem:[#allocation2 + $0x50] sm:$0xff]
      %v259 = vld [vmem:[#allocation2 + $0x58] sm:$0xff]
      %v260 = vld [vmem:[#allocation2 + $0x60] sm:$0xff]
      %v261 = vld [vmem:[#allocation2 + $0x68] sm:$0xff]
      %v262 = vld [vmem:[#allocation2 + $0x70] sm:$0xff]
      %v263 = vld [vmem:[#allocation2 + $0x78] sm:$0xff]
      %v264 = vld [vmem:[#allocation2 + $0x80] sm:$0xff]
      %v265 = vld [vmem:[#allocation2 + $0x88] sm:$0xff]
      %v266 = vld [vmem:[#allocation2 + $0x90] sm:$0xff]
      %v267 = vld [vmem:[#allocation2 + $0x98] sm:$0xff]
      %v268 = vld [vmem:[#allocation2 + $0xa0] sm:$0xff]
      %v269 = vld [vmem:[#allocation2 + $0xa8] sm:$0xff]
      %v270 = vld [vmem:[#allocation2 + $0xb0] sm:$0xff]
      %v271 = vld [vmem:[#allocation2 + $0xb8] sm:$0xff]
      %v272 = vld [vmem:[#allocation2 + $0xc0] sm:$0xff]
      %v273 = vld [vmem:[#allocation2 + $0xc8] sm:$0xff]
      %v274 = vld [vmem:[#allocation2 + $0xd0] sm:$0xff]
      %v275 = vld [vmem:[#allocation2 + $0xd8] sm:$0xff]
      %v276 = vld [vmem:[#allocation2 + $0xe0] sm:$0xff]
      %v277 = vld [vmem:[#allocation2 + $0xe8] sm:$0xff]
      %v278 = vld [vmem:[#allocation2 + $0xf0] sm:$0xff]
      %v279 = vld [vmem:[#allocation2 + $0xf8] sm:$0xff]
      %v280 = vld [vmem:[#allocation2 + $0x100] sm:$0xff]
      %v281 = vld [vmem:[#allocation2 + $0x108] sm:$0xff]
      %v282 = vld [vmem:[#allocation2 + $0x110] sm:$0xff]
      %v283 = vld [vmem:[#allocation2 + $0x118] sm:$0xff]
      %v284 = vld [vmem:[#allocation2 + $0x120] sm:$0x1]
      %v285 = vld [vmem:[%s1] sm:$0xf]
      %v323 = vunpack.c.l.b16 %v211
      %v324 = vunpack.c.l.b16 %v212
      %v325 = vunpack.c.l.b16 %v213
      %v326 = vunpack.c.l.b16 %v214
      %v327 = vunpack.c.l.b16 %v215
      %v328 = vunpack.c.l.b16 %v216
      %v329 = vunpack.c.l.b16 %v217
      %v330 = vunpack.c.l.b16 %v218
      %v331 = vunpack.c.l.b16 %v219
      %v332 = vunpack.c.l.b16 %v220
      %v333 = vunpack.c.l.b16 %v221
      %v334 = vunpack.c.l.b16 %v222
      %v335 = vunpack.c.l.b16 %v223
      %v336 = vunpack.c.l.b16 %v224
      %v337 = vunpack.c.l.b16 %v225
      %v338 = vunpack.c.l.b16 %v226
      %v339 = vunpack.c.l.b16 %v227
      %v340 = vunpack.c.l.b16 %v228
      %v341 = vunpack.c.l.b16 %v229
      %v342 = vunpack.c.l.b16 %v230
      %v343 = vunpack.c.l.b16 %v231
      %v344 = vunpack.c.l.b16 %v232
      %v345 = vunpack.c.l.b16 %v233
      %v346 = vunpack.c.l.b16 %v234
      %v347 = vunpack.c.l.b16 %v235
      %v348 = vunpack.c.l.b16 %v236
      %v349 = vunpack.c.l.b16 %v237
      %v350 = vunpack.c.l.b16 %v238
      %v351 = vunpack.c.l.b16 %v239
      %v352 = vunpack.c.l.b16 %v240
      %v353 = vunpack.c.l.b16 %v241
      %v354 = vunpack.c.l.b16 %v242
      %v355 = vunpack.c.l.b16 %v243
      %v356 = vunpack.c.l.b16 %v244
      %v357 = vunpack.c.l.b16 %v245
      %v358 = vunpack.c.l.b16 %v246
      %v359 = vunpack.c.l.b16 %v247
      %v360 = vpack.c.b16 %v324, %v323
      %v361 = vpack.c.b16 %v326, %v325
      %v362 = vpack.c.b16 %v328, %v327
      %v363 = vpack.c.b16 %v330, %v329
      %v364 = vpack.c.b16 %v332, %v331
      %v365 = vpack.c.b16 %v334, %v333
      %v366 = vpack.c.b16 %v336, %v335
      %v367 = vpack.c.b16 %v338, %v337
      %v368 = vpack.c.b16 %v340, %v339
      %v369 = vpack.c.b16 %v342, %v341
      %v370 = vpack.c.b16 %v344, %v343
      %v371 = vpack.c.b16 %v346, %v345
      %v372 = vpack.c.b16 %v348, %v347
      %v373 = vpack.c.b16 %v350, %v349
      %v374 = vpack.c.b16 %v352, %v351
      %v375 = vpack.c.b16 %v354, %v353
      %v376 = vpack.c.b16 %v356, %v355
      %v377 = vpack.c.b16 %v358, %v357
      %v378 = vpack.c.b16 %v359, %v359
      %vm379 = vcmask 64512
      %v381 = vsel %vm379, %v360, 0
      %v384 = vsel %vm379, %v361, 0
      %v387 = vsel %vm379, %v362, 0
      %v390 = vsel %vm379, %v363, 0
      %v393 = vsel %vm379, %v364, 0
      %v396 = vsel %vm379, %v365, 0
      %v399 = vsel %vm379, %v366, 0
      %v402 = vsel %vm379, %v367, 0
      %v405 = vsel %vm379, %v368, 0
      %v408 = vsel %vm379, %v369, 0
      %v411 = vsel %vm379, %v370, 0
      %v414 = vsel %vm379, %v371, 0
      %v417 = vsel %vm379, %v372, 0
      %v420 = vsel %vm379, %v373, 0
      %v423 = vsel %vm379, %v374, 0
      %v426 = vsel %vm379, %v375, 0
      %v429 = vsel %vm379, %v376, 0
      %v432 = vsel %vm379, %v377, 0
      %v435 = vsel %vm379, %v378, 0
      %vm437 = vcmask 1043456
      %v439 = vsel %vm437, %v285, 0
      %441 = vmatprep.subr.bf16.mxu0 0
      %442 = vmatpush1.bf16.msra.mxu0 0
      %443 = vmatprep.subr.bf16.mxu0 0
      %444 = vmatpush1.bf16.msra.mxu0 0
      %445 = vmatprep.subr.bf16.mxu0 0
      %446 = vmatpush1.bf16.msra.mxu0 0
      %447 = vmatprep.subr.bf16.mxu0 0
      %448 = vmatpush1.bf16.msra.mxu0 0
      %449 = vmatprep.subr.bf16.mxu0 0
      %450 = vmatpush1.bf16.msra.mxu0 0
      %451 = vmatprep.subr.bf16.mxu0 0
      %452 = vmatpush1.bf16.msra.mxu0 0
      %453 = vmatprep.subr.bf16.mxu0 0
      %454 = vmatpush1.bf16.msra.mxu0 0
      %455 = vmatprep.subr.bf16.mxu0 0
      %456 = vmatpush1.bf16.msra.mxu0 %v439
      %457 = vmatprep.subr.bf16.mxu0 0
      %458 = vmatpush2.bf16.msra.mxu0 0
      %459 = vmatprep.subr.bf16.mxu0 0
      %460 = vmatpush2.bf16.msra.mxu0 0
      %461 = vmatprep.subr.bf16.mxu0 0
      %462 = vmatpush2.bf16.msra.mxu0 0
      %463 = vmatprep.subr.bf16.mxu0 0
      %464 = vmatpush2.bf16.msra.mxu0 0
      %465 = vmatprep.subr.bf16.mxu0 0
      %466 = vmatpush2.bf16.msra.mxu0 0
      %467 = vmatprep.subr.bf16.mxu0 0
      %468 = vmatpush2.bf16.msra.mxu0 0
      %469 = vmatprep.subr.bf16.mxu0 0
      %470 = vmatpush2.bf16.msra.mxu0 0
      %471 = vmatprep.subr.bf16.mxu0 0
      %472 = vmatpush2.bf16.msra.mxu0 0
      %473 = vmatprep.mubr.bf16.mxu0 0
      %474 = vmatmul.mubr.bf16.gmra.mxu0 %v381
      %v475 = vpop.f32.mrf.mxu0
      %v476 = vadd.f32 0.0, %v475
      %v477 = vpop.f32.mrf.mxu0
      %v478 = vpop.f32.mrf.mxu0
      %v479 = vadd.f32 0.0, %v478
      %v480 = vpop.f32.mrf.mxu0
      %481 = vmatprep.mubr.bf16.mxu0 0
      %482 = vmatmul.mubr.bf16.gmra.mxu0 %v384
      %v483 = vpop.f32.mrf.mxu0
      %v484 = vadd.f32 0.0, %v483
      %v485 = vpop.f32.mrf.mxu0
      %v486 = vpop.f32.mrf.mxu0
      %v487 = vadd.f32 0.0, %v486
      %v488 = vpop.f32.mrf.mxu0
      %489 = vmatprep.mubr.bf16.mxu0 0
      %490 = vmatmul.mubr.bf16.gmra.mxu0 %v387
      %v491 = vpop.f32.mrf.mxu0
      %v492 = vadd.f32 0.0, %v491
      %v493 = vpop.f32.mrf.mxu0
      %v494 = vpop.f32.mrf.mxu0
      %v495 = vadd.f32 0.0, %v494
      %v496 = vpop.f32.mrf.mxu0
      %497 = vmatprep.mubr.bf16.mxu0 0
      %498 = vmatmul.mubr.bf16.gmra.mxu0 %v390
      %v499 = vpop.f32.mrf.mxu0
      %v500 = vadd.f32 0.0, %v499
      %v501 = vpop.f32.mrf.mxu0
      %v502 = vpop.f32.mrf.mxu0
      %v503 = vadd.f32 0.0, %v502
      %v504 = vpop.f32.mrf.mxu0
      %505 = vmatprep.mubr.bf16.mxu0 0
      %506 = vmatmul.mubr.bf16.gmra.mxu0 %v393
      %v507 = vpop.f32.mrf.mxu0
      %v508 = vadd.f32 0.0, %v507
      %v509 = vpop.f32.mrf.mxu0
      %v510 = vpop.f32.mrf.mxu0
      %v511 = vadd.f32 0.0, %v510
      %v512 = vpop.f32.mrf.mxu0
      %513 = vmatprep.mubr.bf16.mxu0 0
      %514 = vmatmul.mubr.bf16.gmra.mxu0 %v396
      %v515 = vpop.f32.mrf.mxu0
      %v516 = vadd.f32 0.0, %v515
      %v517 = vpop.f32.mrf.mxu0
      %v518 = vpop.f32.mrf.mxu0
      %v519 = vadd.f32 0.0, %v518
      %v520 = vpop.f32.mrf.mxu0
      %521 = vmatprep.mubr.bf16.mxu0 0
      %522 = vmatmul.mubr.bf16.gmra.mxu0 %v399
      %v523 = vpop.f32.mrf.mxu0
      %v524 = vadd.f32 0.0, %v523
      %v525 = vpop.f32.mrf.mxu0
      %v526 = vpop.f32.mrf.mxu0
      %v527 = vadd.f32 0.0, %v526
      %v528 = vpop.f32.mrf.mxu0
      %529 = vmatprep.mubr.bf16.mxu0 0
      %530 = vmatmul.mubr.bf16.gmra.mxu0 %v402
      %v531 = vpop.f32.mrf.mxu0
      %v532 = vadd.f32 0.0, %v531
      %v533 = vpop.f32.mrf.mxu0
      %v534 = vpop.f32.mrf.mxu0
      %v535 = vadd.f32 0.0, %v534
      %v536 = vpop.f32.mrf.mxu0
      %537 = vmatprep.mubr.bf16.mxu0 0
      %538 = vmatmul.mubr.bf16.gmra.mxu0 %v405
      %v539 = vpop.f32.mrf.mxu0
      %v540 = vadd.f32 0.0, %v539
      %v541 = vpop.f32.mrf.mxu0
      %v542 = vpop.f32.mrf.mxu0
      %v543 = vadd.f32 0.0, %v542
      %v544 = vpop.f32.mrf.mxu0
      %545 = vmatprep.mubr.bf16.mxu0 0
      %546 = vmatmul.mubr.bf16.gmra.mxu0 %v408
      %v547 = vpop.f32.mrf.mxu0
      %v548 = vadd.f32 0.0, %v547
      %v549 = vpop.f32.mrf.mxu0
      %v550 = vpop.f32.mrf.mxu0
      %v551 = vadd.f32 0.0, %v550
      %v552 = vpop.f32.mrf.mxu0
      %553 = vmatprep.mubr.bf16.mxu0 0
      %554 = vmatmul.mubr.bf16.gmra.mxu0 %v411
      %v555 = vpop.f32.mrf.mxu0
      %v556 = vadd.f32 0.0, %v555
      %v557 = vpop.f32.mrf.mxu0
      %v558 = vpop.f32.mrf.mxu0
      %v559 = vadd.f32 0.0, %v558
      %v560 = vpop.f32.mrf.mxu0
      %561 = vmatprep.mubr.bf16.mxu0 0
      %562 = vmatmul.mubr.bf16.gmra.mxu0 %v414
      %v563 = vpop.f32.mrf.mxu0
      %v564 = vadd.f32 0.0, %v563
      %v565 = vpop.f32.mrf.mxu0
      %v566 = vpop.f32.mrf.mxu0
      %v567 = vadd.f32 0.0, %v566
      %v568 = vpop.f32.mrf.mxu0
      %569 = vmatprep.mubr.bf16.mxu0 0
      %570 = vmatmul.mubr.bf16.gmra.mxu0 %v417
      %v571 = vpop.f32.mrf.mxu0
      %v572 = vadd.f32 0.0, %v571
      %v573 = vpop.f32.mrf.mxu0
      %v574 = vpop.f32.mrf.mxu0
      %v575 = vadd.f32 0.0, %v574
      %v576 = vpop.f32.mrf.mxu0
      %577 = vmatprep.mubr.bf16.mxu0 0
      %578 = vmatmul.mubr.bf16.gmra.mxu0 %v420
      %v579 = vpop.f32.mrf.mxu0
      %v580 = vadd.f32 0.0, %v579
      %v581 = vpop.f32.mrf.mxu0
      %v582 = vpop.f32.mrf.mxu0
      %v583 = vadd.f32 0.0, %v582
      %v584 = vpop.f32.mrf.mxu0
      %585 = vmatprep.mubr.bf16.mxu0 0
      %586 = vmatmul.mubr.bf16.gmra.mxu0 %v423
      %v587 = vpop.f32.mrf.mxu0
      %v588 = vadd.f32 0.0, %v587
      %v589 = vpop.f32.mrf.mxu0
      %v590 = vpop.f32.mrf.mxu0
      %v591 = vadd.f32 0.0, %v590
      %v592 = vpop.f32.mrf.mxu0
      %593 = vmatprep.mubr.bf16.mxu0 0
      %594 = vmatmul.mubr.bf16.gmra.mxu0 %v426
      %v595 = vpop.f32.mrf.mxu0
      %v596 = vadd.f32 0.0, %v595
      %v597 = vpop.f32.mrf.mxu0
      %v598 = vpop.f32.mrf.mxu0
      %v599 = vadd.f32 0.0, %v598
      %v600 = vpop.f32.mrf.mxu0
      %601 = vmatprep.mubr.bf16.mxu0 0
      %602 = vmatmul.mubr.bf16.gmra.mxu0 %v429
      %v603 = vpop.f32.mrf.mxu0
      %v604 = vadd.f32 0.0, %v603
      %v605 = vpop.f32.mrf.mxu0
      %v606 = vpop.f32.mrf.mxu0
      %v607 = vadd.f32 0.0, %v606
      %v608 = vpop.f32.mrf.mxu0
      %609 = vmatprep.mubr.bf16.mxu0 0
      %610 = vmatmul.mubr.bf16.gmra.mxu0 %v432
      %v611 = vpop.f32.mrf.mxu0
      %v612 = vadd.f32 0.0, %v611
      %v613 = vpop.f32.mrf.mxu0
      %v614 = vpop.f32.mrf.mxu0
      %v615 = vadd.f32 0.0, %v614
      %v616 = vpop.f32.mrf.mxu0
      %617 = vmatprep.mubr.bf16.mxu0 0
      %618 = vmatmul.mubr.bf16.gmra.mxu0 %v435
      %v619 = vpop.f32.mrf.mxu0
      %v620 = vadd.f32 0.0, %v619
      %v621 = vpop.f32.mrf.mxu0
      %v622 = vpop.f32.mrf.mxu0
      %v623 = vpop.f32.mrf.mxu0
      %624 = vdwg.mxu0
      %v625 = vadd.f32 %v248, %v476
      %v626 = vadd.f32 %v249, %v479
      %v627 = vadd.f32 %v250, %v484
      %v628 = vadd.f32 %v251, %v487
      %v629 = vadd.f32 %v252, %v492
      %v630 = vadd.f32 %v253, %v495
      %v631 = vadd.f32 %v254, %v500
      %v632 = vadd.f32 %v255, %v503
      %v633 = vadd.f32 %v256, %v508
      %v634 = vadd.f32 %v257, %v511
      %v635 = vadd.f32 %v258, %v516
      %v636 = vadd.f32 %v259, %v519
      %v637 = vadd.f32 %v260, %v524
      %v638 = vadd.f32 %v261, %v527
      %v639 = vadd.f32 %v262, %v532
      %v640 = vadd.f32 %v263, %v535
      %v641 = vadd.f32 %v264, %v540
      %v642 = vadd.f32 %v265, %v543
      %v643 = vadd.f32 %v266, %v548
      %v644 = vadd.f32 %v267, %v551
      %v645 = vadd.f32 %v268, %v556
      %v646 = vadd.f32 %v269, %v559
      %v647 = vadd.f32 %v270, %v564
      %v648 = vadd.f32 %v271, %v567
      %v649 = vadd.f32 %v272, %v572
      %v650 = vadd.f32 %v273, %v575
      %v651 = vadd.f32 %v274, %v580
      %v652 = vadd.f32 %v275, %v583
      %v653 = vadd.f32 %v276, %v588
      %v654 = vadd.f32 %v277, %v591
      %v655 = vadd.f32 %v278, %v596
      %v656 = vadd.f32 %v279, %v599
      %v657 = vadd.f32 %v280, %v604
      %v658 = vadd.f32 %v281, %v607
      %v659 = vadd.f32 %v282, %v612
      %v660 = vadd.f32 %v283, %v615
      %v661 = vadd.f32 %v284, %v620
      %662 = vst.msk [vmem:[#allocation2] sm:$0xff] %vm172, %v625
      %663 = vst.msk [vmem:[#allocation2 + $0x8] sm:$0xff] %vm172, %v626
      %664 = vst.msk [vmem:[#allocation2 + $0x10] sm:$0xff] %vm172, %v627
      %665 = vst.msk [vmem:[#allocation2 + $0x18] sm:$0xff] %vm172, %v628
      %666 = vst.msk [vmem:[#allocation2 + $0x20] sm:$0xff] %vm172, %v629
      %667 = vst.msk [vmem:[#allocation2 + $0x28] sm:$0xff] %vm172, %v630
      %668 = vst.msk [vmem:[#allocation2 + $0x30] sm:$0xff] %vm172, %v631
      %669 = vst.msk [vmem:[#allocation2 + $0x38] sm:$0xff] %vm172, %v632
      %670 = vst.msk [vmem:[#allocation2 + $0x40] sm:$0xff] %vm172, %v633
      %671 = vst.msk [vmem:[#allocation2 + $0x48] sm:$0xff] %vm172, %v634
      %672 = vst.msk [vmem:[#allocation2 + $0x50] sm:$0xff] %vm172, %v635
      %673 = vst.msk [vmem:[#allocation2 + $0x58] sm:$0xff] %vm172, %v636
      %674 = vst.msk [vmem:[#allocation2 + $0x60] sm:$0xff] %vm172, %v637
      %675 = vst.msk [vmem:[#allocation2 + $0x68] sm:$0xff] %vm172, %v638
      %676 = vst.msk [vmem:[#allocation2 + $0x70] sm:$0xff] %vm172, %v639
      %677 = vst.msk [vmem:[#allocation2 + $0x78] sm:$0xff] %vm172, %v640
      %678 = vst.msk [vmem:[#allocation2 + $0x80] sm:$0xff] %vm172, %v641
      %679 = vst.msk [vmem:[#allocation2 + $0x88] sm:$0xff] %vm172, %v642
      %680 = vst.msk [vmem:[#allocation2 + $0x90] sm:$0xff] %vm172, %v643
      %681 = vst.msk [vmem:[#allocation2 + $0x98] sm:$0xff] %vm172, %v644
      %682 = vst.msk [vmem:[#allocation2 + $0xa0] sm:$0xff] %vm172, %v645
      %683 = vst.msk [vmem:[#allocation2 + $0xa8] sm:$0xff] %vm172, %v646
      %684 = vst.msk [vmem:[#allocation2 + $0xb0] sm:$0xff] %vm172, %v647
      %685 = vst.msk [vmem:[#allocation2 + $0xb8] sm:$0xff] %vm172, %v648
      %686 = vst.msk [vmem:[#allocation2 + $0xc0] sm:$0xff] %vm172, %v649
      %687 = vst.msk [vmem:[#allocation2 + $0xc8] sm:$0xff] %vm172, %v650
      %688 = vst.msk [vmem:[#allocation2 + $0xd0] sm:$0xff] %vm172, %v651
      %689 = vst.msk [vmem:[#allocation2 + $0xd8] sm:$0xff] %vm172, %v652
      %690 = vst.msk [vmem:[#allocation2 + $0xe0] sm:$0xff] %vm172, %v653
      %691 = vst.msk [vmem:[#allocation2 + $0xe8] sm:$0xff] %vm172, %v654
      %692 = vst.msk [vmem:[#allocation2 + $0xf0] sm:$0xff] %vm172, %v655
      %693 = vst.msk [vmem:[#allocation2 + $0xf8] sm:$0xff] %vm172, %v656
      %694 = vst.msk [vmem:[#allocation2 + $0x100] sm:$0xff] %vm172, %v657
      %695 = vst.msk [vmem:[#allocation2 + $0x108] sm:$0xff] %vm172, %v658
      %696 = vst.msk [vmem:[#allocation2 + $0x110] sm:$0xff] %vm172, %v659
      %697 = vst.msk [vmem:[#allocation2 + $0x118] sm:$0xff] %vm172, %v660
      %698 = vst.msk [vmem:[#allocation2 + $0x120] sm:$0x1] %vm209, %v661
      %s699 = scalar_lea.vmem %s165, 156
      %v700 = vld [vmem:[%s699] sm:$0xf]
      %v701 = vld [vmem:[%s699 + $0x4] sm:$0xf]
      %v702 = vld [vmem:[%s699 + $0x8] sm:$0xf]
      %v703 = vld [vmem:[%s699 + $0xc] sm:$0xf]
      %v704 = vld [vmem:[%s699 + $0x10] sm:$0xf]
      %v705 = vld [vmem:[%s699 + $0x14] sm:$0xf]
      %v706 = vld [vmem:[%s699 + $0x18] sm:$0xf]
      %v707 = vld [vmem:[%s699 + $0x1c] sm:$0xf]
      %v708 = vld [vmem:[%s699 + $0x20] sm:$0xf]
      %v709 = vld [vmem:[%s699 + $0x24] sm:$0xf]
      %v710 = vld [vmem:[%s699 + $0x28] sm:$0xf]
      %v711 = vld [vmem:[%s699 + $0x2c] sm:$0xf]
      %v712 = vld [vmem:[%s699 + $0x30] sm:$0xf]
      %v713 = vld [vmem:[%s699 + $0x34] sm:$0xf]
      %v714 = vld [vmem:[%s699 + $0x38] sm:$0xf]
      %v715 = vld [vmem:[%s699 + $0x3c] sm:$0xf]
      %v716 = vld [vmem:[%s699 + $0x40] sm:$0xf]
      %v717 = vld [vmem:[%s699 + $0x44] sm:$0xf]
      %v718 = vld [vmem:[%s699 + $0x48] sm:$0xf]
      %v719 = vld [vmem:[%s699 + $0x4c] sm:$0xf]
      %v720 = vld [vmem:[%s699 + $0x50] sm:$0xf]
      %v721 = vld [vmem:[%s699 + $0x54] sm:$0xf]
      %v722 = vld [vmem:[%s699 + $0x58] sm:$0xf]
      %v723 = vld [vmem:[%s699 + $0x5c] sm:$0xf]
      %v724 = vld [vmem:[%s699 + $0x60] sm:$0xf]
      %v725 = vld [vmem:[%s699 + $0x64] sm:$0xf]
      %v726 = vld [vmem:[%s699 + $0x68] sm:$0xf]
      %v727 = vld [vmem:[%s699 + $0x6c] sm:$0xf]
      %v728 = vld [vmem:[%s699 + $0x70] sm:$0xf]
      %v729 = vld [vmem:[%s699 + $0x74] sm:$0xf]
      %v730 = vld [vmem:[%s699 + $0x78] sm:$0xf]
      %v731 = vld [vmem:[%s699 + $0x7c] sm:$0xf]
      %v732 = vld [vmem:[%s699 + $0x80] sm:$0xf]
      %v733 = vld [vmem:[%s699 + $0x84] sm:$0xf]
      %v734 = vld [vmem:[%s699 + $0x88] sm:$0xf]
      %v735 = vld [vmem:[%s699 + $0x8c] sm:$0xf]
      %v736 = vld [vmem:[%s699 + $0x90] sm:$0x1]
      %v737 = vld [vmem:[#allocation2] sm:$0xff]
      %v738 = vld [vmem:[#allocation2 + $0x8] sm:$0xff]
      %v739 = vld [vmem:[#allocation2 + $0x10] sm:$0xff]
      %v740 = vld [vmem:[#allocation2 + $0x18] sm:$0xff]
      %v741 = vld [vmem:[#allocation2 + $0x20] sm:$0xff]
      %v742 = vld [vmem:[#allocation2 + $0x28] sm:$0xff]
      %v743 = vld [vmem:[#allocation2 + $0x30] sm:$0xff]
      %v744 = vld [vmem:[#allocation2 + $0x38] sm:$0xff]
      %v745 = vld [vmem:[#allocation2 + $0x40] sm:$0xff]
      %v746 = vld [vmem:[#allocation2 + $0x48] sm:$0xff]
      %v747 = vld [vmem:[#allocation2 + $0x50] sm:$0xff]
      %v748 = vld [vmem:[#allocation2 + $0x58] sm:$0xff]
      %v749 = vld [vmem:[#allocation2 + $0x60] sm:$0xff]
      %v750 = vld [vmem:[#allocation2 + $0x68] sm:$0xff]
      %v751 = vld [vmem:[#allocation2 + $0x70] sm:$0xff]
      %v752 = vld [vmem:[#allocation2 + $0x78] sm:$0xff]
      %v753 = vld [vmem:[#allocation2 + $0x80] sm:$0xff]
      %v754 = vld [vmem:[#allocation2 + $0x88] sm:$0xff]
      %v755 = vld [vmem:[#allocation2 + $0x90] sm:$0xff]
      %v756 = vld [vmem:[#allocation2 + $0x98] sm:$0xff]
      %v757 = vld [vmem:[#allocation2 + $0xa0] sm:$0xff]
      %v758 = vld [vmem:[#allocation2 + $0xa8] sm:$0xff]
      %v759 = vld [vmem:[#allocation2 + $0xb0] sm:$0xff]
      %v760 = vld [vmem:[#allocation2 + $0xb8] sm:$0xff]
      %v761 = vld [vmem:[#allocation2 + $0xc0] sm:$0xff]
      %v762 = vld [vmem:[#allocation2 + $0xc8] sm:$0xff]
      %v763 = vld [vmem:[#allocation2 + $0xd0] sm:$0xff]
      %v764 = vld [vmem:[#allocation2 + $0xd8] sm:$0xff]
      %v765 = vld [vmem:[#allocation2 + $0xe0] sm:$0xff]
      %v766 = vld [vmem:[#allocation2 + $0xe8] sm:$0xff]
      %v767 = vld [vmem:[#allocation2 + $0xf0] sm:$0xff]
      %v768 = vld [vmem:[#allocation2 + $0xf8] sm:$0xff]
      %v769 = vld [vmem:[#allocation2 + $0x100] sm:$0xff]
      %v770 = vld [vmem:[#allocation2 + $0x108] sm:$0xff]
      %v771 = vld [vmem:[#allocation2 + $0x110] sm:$0xff]
      %v772 = vld [vmem:[#allocation2 + $0x118] sm:$0xff]
      %v773 = vld [vmem:[#allocation2 + $0x120] sm:$0x1]
      %s774 = scalar_lea.vmem %s1, 4
      %v775 = vld [vmem:[%s774] sm:$0xf]
      %v813 = vunpack.c.l.b16 %v700
      %v814 = vunpack.c.l.b16 %v701
      %v815 = vunpack.c.l.b16 %v702
      %v816 = vunpack.c.l.b16 %v703
      %v817 = vunpack.c.l.b16 %v704
      %v818 = vunpack.c.l.b16 %v705
      %v819 = vunpack.c.l.b16 %v706
      %v820 = vunpack.c.l.b16 %v707
      %v821 = vunpack.c.l.b16 %v708
      %v822 = vunpack.c.l.b16 %v709
      %v823 = vunpack.c.l.b16 %v710
      %v824 = vunpack.c.l.b16 %v711
      %v825 = vunpack.c.l.b16 %v712
      %v826 = vunpack.c.l.b16 %v713
      %v827 = vunpack.c.l.b16 %v714
      %v828 = vunpack.c.l.b16 %v715
      %v829 = vunpack.c.l.b16 %v716
      %v830 = vunpack.c.l.b16 %v717
      %v831 = vunpack.c.l.b16 %v718
      %v832 = vunpack.c.l.b16 %v719
      %v833 = vunpack.c.l.b16 %v720
      %v834 = vunpack.c.l.b16 %v721
      %v835 = vunpack.c.l.b16 %v722
      %v836 = vunpack.c.l.b16 %v723
      %v837 = vunpack.c.l.b16 %v724
      %v838 = vunpack.c.l.b16 %v725
      %v839 = vunpack.c.l.b16 %v726
      %v840 = vunpack.c.l.b16 %v727
      %v841 = vunpack.c.l.b16 %v728
      %v842 = vunpack.c.l.b16 %v729
      %v843 = vunpack.c.l.b16 %v730
      %v844 = vunpack.c.l.b16 %v731
      %v845 = vunpack.c.l.b16 %v732
      %v846 = vunpack.c.l.b16 %v733
      %v847 = vunpack.c.l.b16 %v734
      %v848 = vunpack.c.l.b16 %v735
      %v849 = vunpack.c.l.b16 %v736
      %v850 = vpack.c.b16 %v814, %v813
      %v851 = vpack.c.b16 %v816, %v815
      %v852 = vpack.c.b16 %v818, %v817
      %v853 = vpack.c.b16 %v820, %v819
      %v854 = vpack.c.b16 %v822, %v821
      %v855 = vpack.c.b16 %v824, %v823
      %v856 = vpack.c.b16 %v826, %v825
      %v857 = vpack.c.b16 %v828, %v827
      %v858 = vpack.c.b16 %v830, %v829
      %v859 = vpack.c.b16 %v832, %v831
      %v860 = vpack.c.b16 %v834, %v833
      %v861 = vpack.c.b16 %v836, %v835
      %v862 = vpack.c.b16 %v838, %v837
      %v863 = vpack.c.b16 %v840, %v839
      %v864 = vpack.c.b16 %v842, %v841
      %v865 = vpack.c.b16 %v844, %v843
      %v866 = vpack.c.b16 %v846, %v845
      %v867 = vpack.c.b16 %v848, %v847
      %v868 = vpack.c.b16 %v849, %v849
      %v870 = vsel %vm379, %v850, 0
      %v873 = vsel %vm379, %v851, 0
      %v876 = vsel %vm379, %v852, 0
      %v879 = vsel %vm379, %v853, 0
      %v882 = vsel %vm379, %v854, 0
      %v885 = vsel %vm379, %v855, 0
      %v888 = vsel %vm379, %v856, 0
      %v891 = vsel %vm379, %v857, 0
      %v894 = vsel %vm379, %v858, 0
      %v897 = vsel %vm379, %v859, 0
      %v900 = vsel %vm379, %v860, 0
      %v903 = vsel %vm379, %v861, 0
      %v906 = vsel %vm379, %v862, 0
      %v909 = vsel %vm379, %v863, 0
      %v912 = vsel %vm379, %v864, 0
      %v915 = vsel %vm379, %v865, 0
      %v918 = vsel %vm379, %v866, 0
      %v921 = vsel %vm379, %v867, 0
      %v924 = vsel %vm379, %v868, 0
      %v927 = vsel %vm437, %v775, 0
      %929 = vmatprep.subr.bf16.mxu0 0
      %930 = vmatpush1.bf16.msra.mxu0 0
      %931 = vmatprep.subr.bf16.mxu0 0
      %932 = vmatpush1.bf16.msra.mxu0 0
      %933 = vmatprep.subr.bf16.mxu0 0
      %934 = vmatpush1.bf16.msra.mxu0 0
      %935 = vmatprep.subr.bf16.mxu0 0
      %936 = vmatpush1.bf16.msra.mxu0 0
      %937 = vmatprep.subr.bf16.mxu0 0
      %938 = vmatpush1.bf16.msra.mxu0 0
      %939 = vmatprep.subr.bf16.mxu0 0
      %940 = vmatpush1.bf16.msra.mxu0 0
      %941 = vmatprep.subr.bf16.mxu0 0
      %942 = vmatpush1.bf16.msra.mxu0 0
      %943 = vmatprep.subr.bf16.mxu0 0
      %944 = vmatpush1.bf16.msra.mxu0 %v927
      %945 = vmatprep.subr.bf16.mxu0 0
      %946 = vmatpush2.bf16.msra.mxu0 0
      %947 = vmatprep.subr.bf16.mxu0 0
      %948 = vmatpush2.bf16.msra.mxu0 0
      %949 = vmatprep.subr.bf16.mxu0 0
      %950 = vmatpush2.bf16.msra.mxu0 0
      %951 = vmatprep.subr.bf16.mxu0 0
      %952 = vmatpush2.bf16.msra.mxu0 0
      %953 = vmatprep.subr.bf16.mxu0 0
      %954 = vmatpush2.bf16.msra.mxu0 0
      %955 = vmatprep.subr.bf16.mxu0 0
      %956 = vmatpush2.bf16.msra.mxu0 0
      %957 = vmatprep.subr.bf16.mxu0 0
      %958 = vmatpush2.bf16.msra.mxu0 0
      %959 = vmatprep.subr.bf16.mxu0 0
      %960 = vmatpush2.bf16.msra.mxu0 0
      %961 = vmatprep.mubr.bf16.mxu0 0
      %962 = vmatmul.mubr.bf16.gmra.mxu0 %v870
      %v963 = vpop.f32.mrf.mxu0
      %v964 = vadd.f32 0.0, %v963
      %v965 = vpop.f32.mrf.mxu0
      %v966 = vpop.f32.mrf.mxu0
      %v967 = vadd.f32 0.0, %v966
      %v968 = vpop.f32.mrf.mxu0
      %969 = vmatprep.mubr.bf16.mxu0 0
      %970 = vmatmul.mubr.bf16.gmra.mxu0 %v873
      %v971 = vpop.f32.mrf.mxu0
      %v972 = vadd.f32 0.0, %v971
      %v973 = vpop.f32.mrf.mxu0
      %v974 = vpop.f32.mrf.mxu0
      %v975 = vadd.f32 0.0, %v974
      %v976 = vpop.f32.mrf.mxu0
      %977 = vmatprep.mubr.bf16.mxu0 0
      %978 = vmatmul.mubr.bf16.gmra.mxu0 %v876
      %v979 = vpop.f32.mrf.mxu0
      %v980 = vadd.f32 0.0, %v979
      %v981 = vpop.f32.mrf.mxu0
      %v982 = vpop.f32.mrf.mxu0
      %v983 = vadd.f32 0.0, %v982
      %v984 = vpop.f32.mrf.mxu0
      %985 = vmatprep.mubr.bf16.mxu0 0
      %986 = vmatmul.mubr.bf16.gmra.mxu0 %v879
      %v987 = vpop.f32.mrf.mxu0
      %v988 = vadd.f32 0.0, %v987
      %v989 = vpop.f32.mrf.mxu0
      %v990 = vpop.f32.mrf.mxu0
      %v991 = vadd.f32 0.0, %v990
      %v992 = vpop.f32.mrf.mxu0
      %993 = vmatprep.mubr.bf16.mxu0 0
      %994 = vmatmul.mubr.bf16.gmra.mxu0 %v882
      %v995 = vpop.f32.mrf.mxu0
      %v996 = vadd.f32 0.0, %v995
      %v997 = vpop.f32.mrf.mxu0
      %v998 = vpop.f32.mrf.mxu0
      %v999 = vadd.f32 0.0, %v998
      %v1000 = vpop.f32.mrf.mxu0
      %1001 = vmatprep.mubr.bf16.mxu0 0
      %1002 = vmatmul.mubr.bf16.gmra.mxu0 %v885
      %v1003 = vpop.f32.mrf.mxu0
      %v1004 = vadd.f32 0.0, %v1003
      %v1005 = vpop.f32.mrf.mxu0
      %v1006 = vpop.f32.mrf.mxu0
      %v1007 = vadd.f32 0.0, %v1006
      %v1008 = vpop.f32.mrf.mxu0
      %1009 = vmatprep.mubr.bf16.mxu0 0
      %1010 = vmatmul.mubr.bf16.gmra.mxu0 %v888
      %v1011 = vpop.f32.mrf.mxu0
      %v1012 = vadd.f32 0.0, %v1011
      %v1013 = vpop.f32.mrf.mxu0
      %v1014 = vpop.f32.mrf.mxu0
      %v1015 = vadd.f32 0.0, %v1014
      %v1016 = vpop.f32.mrf.mxu0
      %1017 = vmatprep.mubr.bf16.mxu0 0
      %1018 = vmatmul.mubr.bf16.gmra.mxu0 %v891
      %v1019 = vpop.f32.mrf.mxu0
      %v1020 = vadd.f32 0.0, %v1019
      %v1021 = vpop.f32.mrf.mxu0
      %v1022 = vpop.f32.mrf.mxu0
      %v1023 = vadd.f32 0.0, %v1022
      %v1024 = vpop.f32.mrf.mxu0
      %1025 = vmatprep.mubr.bf16.mxu0 0
      %1026 = vmatmul.mubr.bf16.gmra.mxu0 %v894
      %v1027 = vpop.f32.mrf.mxu0
      %v1028 = vadd.f32 0.0, %v1027
      %v1029 = vpop.f32.mrf.mxu0
      %v1030 = vpop.f32.mrf.mxu0
      %v1031 = vadd.f32 0.0, %v1030
      %v1032 = vpop.f32.mrf.mxu0
      %1033 = vmatprep.mubr.bf16.mxu0 0
      %1034 = vmatmul.mubr.bf16.gmra.mxu0 %v897
      %v1035 = vpop.f32.mrf.mxu0
      %v1036 = vadd.f32 0.0, %v1035
      %v1037 = vpop.f32.mrf.mxu0
      %v1038 = vpop.f32.mrf.mxu0
      %v1039 = vadd.f32 0.0, %v1038
      %v1040 = vpop.f32.mrf.mxu0
      %1041 = vmatprep.mubr.bf16.mxu0 0
      %1042 = vmatmul.mubr.bf16.gmra.mxu0 %v900
      %v1043 = vpop.f32.mrf.mxu0
      %v1044 = vadd.f32 0.0, %v1043
      %v1045 = vpop.f32.mrf.mxu0
      %v1046 = vpop.f32.mrf.mxu0
      %v1047 = vadd.f32 0.0, %v1046
      %v1048 = vpop.f32.mrf.mxu0
      %1049 = vmatprep.mubr.bf16.mxu0 0
      %1050 = vmatmul.mubr.bf16.gmra.mxu0 %v903
      %v1051 = vpop.f32.mrf.mxu0
      %v1052 = vadd.f32 0.0, %v1051
      %v1053 = vpop.f32.mrf.mxu0
      %v1054 = vpop.f32.mrf.mxu0
      %v1055 = vadd.f32 0.0, %v1054
      %v1056 = vpop.f32.mrf.mxu0
      %1057 = vmatprep.mubr.bf16.mxu0 0
      %1058 = vmatmul.mubr.bf16.gmra.mxu0 %v906
      %v1059 = vpop.f32.mrf.mxu0
      %v1060 = vadd.f32 0.0, %v1059
      %v1061 = vpop.f32.mrf.mxu0
      %v1062 = vpop.f32.mrf.mxu0
      %v1063 = vadd.f32 0.0, %v1062
      %v1064 = vpop.f32.mrf.mxu0
      %1065 = vmatprep.mubr.bf16.mxu0 0
      %1066 = vmatmul.mubr.bf16.gmra.mxu0 %v909
      %v1067 = vpop.f32.mrf.mxu0
      %v1068 = vadd.f32 0.0, %v1067
      %v1069 = vpop.f32.mrf.mxu0
      %v1070 = vpop.f32.mrf.mxu0
      %v1071 = vadd.f32 0.0, %v1070
      %v1072 = vpop.f32.mrf.mxu0
      %1073 = vmatprep.mubr.bf16.mxu0 0
      %1074 = vmatmul.mubr.bf16.gmra.mxu0 %v912
      %v1075 = vpop.f32.mrf.mxu0
      %v1076 = vadd.f32 0.0, %v1075
      %v1077 = vpop.f32.mrf.mxu0
      %v1078 = vpop.f32.mrf.mxu0
      %v1079 = vadd.f32 0.0, %v1078
      %v1080 = vpop.f32.mrf.mxu0
      %1081 = vmatprep.mubr.bf16.mxu0 0
      %1082 = vmatmul.mubr.bf16.gmra.mxu0 %v915
      %v1083 = vpop.f32.mrf.mxu0
      %v1084 = vadd.f32 0.0, %v1083
      %v1085 = vpop.f32.mrf.mxu0
      %v1086 = vpop.f32.mrf.mxu0
      %v1087 = vadd.f32 0.0, %v1086
      %v1088 = vpop.f32.mrf.mxu0
      %1089 = vmatprep.mubr.bf16.mxu0 0
      %1090 = vmatmul.mubr.bf16.gmra.mxu0 %v918
      %v1091 = vpop.f32.mrf.mxu0
      %v1092 = vadd.f32 0.0, %v1091
      %v1093 = vpop.f32.mrf.mxu0
      %v1094 = vpop.f32.mrf.mxu0
      %v1095 = vadd.f32 0.0, %v1094
      %v1096 = vpop.f32.mrf.mxu0
      %1097 = vmatprep.mubr.bf16.mxu0 0
      %1098 = vmatmul.mubr.bf16.gmra.mxu0 %v921
      %v1099 = vpop.f32.mrf.mxu0
      %v1100 = vadd.f32 0.0, %v1099
      %v1101 = vpop.f32.mrf.mxu0
      %v1102 = vpop.f32.mrf.mxu0
      %v1103 = vadd.f32 0.0, %v1102
      %v1104 = vpop.f32.mrf.mxu0
      %1105 = vmatprep.mubr.bf16.mxu0 0
      %1106 = vmatmul.mubr.bf16.gmra.mxu0 %v924
      %v1107 = vpop.f32.mrf.mxu0
      %v1108 = vadd.f32 0.0, %v1107
      %v1109 = vpop.f32.mrf.mxu0
      %v1110 = vpop.f32.mrf.mxu0
      %v1111 = vpop.f32.mrf.mxu0
      %1112 = vdwg.mxu0
      %v1113 = vadd.f32 %v737, %v964
      %v1114 = vadd.f32 %v738, %v967
      %v1115 = vadd.f32 %v739, %v972
      %v1116 = vadd.f32 %v740, %v975
      %v1117 = vadd.f32 %v741, %v980
      %v1118 = vadd.f32 %v742, %v983
      %v1119 = vadd.f32 %v743, %v988
      %v1120 = vadd.f32 %v744, %v991
      %v1121 = vadd.f32 %v745, %v996
      %v1122 = vadd.f32 %v746, %v999
      %v1123 = vadd.f32 %v747, %v1004
      %v1124 = vadd.f32 %v748, %v1007
      %v1125 = vadd.f32 %v749, %v1012
      %v1126 = vadd.f32 %v750, %v1015
      %v1127 = vadd.f32 %v751, %v1020
      %v1128 = vadd.f32 %v752, %v1023
      %v1129 = vadd.f32 %v753, %v1028
      %v1130 = vadd.f32 %v754, %v1031
      %v1131 = vadd.f32 %v755, %v1036
      %v1132 = vadd.f32 %v756, %v1039
      %v1133 = vadd.f32 %v757, %v1044
      %v1134 = vadd.f32 %v758, %v1047
      %v1135 = vadd.f32 %v759, %v1052
      %v1136 = vadd.f32 %v760, %v1055
      %v1137 = vadd.f32 %v761, %v1060
      %v1138 = vadd.f32 %v762, %v1063
      %v1139 = vadd.f32 %v763, %v1068
      %v1140 = vadd.f32 %v764, %v1071
      %v1141 = vadd.f32 %v765, %v1076
      %v1142 = vadd.f32 %v766, %v1079
      %v1143 = vadd.f32 %v767, %v1084
      %v1144 = vadd.f32 %v768, %v1087
      %v1145 = vadd.f32 %v769, %v1092
      %v1146 = vadd.f32 %v770, %v1095
      %v1147 = vadd.f32 %v771, %v1100
      %v1148 = vadd.f32 %v772, %v1103
      %v1149 = vadd.f32 %v773, %v1108
      %1150 = vst.msk [vmem:[#allocation2] sm:$0xff] %vm172, %v1113
      %1151 = vst.msk [vmem:[#allocation2 + $0x8] sm:$0xff] %vm172, %v1114
      %1152 = vst.msk [vmem:[#allocation2 + $0x10] sm:$0xff] %vm172, %v1115
      %1153 = vst.msk [vmem:[#allocation2 + $0x18] sm:$0xff] %vm172, %v1116
      %1154 = vst.msk [vmem:[#allocation2 + $0x20] sm:$0xff] %vm172, %v1117
      %1155 = vst.msk [vmem:[#allocation2 + $0x28] sm:$0xff] %vm172, %v1118
      %1156 = vst.msk [vmem:[#allocation2 + $0x30] sm:$0xff] %vm172, %v1119
      %1157 = vst.msk [vmem:[#allocation2 + $0x38] sm:$0xff] %vm172, %v1120
      %1158 = vst.msk [vmem:[#allocation2 + $0x40] sm:$0xff] %vm172, %v1121
      %1159 = vst.msk [vmem:[#allocation2 + $0x48] sm:$0xff] %vm172, %v1122
      %1160 = vst.msk [vmem:[#allocation2 + $0x50] sm:$0xff] %vm172, %v1123
      %1161 = vst.msk [vmem:[#allocation2 + $0x58] sm:$0xff] %vm172, %v1124
      %1162 = vst.msk [vmem:[#allocation2 + $0x60] sm:$0xff] %vm172, %v1125
      %1163 = vst.msk [vmem:[#allocation2 + $0x68] sm:$0xff] %vm172, %v1126
      %1164 = vst.msk [vmem:[#allocation2 + $0x70] sm:$0xff] %vm172, %v1127
      %1165 = vst.msk [vmem:[#allocation2 + $0x78] sm:$0xff] %vm172, %v1128
      %1166 = vst.msk [vmem:[#allocation2 + $0x80] sm:$0xff] %vm172, %v1129
      %1167 = vst.msk [vmem:[#allocation2 + $0x88] sm:$0xff] %vm172, %v1130
      %1168 = vst.msk [vmem:[#allocation2 + $0x90] sm:$0xff] %vm172, %v1131
      %1169 = vst.msk [vmem:[#allocation2 + $0x98] sm:$0xff] %vm172, %v1132
      %1170 = vst.msk [vmem:[#allocation2 + $0xa0] sm:$0xff] %vm172, %v1133
      %1171 = vst.msk [vmem:[#allocation2 + $0xa8] sm:$0xff] %vm172, %v1134
      %1172 = vst.msk [vmem:[#allocation2 + $0xb0] sm:$0xff] %vm172, %v1135
      %1173 = vst.msk [vmem:[#allocation2 + $0xb8] sm:$0xff] %vm172, %v1136
      %1174 = vst.msk [vmem:[#allocation2 + $0xc0] sm:$0xff] %vm172, %v1137
      %1175 = vst.msk [vmem:[#allocation2 + $0xc8] sm:$0xff] %vm172, %v1138
      %1176 = vst.msk [vmem:[#allocation2 + $0xd0] sm:$0xff] %vm172, %v1139
      %1177 = vst.msk [vmem:[#allocation2 + $0xd8] sm:$0xff] %vm172, %v1140
      %1178 = vst.msk [vmem:[#allocation2 + $0xe0] sm:$0xff] %vm172, %v1141
      %1179 = vst.msk [vmem:[#allocation2 + $0xe8] sm:$0xff] %vm172, %v1142
      %1180 = vst.msk [vmem:[#allocation2 + $0xf0] sm:$0xff] %vm172, %v1143
      %1181 = vst.msk [vmem:[#allocation2 + $0xf8] sm:$0xff] %vm172, %v1144
      %1182 = vst.msk [vmem:[#allocation2 + $0x100] sm:$0xff] %vm172, %v1145
      %1183 = vst.msk [vmem:[#allocation2 + $0x108] sm:$0xff] %vm172, %v1146
      %1184 = vst.msk [vmem:[#allocation2 + $0x110] sm:$0xff] %vm172, %v1147
      %1185 = vst.msk [vmem:[#allocation2 + $0x118] sm:$0xff] %vm172, %v1148
      %1186 = vst.msk [vmem:[#allocation2 + $0x120] sm:$0x1] %vm209, %v1149
      %v1187 = vld [vmem:[%s165] sm:$0xf]
      %v1188 = vld [vmem:[%s165 + $0x4] sm:$0xf]
      %v1189 = vld [vmem:[%s165 + $0x8] sm:$0xf]
      %v1190 = vld [vmem:[%s165 + $0xc] sm:$0xf]
      %v1191 = vld [vmem:[%s165 + $0x10] sm:$0xf]
      %v1192 = vld [vmem:[%s165 + $0x14] sm:$0xf]
      %v1193 = vld [vmem:[%s165 + $0x18] sm:$0xf]
      %v1194 = vld [vmem:[%s165 + $0x1c] sm:$0xf]
      %v1195 = vld [vmem:[%s165 + $0x20] sm:$0xf]
      %v1196 = vld [vmem:[%s165 + $0x24] sm:$0xf]
      %v1197 = vld [vmem:[%s165 + $0x28] sm:$0xf]
      %v1198 = vld [vmem:[%s165 + $0x2c] sm:$0xf]
      %v1199 = vld [vmem:[%s165 + $0x30] sm:$0xf]
      %v1200 = vld [vmem:[%s165 + $0x34] sm:$0xf]
      %v1201 = vld [vmem:[%s165 + $0x38] sm:$0xf]
      %v1202 = vld [vmem:[%s165 + $0x3c] sm:$0xf]
      %v1203 = vld [vmem:[%s165 + $0x40] sm:$0xf]
      %v1204 = vld [vmem:[%s165 + $0x44] sm:$0xf]
      %v1205 = vld [vmem:[%s165 + $0x48] sm:$0xf]
      %v1206 = vld [vmem:[%s165 + $0x4c] sm:$0xf]
      %v1207 = vld [vmem:[%s165 + $0x50] sm:$0xf]
      %v1208 = vld [vmem:[%s165 + $0x54] sm:$0xf]
      %v1209 = vld [vmem:[%s165 + $0x58] sm:$0xf]
      %v1210 = vld [vmem:[%s165 + $0x5c] sm:$0xf]
      %v1211 = vld [vmem:[%s165 + $0x60] sm:$0xf]
      %v1212 = vld [vmem:[%s165 + $0x64] sm:$0xf]
      %v1213 = vld [vmem:[%s165 + $0x68] sm:$0xf]
      %v1214 = vld [vmem:[%s165 + $0x6c] sm:$0xf]
      %v1215 = vld [vmem:[%s165 + $0x70] sm:$0xf]
      %v1216 = vld [vmem:[%s165 + $0x74] sm:$0xf]
      %v1217 = vld [vmem:[%s165 + $0x78] sm:$0xf]
      %v1218 = vld [vmem:[%s165 + $0x7c] sm:$0xf]
      %v1219 = vld [vmem:[%s165 + $0x80] sm:$0xf]
      %v1220 = vld [vmem:[%s165 + $0x84] sm:$0xf]
      %v1221 = vld [vmem:[%s165 + $0x88] sm:$0xf]
      %v1222 = vld [vmem:[%s165 + $0x8c] sm:$0xf]
      %v1223 = vld [vmem:[%s165 + $0x90] sm:$0x1]
      %v1224 = vld [vmem:[#allocation2] sm:$0xff]
      %v1225 = vld [vmem:[#allocation2 + $0x8] sm:$0xff]
      %v1226 = vld [vmem:[#allocation2 + $0x10] sm:$0xff]
      %v1227 = vld [vmem:[#allocation2 + $0x18] sm:$0xff]
      %v1228 = vld [vmem:[#allocation2 + $0x20] sm:$0xff]
      %v1229 = vld [vmem:[#allocation2 + $0x28] sm:$0xff]
      %v1230 = vld [vmem:[#allocation2 + $0x30] sm:$0xff]
      %v1231 = vld [vmem:[#allocation2 + $0x38] sm:$0xff]
      %v1232 = vld [vmem:[#allocation2 + $0x40] sm:$0xff]
      %v1233 = vld [vmem:[#allocation2 + $0x48] sm:$0xff]
      %v1234 = vld [vmem:[#allocation2 + $0x50] sm:$0xff]
      %v1235 = vld [vmem:[#allocation2 + $0x58] sm:$0xff]
      %v1236 = vld [vmem:[#allocation2 + $0x60] sm:$0xff]
      %v1237 = vld [vmem:[#allocation2 + $0x68] sm:$0xff]
      %v1238 = vld [vmem:[#allocation2 + $0x70] sm:$0xff]
      %v1239 = vld [vmem:[#allocation2 + $0x78] sm:$0xff]
      %v1240 = vld [vmem:[#allocation2 + $0x80] sm:$0xff]
      %v1241 = vld [vmem:[#allocation2 + $0x88] sm:$0xff]
      %v1242 = vld [vmem:[#allocation2 + $0x90] sm:$0xff]
      %v1243 = vld [vmem:[#allocation2 + $0x98] sm:$0xff]
      %v1244 = vld [vmem:[#allocation2 + $0xa0] sm:$0xff]
      %v1245 = vld [vmem:[#allocation2 + $0xa8] sm:$0xff]
      %v1246 = vld [vmem:[#allocation2 + $0xb0] sm:$0xff]
      %v1247 = vld [vmem:[#allocation2 + $0xb8] sm:$0xff]
      %v1248 = vld [vmem:[#allocation2 + $0xc0] sm:$0xff]
      %v1249 = vld [vmem:[#allocation2 + $0xc8] sm:$0xff]
      %v1250 = vld [vmem:[#allocation2 + $0xd0] sm:$0xff]
      %v1251 = vld [vmem:[#allocation2 + $0xd8] sm:$0xff]
      %v1252 = vld [vmem:[#allocation2 + $0xe0] sm:$0xff]
      %v1253 = vld [vmem:[#allocation2 + $0xe8] sm:$0xff]
      %v1254 = vld [vmem:[#allocation2 + $0xf0] sm:$0xff]
      %v1255 = vld [vmem:[#allocation2 + $0xf8] sm:$0xff]
      %v1256 = vld [vmem:[#allocation2 + $0x100] sm:$0xff]
      %v1257 = vld [vmem:[#allocation2 + $0x108] sm:$0xff]
      %v1258 = vld [vmem:[#allocation2 + $0x110] sm:$0xff]
      %v1259 = vld [vmem:[#allocation2 + $0x118] sm:$0xff]
      %v1260 = vld [vmem:[#allocation2 + $0x120] sm:$0x1]
      %s1261 = scalar_lea.vmem %s1, 8
      %v1262 = vld [vmem:[%s1261] sm:$0xf]
      %v1300 = vunpack.c.l.b16 %v1187
      %v1301 = vunpack.c.l.b16 %v1188
      %v1302 = vunpack.c.l.b16 %v1189
      %v1303 = vunpack.c.l.b16 %v1190
      %v1304 = vunpack.c.l.b16 %v1191
      %v1305 = vunpack.c.l.b16 %v1192
      %v1306 = vunpack.c.l.b16 %v1193
      %v1307 = vunpack.c.l.b16 %v1194
      %v1308 = vunpack.c.l.b16 %v1195
      %v1309 = vunpack.c.l.b16 %v1196
      %v1310 = vunpack.c.l.b16 %v1197
      %v1311 = vunpack.c.l.b16 %v1198
      %v1312 = vunpack.c.l.b16 %v1199
      %v1313 = vunpack.c.l.b16 %v1200
      %v1314 = vunpack.c.l.b16 %v1201
      %v1315 = vunpack.c.l.b16 %v1202
      %v1316 = vunpack.c.l.b16 %v1203
      %v1317 = vunpack.c.l.b16 %v1204
      %v1318 = vunpack.c.l.b16 %v1205
      %v1319 = vunpack.c.l.b16 %v1206
      %v1320 = vunpack.c.l.b16 %v1207
      %v1321 = vunpack.c.l.b16 %v1208
      %v1322 = vunpack.c.l.b16 %v1209
      %v1323 = vunpack.c.l.b16 %v1210
      %v1324 = vunpack.c.l.b16 %v1211
      %v1325 = vunpack.c.l.b16 %v1212
      %v1326 = vunpack.c.l.b16 %v1213
      %v1327 = vunpack.c.l.b16 %v1214
      %v1328 = vunpack.c.l.b16 %v1215
      %v1329 = vunpack.c.l.b16 %v1216
      %v1330 = vunpack.c.l.b16 %v1217
      %v1331 = vunpack.c.l.b16 %v1218
      %v1332 = vunpack.c.l.b16 %v1219
      %v1333 = vunpack.c.l.b16 %v1220
      %v1334 = vunpack.c.l.b16 %v1221
      %v1335 = vunpack.c.l.b16 %v1222
      %v1336 = vunpack.c.l.b16 %v1223
      %v1337 = vpack.c.b16 %v1301, %v1300
      %v1338 = vpack.c.b16 %v1303, %v1302
      %v1339 = vpack.c.b16 %v1305, %v1304
      %v1340 = vpack.c.b16 %v1307, %v1306
      %v1341 = vpack.c.b16 %v1309, %v1308
      %v1342 = vpack.c.b16 %v1311, %v1310
      %v1343 = vpack.c.b16 %v1313, %v1312
      %v1344 = vpack.c.b16 %v1315, %v1314
      %v1345 = vpack.c.b16 %v1317, %v1316
      %v1346 = vpack.c.b16 %v1319, %v1318
      %v1347 = vpack.c.b16 %v1321, %v1320
      %v1348 = vpack.c.b16 %v1323, %v1322
      %v1349 = vpack.c.b16 %v1325, %v1324
      %v1350 = vpack.c.b16 %v1327, %v1326
      %v1351 = vpack.c.b16 %v1329, %v1328
      %v1352 = vpack.c.b16 %v1331, %v1330
      %v1353 = vpack.c.b16 %v1333, %v1332
      %v1354 = vpack.c.b16 %v1335, %v1334
      %v1355 = vpack.c.b16 %v1336, %v1336
      %vm1356 = vsmask.f32 7424
      %v1358 = vshrl.u32 %v1337, 16
      %v1360 = vshll.u32 %v1337, 16
      %v1362 = vrot.slane %v1360, 1
      %v1363 = vor.u32 %v1358, %v1362
      %v1365 = vshll.u32 %v1338, 16
      %v1367 = vrot.slane %v1365, 1
      %v1368 = vsel %vm1356, %v1363, %v1367
      %v1369 = vshrl.u32 %v1338, 16
      %v1371 = vor.u32 %v1369, %v1367
      %v1373 = vshll.u32 %v1339, 16
      %v1375 = vrot.slane %v1373, 1
      %v1376 = vsel %vm1356, %v1371, %v1375
      %v1377 = vshrl.u32 %v1339, 16
      %v1379 = vor.u32 %v1377, %v1375
      %v1381 = vshll.u32 %v1340, 16
      %v1383 = vrot.slane %v1381, 1
      %v1384 = vsel %vm1356, %v1379, %v1383
      %v1385 = vshrl.u32 %v1340, 16
      %v1387 = vor.u32 %v1385, %v1383
      %v1389 = vshll.u32 %v1341, 16
      %v1391 = vrot.slane %v1389, 1
      %v1392 = vsel %vm1356, %v1387, %v1391
      %v1393 = vshrl.u32 %v1341, 16
      %v1395 = vor.u32 %v1393, %v1391
      %v1397 = vshll.u32 %v1342, 16
      %v1399 = vrot.slane %v1397, 1
      %v1400 = vsel %vm1356, %v1395, %v1399
      %v1401 = vshrl.u32 %v1342, 16
      %v1403 = vor.u32 %v1401, %v1399
      %v1405 = vshll.u32 %v1343, 16
      %v1407 = vrot.slane %v1405, 1
      %v1408 = vsel %vm1356, %v1403, %v1407
      %v1409 = vshrl.u32 %v1343, 16
      %v1411 = vor.u32 %v1409, %v1407
      %v1413 = vshll.u32 %v1344, 16
      %v1415 = vrot.slane %v1413, 1
      %v1416 = vsel %vm1356, %v1411, %v1415
      %v1417 = vshrl.u32 %v1344, 16
      %v1419 = vor.u32 %v1417, %v1415
      %v1421 = vshll.u32 %v1345, 16
      %v1423 = vrot.slane %v1421, 1
      %v1424 = vsel %vm1356, %v1419, %v1423
      %v1425 = vshrl.u32 %v1345, 16
      %v1427 = vor.u32 %v1425, %v1423
      %v1429 = vshll.u32 %v1346, 16
      %v1431 = vrot.slane %v1429, 1
      %v1432 = vsel %vm1356, %v1427, %v1431
      %v1433 = vshrl.u32 %v1346, 16
      %v1435 = vor.u32 %v1433, %v1431
      %v1437 = vshll.u32 %v1347, 16
      %v1439 = vrot.slane %v1437, 1
      %v1440 = vsel %vm1356, %v1435, %v1439
      %v1441 = vshrl.u32 %v1347, 16
      %v1443 = vor.u32 %v1441, %v1439
      %v1445 = vshll.u32 %v1348, 16
      %v1447 = vrot.slane %v1445, 1
      %v1448 = vsel %vm1356, %v1443, %v1447
      %v1449 = vshrl.u32 %v1348, 16
      %v1451 = vor.u32 %v1449, %v1447
      %v1453 = vshll.u32 %v1349, 16
      %v1455 = vrot.slane %v1453, 1
      %v1456 = vsel %vm1356, %v1451, %v1455
      %v1457 = vshrl.u32 %v1349, 16
      %v1459 = vor.u32 %v1457, %v1455
      %v1461 = vshll.u32 %v1350, 16
      %v1463 = vrot.slane %v1461, 1
      %v1464 = vsel %vm1356, %v1459, %v1463
      %v1465 = vshrl.u32 %v1350, 16
      %v1467 = vor.u32 %v1465, %v1463
      %v1469 = vshll.u32 %v1351, 16
      %v1471 = vrot.slane %v1469, 1
      %v1472 = vsel %vm1356, %v1467, %v1471
      %v1473 = vshrl.u32 %v1351, 16
      %v1475 = vor.u32 %v1473, %v1471
      %v1477 = vshll.u32 %v1352, 16
      %v1479 = vrot.slane %v1477, 1
      %v1480 = vsel %vm1356, %v1475, %v1479
      %v1481 = vshrl.u32 %v1352, 16
      %v1483 = vor.u32 %v1481, %v1479
      %v1485 = vshll.u32 %v1353, 16
      %v1487 = vrot.slane %v1485, 1
      %v1488 = vsel %vm1356, %v1483, %v1487
      %v1489 = vshrl.u32 %v1353, 16
      %v1491 = vor.u32 %v1489, %v1487
      %v1493 = vshll.u32 %v1354, 16
      %v1495 = vrot.slane %v1493, 1
      %v1496 = vsel %vm1356, %v1491, %v1495
      %v1497 = vshrl.u32 %v1354, 16
      %v1499 = vor.u32 %v1497, %v1495
      %v1501 = vshll.u32 %v1355, 16
      %v1503 = vrot.slane %v1501, 1
      %v1504 = vsel %vm1356, %v1499, %v1503
      %v1505 = vshrl.u32 %v1355, 16
      %v1508 = vsel %vm379, %v1368, 0
      %v1511 = vsel %vm379, %v1376, 0
      %v1514 = vsel %vm379, %v1384, 0
      %v1517 = vsel %vm379, %v1392, 0
      %v1520 = vsel %vm379, %v1400, 0
      %v1523 = vsel %vm379, %v1408, 0
      %v1526 = vsel %vm379, %v1416, 0
      %v1529 = vsel %vm379, %v1424, 0
      %v1532 = vsel %vm379, %v1432, 0
      %v1535 = vsel %vm379, %v1440, 0
      %v1538 = vsel %vm379, %v1448, 0
      %v1541 = vsel %vm379, %v1456, 0
      %v1544 = vsel %vm379, %v1464, 0
      %v1547 = vsel %vm379, %v1472, 0
      %v1550 = vsel %vm379, %v1480, 0
      %v1553 = vsel %vm379, %v1488, 0
      %v1556 = vsel %vm379, %v1496, 0
      %v1559 = vsel %vm379, %v1504, 0
      %v1562 = vsel %vm379, %v1505, 0
      %v1565 = vsel %vm437, %v1262, 0
      %1567 = vmatprep.subr.bf16.mxu0 0
      %1568 = vmatpush1.bf16.msra.mxu0 0
      %1569 = vmatprep.subr.bf16.mxu0 0
      %1570 = vmatpush1.bf16.msra.mxu0 0
      %1571 = vmatprep.subr.bf16.mxu0 0
      %1572 = vmatpush1.bf16.msra.mxu0 0
      %1573 = vmatprep.subr.bf16.mxu0 0
      %1574 = vmatpush1.bf16.msra.mxu0 0
      %1575 = vmatprep.subr.bf16.mxu0 0
      %1576 = vmatpush1.bf16.msra.mxu0 0
      %1577 = vmatprep.subr.bf16.mxu0 0
      %1578 = vmatpush1.bf16.msra.mxu0 0
      %1579 = vmatprep.subr.bf16.mxu0 0
      %1580 = vmatpush1.bf16.msra.mxu0 0
      %1581 = vmatprep.subr.bf16.mxu0 0
      %1582 = vmatpush1.bf16.msra.mxu0 %v1565
      %1583 = vmatprep.subr.bf16.mxu0 0
      %1584 = vmatpush2.bf16.msra.mxu0 0
      %1585 = vmatprep.subr.bf16.mxu0 0
      %1586 = vmatpush2.bf16.msra.mxu0 0
      %1587 = vmatprep.subr.bf16.mxu0 0
      %1588 = vmatpush2.bf16.msra.mxu0 0
      %1589 = vmatprep.subr.bf16.mxu0 0
      %1590 = vmatpush2.bf16.msra.mxu0 0
      %1591 = vmatprep.subr.bf16.mxu0 0
      %1592 = vmatpush2.bf16.msra.mxu0 0
      %1593 = vmatprep.subr.bf16.mxu0 0
      %1594 = vmatpush2.bf16.msra.mxu0 0
      %1595 = vmatprep.subr.bf16.mxu0 0
      %1596 = vmatpush2.bf16.msra.mxu0 0
      %1597 = vmatprep.subr.bf16.mxu0 0
      %1598 = vmatpush2.bf16.msra.mxu0 0
      %1599 = vmatprep.mubr.bf16.mxu0 0
      %1600 = vmatmul.mubr.bf16.gmra.mxu0 %v1508
      %v1601 = vpop.f32.mrf.mxu0
      %v1602 = vadd.f32 0.0, %v1601
      %v1603 = vpop.f32.mrf.mxu0
      %v1604 = vpop.f32.mrf.mxu0
      %v1605 = vadd.f32 0.0, %v1604
      %v1606 = vpop.f32.mrf.mxu0
      %1607 = vmatprep.mubr.bf16.mxu0 0
      %1608 = vmatmul.mubr.bf16.gmra.mxu0 %v1511
      %v1609 = vpop.f32.mrf.mxu0
      %v1610 = vadd.f32 0.0, %v1609
      %v1611 = vpop.f32.mrf.mxu0
      %v1612 = vpop.f32.mrf.mxu0
      %v1613 = vadd.f32 0.0, %v1612
      %v1614 = vpop.f32.mrf.mxu0
      %1615 = vmatprep.mubr.bf16.mxu0 0
      %1616 = vmatmul.mubr.bf16.gmra.mxu0 %v1514
      %v1617 = vpop.f32.mrf.mxu0
      %v1618 = vadd.f32 0.0, %v1617
      %v1619 = vpop.f32.mrf.mxu0
      %v1620 = vpop.f32.mrf.mxu0
      %v1621 = vadd.f32 0.0, %v1620
      %v1622 = vpop.f32.mrf.mxu0
      %1623 = vmatprep.mubr.bf16.mxu0 0
      %1624 = vmatmul.mubr.bf16.gmra.mxu0 %v1517
      %v1625 = vpop.f32.mrf.mxu0
      %v1626 = vadd.f32 0.0, %v1625
      %v1627 = vpop.f32.mrf.mxu0
      %v1628 = vpop.f32.mrf.mxu0
      %v1629 = vadd.f32 0.0, %v1628
      %v1630 = vpop.f32.mrf.mxu0
      %1631 = vmatprep.mubr.bf16.mxu0 0
      %1632 = vmatmul.mubr.bf16.gmra.mxu0 %v1520
      %v1633 = vpop.f32.mrf.mxu0
      %v1634 = vadd.f32 0.0, %v1633
      %v1635 = vpop.f32.mrf.mxu0
      %v1636 = vpop.f32.mrf.mxu0
      %v1637 = vadd.f32 0.0, %v1636
      %v1638 = vpop.f32.mrf.mxu0
      %1639 = vmatprep.mubr.bf16.mxu0 0
      %1640 = vmatmul.mubr.bf16.gmra.mxu0 %v1523
      %v1641 = vpop.f32.mrf.mxu0
      %v1642 = vadd.f32 0.0, %v1641
      %v1643 = vpop.f32.mrf.mxu0
      %v1644 = vpop.f32.mrf.mxu0
      %v1645 = vadd.f32 0.0, %v1644
      %v1646 = vpop.f32.mrf.mxu0
      %1647 = vmatprep.mubr.bf16.mxu0 0
      %1648 = vmatmul.mubr.bf16.gmra.mxu0 %v1526
      %v1649 = vpop.f32.mrf.mxu0
      %v1650 = vadd.f32 0.0, %v1649
      %v1651 = vpop.f32.mrf.mxu0
      %v1652 = vpop.f32.mrf.mxu0
      %v1653 = vadd.f32 0.0, %v1652
      %v1654 = vpop.f32.mrf.mxu0
      %1655 = vmatprep.mubr.bf16.mxu0 0
      %1656 = vmatmul.mubr.bf16.gmra.mxu0 %v1529
      %v1657 = vpop.f32.mrf.mxu0
      %v1658 = vadd.f32 0.0, %v1657
      %v1659 = vpop.f32.mrf.mxu0
      %v1660 = vpop.f32.mrf.mxu0
      %v1661 = vadd.f32 0.0, %v1660
      %v1662 = vpop.f32.mrf.mxu0
      %1663 = vmatprep.mubr.bf16.mxu0 0
      %1664 = vmatmul.mubr.bf16.gmra.mxu0 %v1532
      %v1665 = vpop.f32.mrf.mxu0
      %v1666 = vadd.f32 0.0, %v1665
      %v1667 = vpop.f32.mrf.mxu0
      %v1668 = vpop.f32.mrf.mxu0
      %v1669 = vadd.f32 0.0, %v1668
      %v1670 = vpop.f32.mrf.mxu0
      %1671 = vmatprep.mubr.bf16.mxu0 0
      %1672 = vmatmul.mubr.bf16.gmra.mxu0 %v1535
      %v1673 = vpop.f32.mrf.mxu0
      %v1674 = vadd.f32 0.0, %v1673
      %v1675 = vpop.f32.mrf.mxu0
      %v1676 = vpop.f32.mrf.mxu0
      %v1677 = vadd.f32 0.0, %v1676
      %v1678 = vpop.f32.mrf.mxu0
      %1679 = vmatprep.mubr.bf16.mxu0 0
      %1680 = vmatmul.mubr.bf16.gmra.mxu0 %v1538
      %v1681 = vpop.f32.mrf.mxu0
      %v1682 = vadd.f32 0.0, %v1681
      %v1683 = vpop.f32.mrf.mxu0
      %v1684 = vpop.f32.mrf.mxu0
      %v1685 = vadd.f32 0.0, %v1684
      %v1686 = vpop.f32.mrf.mxu0
      %1687 = vmatprep.mubr.bf16.mxu0 0
      %1688 = vmatmul.mubr.bf16.gmra.mxu0 %v1541
      %v1689 = vpop.f32.mrf.mxu0
      %v1690 = vadd.f32 0.0, %v1689
      %v1691 = vpop.f32.mrf.mxu0
      %v1692 = vpop.f32.mrf.mxu0
      %v1693 = vadd.f32 0.0, %v1692
      %v1694 = vpop.f32.mrf.mxu0
      %1695 = vmatprep.mubr.bf16.mxu0 0
      %1696 = vmatmul.mubr.bf16.gmra.mxu0 %v1544
      %v1697 = vpop.f32.mrf.mxu0
      %v1698 = vadd.f32 0.0, %v1697
      %v1699 = vpop.f32.mrf.mxu0
      %v1700 = vpop.f32.mrf.mxu0
      %v1701 = vadd.f32 0.0, %v1700
      %v1702 = vpop.f32.mrf.mxu0
      %1703 = vmatprep.mubr.bf16.mxu0 0
      %1704 = vmatmul.mubr.bf16.gmra.mxu0 %v1547
      %v1705 = vpop.f32.mrf.mxu0
      %v1706 = vadd.f32 0.0, %v1705
      %v1707 = vpop.f32.mrf.mxu0
      %v1708 = vpop.f32.mrf.mxu0
      %v1709 = vadd.f32 0.0, %v1708
      %v1710 = vpop.f32.mrf.mxu0
      %1711 = vmatprep.mubr.bf16.mxu0 0
      %1712 = vmatmul.mubr.bf16.gmra.mxu0 %v1550
      %v1713 = vpop.f32.mrf.mxu0
      %v1714 = vadd.f32 0.0, %v1713
      %v1715 = vpop.f32.mrf.mxu0
      %v1716 = vpop.f32.mrf.mxu0
      %v1717 = vadd.f32 0.0, %v1716
      %v1718 = vpop.f32.mrf.mxu0
      %1719 = vmatprep.mubr.bf16.mxu0 0
      %1720 = vmatmul.mubr.bf16.gmra.mxu0 %v1553
      %v1721 = vpop.f32.mrf.mxu0
      %v1722 = vadd.f32 0.0, %v1721
      %v1723 = vpop.f32.mrf.mxu0
      %v1724 = vpop.f32.mrf.mxu0
      %v1725 = vadd.f32 0.0, %v1724
      %v1726 = vpop.f32.mrf.mxu0
      %1727 = vmatprep.mubr.bf16.mxu0 0
      %1728 = vmatmul.mubr.bf16.gmra.mxu0 %v1556
      %v1729 = vpop.f32.mrf.mxu0
      %v1730 = vadd.f32 0.0, %v1729
      %v1731 = vpop.f32.mrf.mxu0
      %v1732 = vpop.f32.mrf.mxu0
      %v1733 = vadd.f32 0.0, %v1732
      %v1734 = vpop.f32.mrf.mxu0
      %1735 = vmatprep.mubr.bf16.mxu0 0
      %1736 = vmatmul.mubr.bf16.gmra.mxu0 %v1559
      %v1737 = vpop.f32.mrf.mxu0
      %v1738 = vadd.f32 0.0, %v1737
      %v1739 = vpop.f32.mrf.mxu0
      %v1740 = vpop.f32.mrf.mxu0
      %v1741 = vadd.f32 0.0, %v1740
      %v1742 = vpop.f32.mrf.mxu0
      %1743 = vmatprep.mubr.bf16.mxu0 0
      %1744 = vmatmul.mubr.bf16.gmra.mxu0 %v1562
      %v1745 = vpop.f32.mrf.mxu0
      %v1746 = vadd.f32 0.0, %v1745
      %v1747 = vpop.f32.mrf.mxu0
      %v1748 = vpop.f32.mrf.mxu0
      %v1749 = vpop.f32.mrf.mxu0
      %1750 = vdwg.mxu0
      %v1751 = vadd.f32 %v1224, %v1602
      %v1752 = vadd.f32 %v1225, %v1605
      %v1753 = vadd.f32 %v1226, %v1610
      %v1754 = vadd.f32 %v1227, %v1613
      %v1755 = vadd.f32 %v1228, %v1618
      %v1756 = vadd.f32 %v1229, %v1621
      %v1757 = vadd.f32 %v1230, %v1626
      %v1758 = vadd.f32 %v1231, %v1629
      %v1759 = vadd.f32 %v1232, %v1634
      %v1760 = vadd.f32 %v1233, %v1637
      %v1761 = vadd.f32 %v1234, %v1642
      %v1762 = vadd.f32 %v1235, %v1645
      %v1763 = vadd.f32 %v1236, %v1650
      %v1764 = vadd.f32 %v1237, %v1653
      %v1765 = vadd.f32 %v1238, %v1658
      %v1766 = vadd.f32 %v1239, %v1661
      %v1767 = vadd.f32 %v1240, %v1666
      %v1768 = vadd.f32 %v1241, %v1669
      %v1769 = vadd.f32 %v1242, %v1674
      %v1770 = vadd.f32 %v1243, %v1677
      %v1771 = vadd.f32 %v1244, %v1682
      %v1772 = vadd.f32 %v1245, %v1685
      %v1773 = vadd.f32 %v1246, %v1690
      %v1774 = vadd.f32 %v1247, %v1693
      %v1775 = vadd.f32 %v1248, %v1698
      %v1776 = vadd.f32 %v1249, %v1701
      %v1777 = vadd.f32 %v1250, %v1706
      %v1778 = vadd.f32 %v1251, %v1709
      %v1779 = vadd.f32 %v1252, %v1714
      %v1780 = vadd.f32 %v1253, %v1717
      %v1781 = vadd.f32 %v1254, %v1722
      %v1782 = vadd.f32 %v1255, %v1725
      %v1783 = vadd.f32 %v1256, %v1730
      %v1784 = vadd.f32 %v1257, %v1733
      %v1785 = vadd.f32 %v1258, %v1738
      %v1786 = vadd.f32 %v1259, %v1741
      %v1787 = vadd.f32 %v1260, %v1746
      %1788 = vst.msk [vmem:[#allocation2] sm:$0xff] %vm172, %v1751
      %1789 = vst.msk [vmem:[#allocation2 + $0x8] sm:$0xff] %vm172, %v1752
      %1790 = vst.msk [vmem:[#allocation2 + $0x10] sm:$0xff] %vm172, %v1753
      %1791 = vst.msk [vmem:[#allocation2 + $0x18] sm:$0xff] %vm172, %v1754
      %1792 = vst.msk [vmem:[#allocation2 + $0x20] sm:$0xff] %vm172, %v1755
      %1793 = vst.msk [vmem:[#allocation2 + $0x28] sm:$0xff] %vm172, %v1756
      %1794 = vst.msk [vmem:[#allocation2 + $0x30] sm:$0xff] %vm172, %v1757
      %1795 = vst.msk [vmem:[#allocation2 + $0x38] sm:$0xff] %vm172, %v1758
      %1796 = vst.msk [vmem:[#allocation2 + $0x40] sm:$0xff] %vm172, %v1759
      %1797 = vst.msk [vmem:[#allocation2 + $0x48] sm:$0xff] %vm172, %v1760
      %1798 = vst.msk [vmem:[#allocation2 + $0x50] sm:$0xff] %vm172, %v1761
      %1799 = vst.msk [vmem:[#allocation2 + $0x58] sm:$0xff] %vm172, %v1762
      %1800 = vst.msk [vmem:[#allocation2 + $0x60] sm:$0xff] %vm172, %v1763
      %1801 = vst.msk [vmem:[#allocation2 + $0x68] sm:$0xff] %vm172, %v1764
      %1802 = vst.msk [vmem:[#allocation2 + $0x70] sm:$0xff] %vm172, %v1765
      %1803 = vst.msk [vmem:[#allocation2 + $0x78] sm:$0xff] %vm172, %v1766
      %1804 = vst.msk [vmem:[#allocation2 + $0x80] sm:$0xff] %vm172, %v1767
      %1805 = vst.msk [vmem:[#allocation2 + $0x88] sm:$0xff] %vm172, %v1768
      %1806 = vst.msk [vmem:[#allocation2 + $0x90] sm:$0xff] %vm172, %v1769
      %1807 = vst.msk [vmem:[#allocation2 + $0x98] sm:$0xff] %vm172, %v1770
      %1808 = vst.msk [vmem:[#allocation2 + $0xa0] sm:$0xff] %vm172, %v1771
      %1809 = vst.msk [vmem:[#allocation2 + $0xa8] sm:$0xff] %vm172, %v1772
      %1810 = vst.msk [vmem:[#allocation2 + $0xb0] sm:$0xff] %vm172, %v1773
      %1811 = vst.msk [vmem:[#allocation2 + $0xb8] sm:$0xff] %vm172, %v1774
      %1812 = vst.msk [vmem:[#allocation2 + $0xc0] sm:$0xff] %vm172, %v1775
      %1813 = vst.msk [vmem:[#allocation2 + $0xc8] sm:$0xff] %vm172, %v1776
      %1814 = vst.msk [vmem:[#allocation2 + $0xd0] sm:$0xff] %vm172, %v1777
      %1815 = vst.msk [vmem:[#allocation2 + $0xd8] sm:$0xff] %vm172, %v1778
      %1816 = vst.msk [vmem:[#allocation2 + $0xe0] sm:$0xff] %vm172, %v1779
      %1817 = vst.msk [vmem:[#allocation2 + $0xe8] sm:$0xff] %vm172, %v1780
      %1818 = vst.msk [vmem:[#allocation2 + $0xf0] sm:$0xff] %vm172, %v1781
      %1819 = vst.msk [vmem:[#allocation2 + $0xf8] sm:$0xff] %vm172, %v1782
      %1820 = vst.msk [vmem:[#allocation2 + $0x100] sm:$0xff] %vm172, %v1783
      %1821 = vst.msk [vmem:[#allocation2 + $0x108] sm:$0xff] %vm172, %v1784
      %1822 = vst.msk [vmem:[#allocation2 + $0x110] sm:$0xff] %vm172, %v1785
      %1823 = vst.msk [vmem:[#allocation2 + $0x118] sm:$0xff] %vm172, %v1786
      %1824 = vst.msk [vmem:[#allocation2 + $0x120] sm:$0x1] %vm209, %v1787
      %s1825 = scalar_lea.vmem %s165, 312
      %v1826 = vld [vmem:[%s1825] sm:$0xf]
      %v1827 = vld [vmem:[%s1825 + $0x4] sm:$0xf]
      %v1828 = vld [vmem:[%s1825 + $0x8] sm:$0xf]
      %v1829 = vld [vmem:[%s1825 + $0xc] sm:$0xf]
      %v1830 = vld [vmem:[%s1825 + $0x10] sm:$0xf]
      %v1831 = vld [vmem:[%s1825 + $0x14] sm:$0xf]
      %v1832 = vld [vmem:[%s1825 + $0x18] sm:$0xf]
      %v1833 = vld [vmem:[%s1825 + $0x1c] sm:$0xf]
      %v1834 = vld [vmem:[%s1825 + $0x20] sm:$0xf]
      %v1835 = vld [vmem:[%s1825 + $0x24] sm:$0xf]
      %v1836 = vld [vmem:[%s1825 + $0x28] sm:$0xf]
      %v1837 = vld [vmem:[%s1825 + $0x2c] sm:$0xf]
      %v1838 = vld [vmem:[%s1825 + $0x30] sm:$0xf]
      %v1839 = vld [vmem:[%s1825 + $0x34] sm:$0xf]
      %v1840 = vld [vmem:[%s1825 + $0x38] sm:$0xf]
      %v1841 = vld [vmem:[%s1825 + $0x3c] sm:$0xf]
      %v1842 = vld [vmem:[%s1825 + $0x40] sm:$0xf]
      %v1843 = vld [vmem:[%s1825 + $0x44] sm:$0xf]
      %v1844 = vld [vmem:[%s1825 + $0x48] sm:$0xf]
      %v1845 = vld [vmem:[%s1825 + $0x4c] sm:$0xf]
      %v1846 = vld [vmem:[%s1825 + $0x50] sm:$0xf]
      %v1847 = vld [vmem:[%s1825 + $0x54] sm:$0xf]
      %v1848 = vld [vmem:[%s1825 + $0x58] sm:$0xf]
      %v1849 = vld [vmem:[%s1825 + $0x5c] sm:$0xf]
      %v1850 = vld [vmem:[%s1825 + $0x60] sm:$0xf]
      %v1851 = vld [vmem:[%s1825 + $0x64] sm:$0xf]
      %v1852 = vld [vmem:[%s1825 + $0x68] sm:$0xf]
      %v1853 = vld [vmem:[%s1825 + $0x6c] sm:$0xf]
      %v1854 = vld [vmem:[%s1825 + $0x70] sm:$0xf]
      %v1855 = vld [vmem:[%s1825 + $0x74] sm:$0xf]
      %v1856 = vld [vmem:[%s1825 + $0x78] sm:$0xf]
      %v1857 = vld [vmem:[%s1825 + $0x7c] sm:$0xf]
      %v1858 = vld [vmem:[%s1825 + $0x80] sm:$0xf]
      %v1859 = vld [vmem:[%s1825 + $0x84] sm:$0xf]
      %v1860 = vld [vmem:[%s1825 + $0x88] sm:$0xf]
      %v1861 = vld [vmem:[%s1825 + $0x8c] sm:$0xf]
      %v1862 = vld [vmem:[%s1825 + $0x90] sm:$0x1]
      %v1863 = vld [vmem:[#allocation2] sm:$0xff]
      %v1864 = vld [vmem:[#allocation2 + $0x8] sm:$0xff]
      %v1865 = vld [vmem:[#allocation2 + $0x10] sm:$0xff]
      %v1866 = vld [vmem:[#allocation2 + $0x18] sm:$0xff]
      %v1867 = vld [vmem:[#allocation2 + $0x20] sm:$0xff]
      %v1868 = vld [vmem:[#allocation2 + $0x28] sm:$0xff]
      %v1869 = vld [vmem:[#allocation2 + $0x30] sm:$0xff]
      %v1870 = vld [vmem:[#allocation2 + $0x38] sm:$0xff]
      %v1871 = vld [vmem:[#allocation2 + $0x40] sm:$0xff]
      %v1872 = vld [vmem:[#allocation2 + $0x48] sm:$0xff]
      %v1873 = vld [vmem:[#allocation2 + $0x50] sm:$0xff]
      %v1874 = vld [vmem:[#allocation2 + $0x58] sm:$0xff]
      %v1875 = vld [vmem:[#allocation2 + $0x60] sm:$0xff]
      %v1876 = vld [vmem:[#allocation2 + $0x68] sm:$0xff]
      %v1877 = vld [vmem:[#allocation2 + $0x70] sm:$0xff]
      %v1878 = vld [vmem:[#allocation2 + $0x78] sm:$0xff]
      %v1879 = vld [vmem:[#allocation2 + $0x80] sm:$0xff]
      %v1880 = vld [vmem:[#allocation2 + $0x88] sm:$0xff]
      %v1881 = vld [vmem:[#allocation2 + $0x90] sm:$0xff]
      %v1882 = vld [vmem:[#allocation2 + $0x98] sm:$0xff]
      %v1883 = vld [vmem:[#allocation2 + $0xa0] sm:$0xff]
      %v1884 = vld [vmem:[#allocation2 + $0xa8] sm:$0xff]
      %v1885 = vld [vmem:[#allocation2 + $0xb0] sm:$0xff]
      %v1886 = vld [vmem:[#allocation2 + $0xb8] sm:$0xff]
      %v1887 = vld [vmem:[#allocation2 + $0xc0] sm:$0xff]
      %v1888 = vld [vmem:[#allocation2 + $0xc8] sm:$0xff]
      %v1889 = vld [vmem:[#allocation2 + $0xd0] sm:$0xff]
      %v1890 = vld [vmem:[#allocation2 + $0xd8] sm:$0xff]
      %v1891 = vld [vmem:[#allocation2 + $0xe0] sm:$0xff]
      %v1892 = vld [vmem:[#allocation2 + $0xe8] sm:$0xff]
      %v1893 = vld [vmem:[#allocation2 + $0xf0] sm:$0xff]
      %v1894 = vld [vmem:[#allocation2 + $0xf8] sm:$0xff]
      %v1895 = vld [vmem:[#allocation2 + $0x100] sm:$0xff]
      %v1896 = vld [vmem:[#allocation2 + $0x108] sm:$0xff]
      %v1897 = vld [vmem:[#allocation2 + $0x110] sm:$0xff]
      %v1898 = vld [vmem:[#allocation2 + $0x118] sm:$0xff]
      %v1899 = vld [vmem:[#allocation2 + $0x120] sm:$0x1]
      %s1900 = scalar_lea.vmem %s1, 12
      %v1901 = vld [vmem:[%s1900] sm:$0xf]
      %v1939 = vunpack.c.l.b16 %v1826
      %v1940 = vunpack.c.l.b16 %v1827
      %v1941 = vunpack.c.l.b16 %v1828
      %v1942 = vunpack.c.l.b16 %v1829
      %v1943 = vunpack.c.l.b16 %v1830
      %v1944 = vunpack.c.l.b16 %v1831
      %v1945 = vunpack.c.l.b16 %v1832
      %v1946 = vunpack.c.l.b16 %v1833
      %v1947 = vunpack.c.l.b16 %v1834
      %v1948 = vunpack.c.l.b16 %v1835
      %v1949 = vunpack.c.l.b16 %v1836
      %v1950 = vunpack.c.l.b16 %v1837
      %v1951 = vunpack.c.l.b16 %v1838
      %v1952 = vunpack.c.l.b16 %v1839
      %v1953 = vunpack.c.l.b16 %v1840
      %v1954 = vunpack.c.l.b16 %v1841
      %v1955 = vunpack.c.l.b16 %v1842
      %v1956 = vunpack.c.l.b16 %v1843
      %v1957 = vunpack.c.l.b16 %v1844
      %v1958 = vunpack.c.l.b16 %v1845
      %v1959 = vunpack.c.l.b16 %v1846
      %v1960 = vunpack.c.l.b16 %v1847
      %v1961 = vunpack.c.l.b16 %v1848
      %v1962 = vunpack.c.l.b16 %v1849
      %v1963 = vunpack.c.l.b16 %v1850
      %v1964 = vunpack.c.l.b16 %v1851
      %v1965 = vunpack.c.l.b16 %v1852
      %v1966 = vunpack.c.l.b16 %v1853
      %v1967 = vunpack.c.l.b16 %v1854
      %v1968 = vunpack.c.l.b16 %v1855
      %v1969 = vunpack.c.l.b16 %v1856
      %v1970 = vunpack.c.l.b16 %v1857
      %v1971 = vunpack.c.l.b16 %v1858
      %v1972 = vunpack.c.l.b16 %v1859
      %v1973 = vunpack.c.l.b16 %v1860
      %v1974 = vunpack.c.l.b16 %v1861
      %v1975 = vunpack.c.l.b16 %v1862
      %v1976 = vpack.c.b16 %v1940, %v1939
      %v1977 = vpack.c.b16 %v1942, %v1941
      %v1978 = vpack.c.b16 %v1944, %v1943
      %v1979 = vpack.c.b16 %v1946, %v1945
      %v1980 = vpack.c.b16 %v1948, %v1947
      %v1981 = vpack.c.b16 %v1950, %v1949
      %v1982 = vpack.c.b16 %v1952, %v1951
      %v1983 = vpack.c.b16 %v1954, %v1953
      %v1984 = vpack.c.b16 %v1956, %v1955
      %v1985 = vpack.c.b16 %v1958, %v1957
      %v1986 = vpack.c.b16 %v1960, %v1959
      %v1987 = vpack.c.b16 %v1962, %v1961
      %v1988 = vpack.c.b16 %v1964, %v1963
      %v1989 = vpack.c.b16 %v1966, %v1965
      %v1990 = vpack.c.b16 %v1968, %v1967
      %v1991 = vpack.c.b16 %v1970, %v1969
      %v1992 = vpack.c.b16 %v1972, %v1971
      %v1993 = vpack.c.b16 %v1974, %v1973
      %v1994 = vpack.c.b16 %v1975, %v1975
      %v1996 = vsel %vm379, %v1976, 0
      %v1999 = vsel %vm379, %v1977, 0
      %v2002 = vsel %vm379, %v1978, 0
      %v2005 = vsel %vm379, %v1979, 0
      %v2008 = vsel %vm379, %v1980, 0
      %v2011 = vsel %vm379, %v1981, 0
      %v2014 = vsel %vm379, %v1982, 0
      %v2017 = vsel %vm379, %v1983, 0
      %v2020 = vsel %vm379, %v1984, 0
      %v2023 = vsel %vm379, %v1985, 0
      %v2026 = vsel %vm379, %v1986, 0
      %v2029 = vsel %vm379, %v1987, 0
      %v2032 = vsel %vm379, %v1988, 0
      %v2035 = vsel %vm379, %v1989, 0
      %v2038 = vsel %vm379, %v1990, 0
      %v2041 = vsel %vm379, %v1991, 0
      %v2044 = vsel %vm379, %v1992, 0
      %v2047 = vsel %vm379, %v1993, 0
      %v2050 = vsel %vm379, %v1994, 0
      %v2053 = vsel %vm437, %v1901, 0
      %2055 = vmatprep.subr.bf16.mxu0 0
      %2056 = vmatpush1.bf16.msra.mxu0 0
      %2057 = vmatprep.subr.bf16.mxu0 0
      %2058 = vmatpush1.bf16.msra.mxu0 0
      %2059 = vmatprep.subr.bf16.mxu0 0
      %2060 = vmatpush1.bf16.msra.mxu0 0
      %2061 = vmatprep.subr.bf16.mxu0 0
      %2062 = vmatpush1.bf16.msra.mxu0 0
      %2063 = vmatprep.subr.bf16.mxu0 0
      %2064 = vmatpush1.bf16.msra.mxu0 0
      %2065 = vmatprep.subr.bf16.mxu0 0
      %2066 = vmatpush1.bf16.msra.mxu0 0
      %2067 = vmatprep.subr.bf16.mxu0 0
      %2068 = vmatpush1.bf16.msra.mxu0 0
      %2069 = vmatprep.subr.bf16.mxu0 0
      %2070 = vmatpush1.bf16.msra.mxu0 %v2053
      %2071 = vmatprep.subr.bf16.mxu0 0
      %2072 = vmatpush2.bf16.msra.mxu0 0
      %2073 = vmatprep.subr.bf16.mxu0 0
      %2074 = vmatpush2.bf16.msra.mxu0 0
      %2075 = vmatprep.subr.bf16.mxu0 0
      %2076 = vmatpush2.bf16.msra.mxu0 0
      %2077 = vmatprep.subr.bf16.mxu0 0
      %2078 = vmatpush2.bf16.msra.mxu0 0
      %2079 = vmatprep.subr.bf16.mxu0 0
      %2080 = vmatpush2.bf16.msra.mxu0 0
      %2081 = vmatprep.subr.bf16.mxu0 0
      %2082 = vmatpush2.bf16.msra.mxu0 0
      %2083 = vmatprep.subr.bf16.mxu0 0
      %2084 = vmatpush2.bf16.msra.mxu0 0
      %2085 = vmatprep.subr.bf16.mxu0 0
      %2086 = vmatpush2.bf16.msra.mxu0 0
      %2087 = vmatprep.mubr.bf16.mxu0 0
      %2088 = vmatmul.mubr.bf16.gmra.mxu0 %v1996
      %v2089 = vpop.f32.mrf.mxu0
      %v2090 = vadd.f32 0.0, %v2089
      %v2091 = vpop.f32.mrf.mxu0
      %v2092 = vpop.f32.mrf.mxu0
      %v2093 = vadd.f32 0.0, %v2092
      %v2094 = vpop.f32.mrf.mxu0
      %2095 = vmatprep.mubr.bf16.mxu0 0
      %2096 = vmatmul.mubr.bf16.gmra.mxu0 %v1999
      %v2097 = vpop.f32.mrf.mxu0
      %v2098 = vadd.f32 0.0, %v2097
      %v2099 = vpop.f32.mrf.mxu0
      %v2100 = vpop.f32.mrf.mxu0
      %v2101 = vadd.f32 0.0, %v2100
      %v2102 = vpop.f32.mrf.mxu0
      %2103 = vmatprep.mubr.bf16.mxu0 0
      %2104 = vmatmul.mubr.bf16.gmra.mxu0 %v2002
      %v2105 = vpop.f32.mrf.mxu0
      %v2106 = vadd.f32 0.0, %v2105
      %v2107 = vpop.f32.mrf.mxu0
      %v2108 = vpop.f32.mrf.mxu0
      %v2109 = vadd.f32 0.0, %v2108
      %v2110 = vpop.f32.mrf.mxu0
      %2111 = vmatprep.mubr.bf16.mxu0 0
      %2112 = vmatmul.mubr.bf16.gmra.mxu0 %v2005
      %v2113 = vpop.f32.mrf.mxu0
      %v2114 = vadd.f32 0.0, %v2113
      %v2115 = vpop.f32.mrf.mxu0
      %v2116 = vpop.f32.mrf.mxu0
      %v2117 = vadd.f32 0.0, %v2116
      %v2118 = vpop.f32.mrf.mxu0
      %2119 = vmatprep.mubr.bf16.mxu0 0
      %2120 = vmatmul.mubr.bf16.gmra.mxu0 %v2008
      %v2121 = vpop.f32.mrf.mxu0
      %v2122 = vadd.f32 0.0, %v2121
      %v2123 = vpop.f32.mrf.mxu0
      %v2124 = vpop.f32.mrf.mxu0
      %v2125 = vadd.f32 0.0, %v2124
      %v2126 = vpop.f32.mrf.mxu0
      %2127 = vmatprep.mubr.bf16.mxu0 0
      %2128 = vmatmul.mubr.bf16.gmra.mxu0 %v2011
      %v2129 = vpop.f32.mrf.mxu0
      %v2130 = vadd.f32 0.0, %v2129
      %v2131 = vpop.f32.mrf.mxu0
      %v2132 = vpop.f32.mrf.mxu0
      %v2133 = vadd.f32 0.0, %v2132
      %v2134 = vpop.f32.mrf.mxu0
      %2135 = vmatprep.mubr.bf16.mxu0 0
      %2136 = vmatmul.mubr.bf16.gmra.mxu0 %v2014
      %v2137 = vpop.f32.mrf.mxu0
      %v2138 = vadd.f32 0.0, %v2137
      %v2139 = vpop.f32.mrf.mxu0
      %v2140 = vpop.f32.mrf.mxu0
      %v2141 = vadd.f32 0.0, %v2140
      %v2142 = vpop.f32.mrf.mxu0
      %2143 = vmatprep.mubr.bf16.mxu0 0
      %2144 = vmatmul.mubr.bf16.gmra.mxu0 %v2017
      %v2145 = vpop.f32.mrf.mxu0
      %v2146 = vadd.f32 0.0, %v2145
      %v2147 = vpop.f32.mrf.mxu0
      %v2148 = vpop.f32.mrf.mxu0
      %v2149 = vadd.f32 0.0, %v2148
      %v2150 = vpop.f32.mrf.mxu0
      %2151 = vmatprep.mubr.bf16.mxu0 0
      %2152 = vmatmul.mubr.bf16.gmra.mxu0 %v2020
      %v2153 = vpop.f32.mrf.mxu0
      %v2154 = vadd.f32 0.0, %v2153
      %v2155 = vpop.f32.mrf.mxu0
      %v2156 = vpop.f32.mrf.mxu0
      %v2157 = vadd.f32 0.0, %v2156
      %v2158 = vpop.f32.mrf.mxu0
      %2159 = vmatprep.mubr.bf16.mxu0 0
      %2160 = vmatmul.mubr.bf16.gmra.mxu0 %v2023
      %v2161 = vpop.f32.mrf.mxu0
      %v2162 = vadd.f32 0.0, %v2161
      %v2163 = vpop.f32.mrf.mxu0
      %v2164 = vpop.f32.mrf.mxu0
      %v2165 = vadd.f32 0.0, %v2164
      %v2166 = vpop.f32.mrf.mxu0
      %2167 = vmatprep.mubr.bf16.mxu0 0
      %2168 = vmatmul.mubr.bf16.gmra.mxu0 %v2026
      %v2169 = vpop.f32.mrf.mxu0
      %v2170 = vadd.f32 0.0, %v2169
      %v2171 = vpop.f32.mrf.mxu0
      %v2172 = vpop.f32.mrf.mxu0
      %v2173 = vadd.f32 0.0, %v2172
      %v2174 = vpop.f32.mrf.mxu0
      %2175 = vmatprep.mubr.bf16.mxu0 0
      %2176 = vmatmul.mubr.bf16.gmra.mxu0 %v2029
      %v2177 = vpop.f32.mrf.mxu0
      %v2178 = vadd.f32 0.0, %v2177
      %v2179 = vpop.f32.mrf.mxu0
      %v2180 = vpop.f32.mrf.mxu0
      %v2181 = vadd.f32 0.0, %v2180
      %v2182 = vpop.f32.mrf.mxu0
      %2183 = vmatprep.mubr.bf16.mxu0 0
      %2184 = vmatmul.mubr.bf16.gmra.mxu0 %v2032
      %v2185 = vpop.f32.mrf.mxu0
      %v2186 = vadd.f32 0.0, %v2185
      %v2187 = vpop.f32.mrf.mxu0
      %v2188 = vpop.f32.mrf.mxu0
      %v2189 = vadd.f32 0.0, %v2188
      %v2190 = vpop.f32.mrf.mxu0
      %2191 = vmatprep.mubr.bf16.mxu0 0
      %2192 = vmatmul.mubr.bf16.gmra.mxu0 %v2035
      %v2193 = vpop.f32.mrf.mxu0
      %v2194 = vadd.f32 0.0, %v2193
      %v2195 = vpop.f32.mrf.mxu0
      %v2196 = vpop.f32.mrf.mxu0
      %v2197 = vadd.f32 0.0, %v2196
      %v2198 = vpop.f32.mrf.mxu0
      %2199 = vmatprep.mubr.bf16.mxu0 0
      %2200 = vmatmul.mubr.bf16.gmra.mxu0 %v2038
      %v2201 = vpop.f32.mrf.mxu0
      %v2202 = vadd.f32 0.0, %v2201
      %v2203 = vpop.f32.mrf.mxu0
      %v2204 = vpop.f32.mrf.mxu0
      %v2205 = vadd.f32 0.0, %v2204
      %v2206 = vpop.f32.mrf.mxu0
      %2207 = vmatprep.mubr.bf16.mxu0 0
      %2208 = vmatmul.mubr.bf16.gmra.mxu0 %v2041
      %v2209 = vpop.f32.mrf.mxu0
      %v2210 = vadd.f32 0.0, %v2209
      %v2211 = vpop.f32.mrf.mxu0
      %v2212 = vpop.f32.mrf.mxu0
      %v2213 = vadd.f32 0.0, %v2212
      %v2214 = vpop.f32.mrf.mxu0
      %2215 = vmatprep.mubr.bf16.mxu0 0
      %2216 = vmatmul.mubr.bf16.gmra.mxu0 %v2044
      %v2217 = vpop.f32.mrf.mxu0
      %v2218 = vadd.f32 0.0, %v2217
      %v2219 = vpop.f32.mrf.mxu0
      %v2220 = vpop.f32.mrf.mxu0
      %v2221 = vadd.f32 0.0, %v2220
      %v2222 = vpop.f32.mrf.mxu0
      %2223 = vmatprep.mubr.bf16.mxu0 0
      %2224 = vmatmul.mubr.bf16.gmra.mxu0 %v2047
      %v2225 = vpop.f32.mrf.mxu0
      %v2226 = vadd.f32 0.0, %v2225
      %v2227 = vpop.f32.mrf.mxu0
      %v2228 = vpop.f32.mrf.mxu0
      %v2229 = vadd.f32 0.0, %v2228
      %v2230 = vpop.f32.mrf.mxu0
      %2231 = vmatprep.mubr.bf16.mxu0 0
      %2232 = vmatmul.mubr.bf16.gmra.mxu0 %v2050
      %v2233 = vpop.f32.mrf.mxu0
      %v2234 = vadd.f32 0.0, %v2233
      %v2235 = vpop.f32.mrf.mxu0
      %v2236 = vpop.f32.mrf.mxu0
      %v2237 = vpop.f32.mrf.mxu0
      %2238 = vdwg.mxu0
      %v2239 = vadd.f32 %v1863, %v2090
      %v2240 = vadd.f32 %v1864, %v2093
      %v2241 = vadd.f32 %v1865, %v2098
      %v2242 = vadd.f32 %v1866, %v2101
      %v2243 = vadd.f32 %v1867, %v2106
      %v2244 = vadd.f32 %v1868, %v2109
      %v2245 = vadd.f32 %v1869, %v2114
      %v2246 = vadd.f32 %v1870, %v2117
      %v2247 = vadd.f32 %v1871, %v2122
      %v2248 = vadd.f32 %v1872, %v2125
      %v2249 = vadd.f32 %v1873, %v2130
      %v2250 = vadd.f32 %v1874, %v2133
      %v2251 = vadd.f32 %v1875, %v2138
      %v2252 = vadd.f32 %v1876, %v2141
      %v2253 = vadd.f32 %v1877, %v2146
      %v2254 = vadd.f32 %v1878, %v2149
      %v2255 = vadd.f32 %v1879, %v2154
      %v2256 = vadd.f32 %v1880, %v2157
      %v2257 = vadd.f32 %v1881, %v2162
      %v2258 = vadd.f32 %v1882, %v2165
      %v2259 = vadd.f32 %v1883, %v2170
      %v2260 = vadd.f32 %v1884, %v2173
      %v2261 = vadd.f32 %v1885, %v2178
      %v2262 = vadd.f32 %v1886, %v2181
      %v2263 = vadd.f32 %v1887, %v2186
      %v2264 = vadd.f32 %v1888, %v2189
      %v2265 = vadd.f32 %v1889, %v2194
      %v2266 = vadd.f32 %v1890, %v2197
      %v2267 = vadd.f32 %v1891, %v2202
      %v2268 = vadd.f32 %v1892, %v2205
      %v2269 = vadd.f32 %v1893, %v2210
      %v2270 = vadd.f32 %v1894, %v2213
      %v2271 = vadd.f32 %v1895, %v2218
      %v2272 = vadd.f32 %v1896, %v2221
      %v2273 = vadd.f32 %v1897, %v2226
      %v2274 = vadd.f32 %v1898, %v2229
      %v2275 = vadd.f32 %v1899, %v2234
      %2276 = vst.msk [vmem:[#allocation2] sm:$0xff] %vm172, %v2239
      %2277 = vst.msk [vmem:[#allocation2 + $0x8] sm:$0xff] %vm172, %v2240
      %2278 = vst.msk [vmem:[#allocation2 + $0x10] sm:$0xff] %vm172, %v2241
      %2279 = vst.msk [vmem:[#allocation2 + $0x18] sm:$0xff] %vm172, %v2242
      %2280 = vst.msk [vmem:[#allocation2 + $0x20] sm:$0xff] %vm172, %v2243
      %2281 = vst.msk [vmem:[#allocation2 + $0x28] sm:$0xff] %vm172, %v2244
      %2282 = vst.msk [vmem:[#allocation2 + $0x30] sm:$0xff] %vm172, %v2245
      %2283 = vst.msk [vmem:[#allocation2 + $0x38] sm:$0xff] %vm172, %v2246
      %2284 = vst.msk [vmem:[#allocation2 + $0x40] sm:$0xff] %vm172, %v2247
      %2285 = vst.msk [vmem:[#allocation2 + $0x48] sm:$0xff] %vm172, %v2248
      %2286 = vst.msk [vmem:[#allocation2 + $0x50] sm:$0xff] %vm172, %v2249
      %2287 = vst.msk [vmem:[#allocation2 + $0x58] sm:$0xff] %vm172, %v2250
      %2288 = vst.msk [vmem:[#allocation2 + $0x60] sm:$0xff] %vm172, %v2251
      %2289 = vst.msk [vmem:[#allocation2 + $0x68] sm:$0xff] %vm172, %v2252
      %2290 = vst.msk [vmem:[#allocation2 + $0x70] sm:$0xff] %vm172, %v2253
      %2291 = vst.msk [vmem:[#allocation2 + $0x78] sm:$0xff] %vm172, %v2254
      %2292 = vst.msk [vmem:[#allocation2 + $0x80] sm:$0xff] %vm172, %v2255
      %2293 = vst.msk [vmem:[#allocation2 + $0x88] sm:$0xff] %vm172, %v2256
      %2294 = vst.msk [vmem:[#allocation2 + $0x90] sm:$0xff] %vm172, %v2257
      %2295 = vst.msk [vmem:[#allocation2 + $0x98] sm:$0xff] %vm172, %v2258
      %2296 = vst.msk [vmem:[#allocation2 + $0xa0] sm:$0xff] %vm172, %v2259
      %2297 = vst.msk [vmem:[#allocation2 + $0xa8] sm:$0xff] %vm172, %v2260
      %2298 = vst.msk [vmem:[#allocation2 + $0xb0] sm:$0xff] %vm172, %v2261
      %2299 = vst.msk [vmem:[#allocation2 + $0xb8] sm:$0xff] %vm172, %v2262
      %2300 = vst.msk [vmem:[#allocation2 + $0xc0] sm:$0xff] %vm172, %v2263
      %2301 = vst.msk [vmem:[#allocation2 + $0xc8] sm:$0xff] %vm172, %v2264
      %2302 = vst.msk [vmem:[#allocation2 + $0xd0] sm:$0xff] %vm172, %v2265
      %2303 = vst.msk [vmem:[#allocation2 + $0xd8] sm:$0xff] %vm172, %v2266
      %2304 = vst.msk [vmem:[#allocation2 + $0xe0] sm:$0xff] %vm172, %v2267
      %2305 = vst.msk [vmem:[#allocation2 + $0xe8] sm:$0xff] %vm172, %v2268
      %2306 = vst.msk [vmem:[#allocation2 + $0xf0] sm:$0xff] %vm172, %v2269
      %2307 = vst.msk [vmem:[#allocation2 + $0xf8] sm:$0xff] %vm172, %v2270
      %2308 = vst.msk [vmem:[#allocation2 + $0x100] sm:$0xff] %vm172, %v2271
      %2309 = vst.msk [vmem:[#allocation2 + $0x108] sm:$0xff] %vm172, %v2272
      %2310 = vst.msk [vmem:[#allocation2 + $0x110] sm:$0xff] %vm172, %v2273
      %2311 = vst.msk [vmem:[#allocation2 + $0x118] sm:$0xff] %vm172, %v2274
      %2312 = vst.msk [vmem:[#allocation2 + $0x120] sm:$0x1] %vm209, %v2275
      %s2313 = scalar_lea.vmem %s165, 468
      %v2314 = vld [vmem:[%s2313] sm:$0xf]
      %v2315 = vld [vmem:[%s2313 + $0x4] sm:$0xf]
      %v2316 = vld [vmem:[%s2313 + $0x8] sm:$0xf]
      %v2317 = vld [vmem:[%s2313 + $0xc] sm:$0xf]
      %v2318 = vld [vmem:[%s2313 + $0x10] sm:$0xf]
      %v2319 = vld [vmem:[%s2313 + $0x14] sm:$0xf]
      %v2320 = vld [vmem:[%s2313 + $0x18] sm:$0xf]
      %v2321 = vld [vmem:[%s2313 + $0x1c] sm:$0xf]
      %v2322 = vld [vmem:[%s2313 + $0x20] sm:$0xf]
      %v2323 = vld [vmem:[%s2313 + $0x24] sm:$0xf]
      %v2324 = vld [vmem:[%s2313 + $0x28] sm:$0xf]
      %v2325 = vld [vmem:[%s2313 + $0x2c] sm:$0xf]
      %v2326 = vld [vmem:[%s2313 + $0x30] sm:$0xf]
      %v2327 = vld [vmem:[%s2313 + $0x34] sm:$0xf]
      %v2328 = vld [vmem:[%s2313 + $0x38] sm:$0xf]
      %v2329 = vld [vmem:[%s2313 + $0x3c] sm:$0xf]
      %v2330 = vld [vmem:[%s2313 + $0x40] sm:$0xf]
      %v2331 = vld [vmem:[%s2313 + $0x44] sm:$0xf]
      %v2332 = vld [vmem:[%s2313 + $0x48] sm:$0xf]
      %v2333 = vld [vmem:[%s2313 + $0x4c] sm:$0xf]
      %v2334 = vld [vmem:[%s2313 + $0x50] sm:$0xf]
      %v2335 = vld [vmem:[%s2313 + $0x54] sm:$0xf]
      %v2336 = vld [vmem:[%s2313 + $0x58] sm:$0xf]
      %v2337 = vld [vmem:[%s2313 + $0x5c] sm:$0xf]
      %v2338 = vld [vmem:[%s2313 + $0x60] sm:$0xf]
      %v2339 = vld [vmem:[%s2313 + $0x64] sm:$0xf]
      %v2340 = vld [vmem:[%s2313 + $0x68] sm:$0xf]
      %v2341 = vld [vmem:[%s2313 + $0x6c] sm:$0xf]
      %v2342 = vld [vmem:[%s2313 + $0x70] sm:$0xf]
      %v2343 = vld [vmem:[%s2313 + $0x74] sm:$0xf]
      %v2344 = vld [vmem:[%s2313 + $0x78] sm:$0xf]
      %v2345 = vld [vmem:[%s2313 + $0x7c] sm:$0xf]
      %v2346 = vld [vmem:[%s2313 + $0x80] sm:$0xf]
      %v2347 = vld [vmem:[%s2313 + $0x84] sm:$0xf]
      %v2348 = vld [vmem:[%s2313 + $0x88] sm:$0xf]
      %v2349 = vld [vmem:[%s2313 + $0x8c] sm:$0xf]
      %v2350 = vld [vmem:[%s2313 + $0x90] sm:$0x1]
      %v2351 = vld [vmem:[#allocation2] sm:$0xff]
      %v2352 = vld [vmem:[#allocation2 + $0x8] sm:$0xff]
      %v2353 = vld [vmem:[#allocation2 + $0x10] sm:$0xff]
      %v2354 = vld [vmem:[#allocation2 + $0x18] sm:$0xff]
      %v2355 = vld [vmem:[#allocation2 + $0x20] sm:$0xff]
      %v2356 = vld [vmem:[#allocation2 + $0x28] sm:$0xff]
      %v2357 = vld [vmem:[#allocation2 + $0x30] sm:$0xff]
      %v2358 = vld [vmem:[#allocation2 + $0x38] sm:$0xff]
      %v2359 = vld [vmem:[#allocation2 + $0x40] sm:$0xff]
      %v2360 = vld [vmem:[#allocation2 + $0x48] sm:$0xff]
      %v2361 = vld [vmem:[#allocation2 + $0x50] sm:$0xff]
      %v2362 = vld [vmem:[#allocation2 + $0x58] sm:$0xff]
      %v2363 = vld [vmem:[#allocation2 + $0x60] sm:$0xff]
      %v2364 = vld [vmem:[#allocation2 + $0x68] sm:$0xff]
      %v2365 = vld [vmem:[#allocation2 + $0x70] sm:$0xff]
      %v2366 = vld [vmem:[#allocation2 + $0x78] sm:$0xff]
      %v2367 = vld [vmem:[#allocation2 + $0x80] sm:$0xff]
      %v2368 = vld [vmem:[#allocation2 + $0x88] sm:$0xff]
      %v2369 = vld [vmem:[#allocation2 + $0x90] sm:$0xff]
      %v2370 = vld [vmem:[#allocation2 + $0x98] sm:$0xff]
      %v2371 = vld [vmem:[#allocation2 + $0xa0] sm:$0xff]
      %v2372 = vld [vmem:[#allocation2 + $0xa8] sm:$0xff]
      %v2373 = vld [vmem:[#allocation2 + $0xb0] sm:$0xff]
      %v2374 = vld [vmem:[#allocation2 + $0xb8] sm:$0xff]
      %v2375 = vld [vmem:[#allocation2 + $0xc0] sm:$0xff]
      %v2376 = vld [vmem:[#allocation2 + $0xc8] sm:$0xff]
      %v2377 = vld [vmem:[#allocation2 + $0xd0] sm:$0xff]
      %v2378 = vld [vmem:[#allocation2 + $0xd8] sm:$0xff]
      %v2379 = vld [vmem:[#allocation2 + $0xe0] sm:$0xff]
      %v2380 = vld [vmem:[#allocation2 + $0xe8] sm:$0xff]
      %v2381 = vld [vmem:[#allocation2 + $0xf0] sm:$0xff]
      %v2382 = vld [vmem:[#allocation2 + $0xf8] sm:$0xff]
      %v2383 = vld [vmem:[#allocation2 + $0x100] sm:$0xff]
      %v2384 = vld [vmem:[#allocation2 + $0x108] sm:$0xff]
      %v2385 = vld [vmem:[#allocation2 + $0x110] sm:$0xff]
      %v2386 = vld [vmem:[#allocation2 + $0x118] sm:$0xff]
      %v2387 = vld [vmem:[#allocation2 + $0x120] sm:$0x1]
      %s2388 = scalar_lea.vmem %s1, 16
      %v2389 = vld [vmem:[%s2388] sm:$0xf]
      %v2427 = vunpack.c.l.b16 %v2314
      %v2428 = vunpack.c.l.b16 %v2315
      %v2429 = vunpack.c.l.b16 %v2316
      %v2430 = vunpack.c.l.b16 %v2317
      %v2431 = vunpack.c.l.b16 %v2318
      %v2432 = vunpack.c.l.b16 %v2319
      %v2433 = vunpack.c.l.b16 %v2320
      %v2434 = vunpack.c.l.b16 %v2321
      %v2435 = vunpack.c.l.b16 %v2322
      %v2436 = vunpack.c.l.b16 %v2323
      %v2437 = vunpack.c.l.b16 %v2324
      %v2438 = vunpack.c.l.b16 %v2325
      %v2439 = vunpack.c.l.b16 %v2326
      %v2440 = vunpack.c.l.b16 %v2327
      %v2441 = vunpack.c.l.b16 %v2328
      %v2442 = vunpack.c.l.b16 %v2329
      %v2443 = vunpack.c.l.b16 %v2330
      %v2444 = vunpack.c.l.b16 %v2331
      %v2445 = vunpack.c.l.b16 %v2332
      %v2446 = vunpack.c.l.b16 %v2333
      %v2447 = vunpack.c.l.b16 %v2334
      %v2448 = vunpack.c.l.b16 %v2335
      %v2449 = vunpack.c.l.b16 %v2336
      %v2450 = vunpack.c.l.b16 %v2337
      %v2451 = vunpack.c.l.b16 %v2338
      %v2452 = vunpack.c.l.b16 %v2339
      %v2453 = vunpack.c.l.b16 %v2340
      %v2454 = vunpack.c.l.b16 %v2341
      %v2455 = vunpack.c.l.b16 %v2342
      %v2456 = vunpack.c.l.b16 %v2343
      %v2457 = vunpack.c.l.b16 %v2344
      %v2458 = vunpack.c.l.b16 %v2345
      %v2459 = vunpack.c.l.b16 %v2346
      %v2460 = vunpack.c.l.b16 %v2347
      %v2461 = vunpack.c.l.b16 %v2348
      %v2462 = vunpack.c.l.b16 %v2349
      %v2463 = vunpack.c.l.b16 %v2350
      %v2464 = vpack.c.b16 %v2428, %v2427
      %v2465 = vpack.c.b16 %v2430, %v2429
      %v2466 = vpack.c.b16 %v2432, %v2431
      %v2467 = vpack.c.b16 %v2434, %v2433
      %v2468 = vpack.c.b16 %v2436, %v2435
      %v2469 = vpack.c.b16 %v2438, %v2437
      %v2470 = vpack.c.b16 %v2440, %v2439
      %v2471 = vpack.c.b16 %v2442, %v2441
      %v2472 = vpack.c.b16 %v2444, %v2443
      %v2473 = vpack.c.b16 %v2446, %v2445
      %v2474 = vpack.c.b16 %v2448, %v2447
      %v2475 = vpack.c.b16 %v2450, %v2449
      %v2476 = vpack.c.b16 %v2452, %v2451
      %v2477 = vpack.c.b16 %v2454, %v2453
      %v2478 = vpack.c.b16 %v2456, %v2455
      %v2479 = vpack.c.b16 %v2458, %v2457
      %v2480 = vpack.c.b16 %v2460, %v2459
      %v2481 = vpack.c.b16 %v2462, %v2461
      %v2482 = vpack.c.b16 %v2463, %v2463
      %v2484 = vsel %vm379, %v2464, 0
      %v2487 = vsel %vm379, %v2465, 0
      %v2490 = vsel %vm379, %v2466, 0
      %v2493 = vsel %vm379, %v2467, 0
      %v2496 = vsel %vm379, %v2468, 0
      %v2499 = vsel %vm379, %v2469, 0
      %v2502 = vsel %vm379, %v2470, 0
      %v2505 = vsel %vm379, %v2471, 0
      %v2508 = vsel %vm379, %v2472, 0
      %v2511 = vsel %vm379, %v2473, 0
      %v2514 = vsel %vm379, %v2474, 0
      %v2517 = vsel %vm379, %v2475, 0
      %v2520 = vsel %vm379, %v2476, 0
      %v2523 = vsel %vm379, %v2477, 0
      %v2526 = vsel %vm379, %v2478, 0
      %v2529 = vsel %vm379, %v2479, 0
      %v2532 = vsel %vm379, %v2480, 0
      %v2535 = vsel %vm379, %v2481, 0
      %v2538 = vsel %vm379, %v2482, 0
      %v2541 = vsel %vm437, %v2389, 0
      %2543 = vmatprep.subr.bf16.mxu0 0
      %2544 = vmatpush1.bf16.msra.mxu0 0
      %2545 = vmatprep.subr.bf16.mxu0 0
      %2546 = vmatpush1.bf16.msra.mxu0 0
      %2547 = vmatprep.subr.bf16.mxu0 0
      %2548 = vmatpush1.bf16.msra.mxu0 0
      %2549 = vmatprep.subr.bf16.mxu0 0
      %2550 = vmatpush1.bf16.msra.mxu0 0
      %2551 = vmatprep.subr.bf16.mxu0 0
      %2552 = vmatpush1.bf16.msra.mxu0 0
      %2553 = vmatprep.subr.bf16.mxu0 0
      %2554 = vmatpush1.bf16.msra.mxu0 0
      %2555 = vmatprep.subr.bf16.mxu0 0
      %2556 = vmatpush1.bf16.msra.mxu0 0
      %2557 = vmatprep.subr.bf16.mxu0 0
      %2558 = vmatpush1.bf16.msra.mxu0 %v2541
      %2559 = vmatprep.subr.bf16.mxu0 0
      %2560 = vmatpush2.bf16.msra.mxu0 0
      %2561 = vmatprep.subr.bf16.mxu0 0
      %2562 = vmatpush2.bf16.msra.mxu0 0
      %2563 = vmatprep.subr.bf16.mxu0 0
      %2564 = vmatpush2.bf16.msra.mxu0 0
      %2565 = vmatprep.subr.bf16.mxu0 0
      %2566 = vmatpush2.bf16.msra.mxu0 0
      %2567 = vmatprep.subr.bf16.mxu0 0
      %2568 = vmatpush2.bf16.msra.mxu0 0
      %2569 = vmatprep.subr.bf16.mxu0 0
      %2570 = vmatpush2.bf16.msra.mxu0 0
      %2571 = vmatprep.subr.bf16.mxu0 0
      %2572 = vmatpush2.bf16.msra.mxu0 0
      %2573 = vmatprep.subr.bf16.mxu0 0
      %2574 = vmatpush2.bf16.msra.mxu0 0
      %2575 = vmatprep.mubr.bf16.mxu0 0
      %2576 = vmatmul.mubr.bf16.gmra.mxu0 %v2484
      %v2577 = vpop.f32.mrf.mxu0
      %v2578 = vadd.f32 0.0, %v2577
      %v2579 = vpop.f32.mrf.mxu0
      %v2580 = vpop.f32.mrf.mxu0
      %v2581 = vadd.f32 0.0, %v2580
      %v2582 = vpop.f32.mrf.mxu0
      %2583 = vmatprep.mubr.bf16.mxu0 0
      %2584 = vmatmul.mubr.bf16.gmra.mxu0 %v2487
      %v2585 = vpop.f32.mrf.mxu0
      %v2586 = vadd.f32 0.0, %v2585
      %v2587 = vpop.f32.mrf.mxu0
      %v2588 = vpop.f32.mrf.mxu0
      %v2589 = vadd.f32 0.0, %v2588
      %v2590 = vpop.f32.mrf.mxu0
      %2591 = vmatprep.mubr.bf16.mxu0 0
      %2592 = vmatmul.mubr.bf16.gmra.mxu0 %v2490
      %v2593 = vpop.f32.mrf.mxu0
      %v2594 = vadd.f32 0.0, %v2593
      %v2595 = vpop.f32.mrf.mxu0
      %v2596 = vpop.f32.mrf.mxu0
      %v2597 = vadd.f32 0.0, %v2596
      %v2598 = vpop.f32.mrf.mxu0
      %2599 = vmatprep.mubr.bf16.mxu0 0
      %2600 = vmatmul.mubr.bf16.gmra.mxu0 %v2493
      %v2601 = vpop.f32.mrf.mxu0
      %v2602 = vadd.f32 0.0, %v2601
      %v2603 = vpop.f32.mrf.mxu0
      %v2604 = vpop.f32.mrf.mxu0
      %v2605 = vadd.f32 0.0, %v2604
      %v2606 = vpop.f32.mrf.mxu0
      %2607 = vmatprep.mubr.bf16.mxu0 0
      %2608 = vmatmul.mubr.bf16.gmra.mxu0 %v2496
      %v2609 = vpop.f32.mrf.mxu0
      %v2610 = vadd.f32 0.0, %v2609
      %v2611 = vpop.f32.mrf.mxu0
      %v2612 = vpop.f32.mrf.mxu0
      %v2613 = vadd.f32 0.0, %v2612
      %v2614 = vpop.f32.mrf.mxu0
      %2615 = vmatprep.mubr.bf16.mxu0 0
      %2616 = vmatmul.mubr.bf16.gmra.mxu0 %v2499
      %v2617 = vpop.f32.mrf.mxu0
      %v2618 = vadd.f32 0.0, %v2617
      %v2619 = vpop.f32.mrf.mxu0
      %v2620 = vpop.f32.mrf.mxu0
      %v2621 = vadd.f32 0.0, %v2620
      %v2622 = vpop.f32.mrf.mxu0
      %2623 = vmatprep.mubr.bf16.mxu0 0
      %2624 = vmatmul.mubr.bf16.gmra.mxu0 %v2502
      %v2625 = vpop.f32.mrf.mxu0
      %v2626 = vadd.f32 0.0, %v2625
      %v2627 = vpop.f32.mrf.mxu0
      %v2628 = vpop.f32.mrf.mxu0
      %v2629 = vadd.f32 0.0, %v2628
      %v2630 = vpop.f32.mrf.mxu0
      %2631 = vmatprep.mubr.bf16.mxu0 0
      %2632 = vmatmul.mubr.bf16.gmra.mxu0 %v2505
      %v2633 = vpop.f32.mrf.mxu0
      %v2634 = vadd.f32 0.0, %v2633
      %v2635 = vpop.f32.mrf.mxu0
      %v2636 = vpop.f32.mrf.mxu0
      %v2637 = vadd.f32 0.0, %v2636
      %v2638 = vpop.f32.mrf.mxu0
      %2639 = vmatprep.mubr.bf16.mxu0 0
      %2640 = vmatmul.mubr.bf16.gmra.mxu0 %v2508
      %v2641 = vpop.f32.mrf.mxu0
      %v2642 = vadd.f32 0.0, %v2641
      %v2643 = vpop.f32.mrf.mxu0
      %v2644 = vpop.f32.mrf.mxu0
      %v2645 = vadd.f32 0.0, %v2644
      %v2646 = vpop.f32.mrf.mxu0
      %2647 = vmatprep.mubr.bf16.mxu0 0
      %2648 = vmatmul.mubr.bf16.gmra.mxu0 %v2511
      %v2649 = vpop.f32.mrf.mxu0
      %v2650 = vadd.f32 0.0, %v2649
      %v2651 = vpop.f32.mrf.mxu0
      %v2652 = vpop.f32.mrf.mxu0
      %v2653 = vadd.f32 0.0, %v2652
      %v2654 = vpop.f32.mrf.mxu0
      %2655 = vmatprep.mubr.bf16.mxu0 0
      %2656 = vmatmul.mubr.bf16.gmra.mxu0 %v2514
      %v2657 = vpop.f32.mrf.mxu0
      %v2658 = vadd.f32 0.0, %v2657
      %v2659 = vpop.f32.mrf.mxu0
      %v2660 = vpop.f32.mrf.mxu0
      %v2661 = vadd.f32 0.0, %v2660
      %v2662 = vpop.f32.mrf.mxu0
      %2663 = vmatprep.mubr.bf16.mxu0 0
      %2664 = vmatmul.mubr.bf16.gmra.mxu0 %v2517
      %v2665 = vpop.f32.mrf.mxu0
      %v2666 = vadd.f32 0.0, %v2665
      %v2667 = vpop.f32.mrf.mxu0
      %v2668 = vpop.f32.mrf.mxu0
      %v2669 = vadd.f32 0.0, %v2668
      %v2670 = vpop.f32.mrf.mxu0
      %2671 = vmatprep.mubr.bf16.mxu0 0
      %2672 = vmatmul.mubr.bf16.gmra.mxu0 %v2520
      %v2673 = vpop.f32.mrf.mxu0
      %v2674 = vadd.f32 0.0, %v2673
      %v2675 = vpop.f32.mrf.mxu0
      %v2676 = vpop.f32.mrf.mxu0
      %v2677 = vadd.f32 0.0, %v2676
      %v2678 = vpop.f32.mrf.mxu0
      %2679 = vmatprep.mubr.bf16.mxu0 0
      %2680 = vmatmul.mubr.bf16.gmra.mxu0 %v2523
      %v2681 = vpop.f32.mrf.mxu0
      %v2682 = vadd.f32 0.0, %v2681
      %v2683 = vpop.f32.mrf.mxu0
      %v2684 = vpop.f32.mrf.mxu0
      %v2685 = vadd.f32 0.0, %v2684
      %v2686 = vpop.f32.mrf.mxu0
      %2687 = vmatprep.mubr.bf16.mxu0 0
      %2688 = vmatmul.mubr.bf16.gmra.mxu0 %v2526
      %v2689 = vpop.f32.mrf.mxu0
      %v2690 = vadd.f32 0.0, %v2689
      %v2691 = vpop.f32.mrf.mxu0
      %v2692 = vpop.f32.mrf.mxu0
      %v2693 = vadd.f32 0.0, %v2692
      %v2694 = vpop.f32.mrf.mxu0
      %2695 = vmatprep.mubr.bf16.mxu0 0
      %2696 = vmatmul.mubr.bf16.gmra.mxu0 %v2529
      %v2697 = vpop.f32.mrf.mxu0
      %v2698 = vadd.f32 0.0, %v2697
      %v2699 = vpop.f32.mrf.mxu0
      %v2700 = vpop.f32.mrf.mxu0
      %v2701 = vadd.f32 0.0, %v2700
      %v2702 = vpop.f32.mrf.mxu0
      %2703 = vmatprep.mubr.bf16.mxu0 0
      %2704 = vmatmul.mubr.bf16.gmra.mxu0 %v2532
      %v2705 = vpop.f32.mrf.mxu0
      %v2706 = vadd.f32 0.0, %v2705
      %v2707 = vpop.f32.mrf.mxu0
      %v2708 = vpop.f32.mrf.mxu0
      %v2709 = vadd.f32 0.0, %v2708
      %v2710 = vpop.f32.mrf.mxu0
      %2711 = vmatprep.mubr.bf16.mxu0 0
      %2712 = vmatmul.mubr.bf16.gmra.mxu0 %v2535
      %v2713 = vpop.f32.mrf.mxu0
      %v2714 = vadd.f32 0.0, %v2713
      %v2715 = vpop.f32.mrf.mxu0
      %v2716 = vpop.f32.mrf.mxu0
      %v2717 = vadd.f32 0.0, %v2716
      %v2718 = vpop.f32.mrf.mxu0
      %2719 = vmatprep.mubr.bf16.mxu0 0
      %2720 = vmatmul.mubr.bf16.gmra.mxu0 %v2538
      %v2721 = vpop.f32.mrf.mxu0
      %v2722 = vadd.f32 0.0, %v2721
      %v2723 = vpop.f32.mrf.mxu0
      %v2724 = vpop.f32.mrf.mxu0
      %v2725 = vpop.f32.mrf.mxu0
      %2726 = vdwg.mxu0
      %v2727 = vadd.f32 %v2351, %v2578
      %v2728 = vadd.f32 %v2352, %v2581
      %v2729 = vadd.f32 %v2353, %v2586
      %v2730 = vadd.f32 %v2354, %v2589
      %v2731 = vadd.f32 %v2355, %v2594
      %v2732 = vadd.f32 %v2356, %v2597
      %v2733 = vadd.f32 %v2357, %v2602
      %v2734 = vadd.f32 %v2358, %v2605
      %v2735 = vadd.f32 %v2359, %v2610
      %v2736 = vadd.f32 %v2360, %v2613
      %v2737 = vadd.f32 %v2361, %v2618
      %v2738 = vadd.f32 %v2362, %v2621
      %v2739 = vadd.f32 %v2363, %v2626
      %v2740 = vadd.f32 %v2364, %v2629
      %v2741 = vadd.f32 %v2365, %v2634
      %v2742 = vadd.f32 %v2366, %v2637
      %v2743 = vadd.f32 %v2367, %v2642
      %v2744 = vadd.f32 %v2368, %v2645
      %v2745 = vadd.f32 %v2369, %v2650
      %v2746 = vadd.f32 %v2370, %v2653
      %v2747 = vadd.f32 %v2371, %v2658
      %v2748 = vadd.f32 %v2372, %v2661
      %v2749 = vadd.f32 %v2373, %v2666
      %v2750 = vadd.f32 %v2374, %v2669
      %v2751 = vadd.f32 %v2375, %v2674
      %v2752 = vadd.f32 %v2376, %v2677
      %v2753 = vadd.f32 %v2377, %v2682
      %v2754 = vadd.f32 %v2378, %v2685
      %v2755 = vadd.f32 %v2379, %v2690
      %v2756 = vadd.f32 %v2380, %v2693
      %v2757 = vadd.f32 %v2381, %v2698
      %v2758 = vadd.f32 %v2382, %v2701
      %v2759 = vadd.f32 %v2383, %v2706
      %v2760 = vadd.f32 %v2384, %v2709
      %v2761 = vadd.f32 %v2385, %v2714
      %v2762 = vadd.f32 %v2386, %v2717
      %v2763 = vadd.f32 %v2387, %v2722
      %2764 = vst.msk [vmem:[#allocation2] sm:$0xff] %vm172, %v2727
      %2765 = vst.msk [vmem:[#allocation2 + $0x8] sm:$0xff] %vm172, %v2728
      %2766 = vst.msk [vmem:[#allocation2 + $0x10] sm:$0xff] %vm172, %v2729
      %2767 = vst.msk [vmem:[#allocation2 + $0x18] sm:$0xff] %vm172, %v2730
      %2768 = vst.msk [vmem:[#allocation2 + $0x20] sm:$0xff] %vm172, %v2731
      %2769 = vst.msk [vmem:[#allocation2 + $0x28] sm:$0xff] %vm172, %v2732
      %2770 = vst.msk [vmem:[#allocation2 + $0x30] sm:$0xff] %vm172, %v2733
      %2771 = vst.msk [vmem:[#allocation2 + $0x38] sm:$0xff] %vm172, %v2734
      %2772 = vst.msk [vmem:[#allocation2 + $0x40] sm:$0xff] %vm172, %v2735
      %2773 = vst.msk [vmem:[#allocation2 + $0x48] sm:$0xff] %vm172, %v2736
      %2774 = vst.msk [vmem:[#allocation2 + $0x50] sm:$0xff] %vm172, %v2737
      %2775 = vst.msk [vmem:[#allocation2 + $0x58] sm:$0xff] %vm172, %v2738
      %2776 = vst.msk [vmem:[#allocation2 + $0x60] sm:$0xff] %vm172, %v2739
      %2777 = vst.msk [vmem:[#allocation2 + $0x68] sm:$0xff] %vm172, %v2740
      %2778 = vst.msk [vmem:[#allocation2 + $0x70] sm:$0xff] %vm172, %v2741
      %2779 = vst.msk [vmem:[#allocation2 + $0x78] sm:$0xff] %vm172, %v2742
      %2780 = vst.msk [vmem:[#allocation2 + $0x80] sm:$0xff] %vm172, %v2743
      %2781 = vst.msk [vmem:[#allocation2 + $0x88] sm:$0xff] %vm172, %v2744
      %2782 = vst.msk [vmem:[#allocation2 + $0x90] sm:$0xff] %vm172, %v2745
      %2783 = vst.msk [vmem:[#allocation2 + $0x98] sm:$0xff] %vm172, %v2746
      %2784 = vst.msk [vmem:[#allocation2 + $0xa0] sm:$0xff] %vm172, %v2747
      %2785 = vst.msk [vmem:[#allocation2 + $0xa8] sm:$0xff] %vm172, %v2748
      %2786 = vst.msk [vmem:[#allocation2 + $0xb0] sm:$0xff] %vm172, %v2749
      %2787 = vst.msk [vmem:[#allocation2 + $0xb8] sm:$0xff] %vm172, %v2750
      %2788 = vst.msk [vmem:[#allocation2 + $0xc0] sm:$0xff] %vm172, %v2751
      %2789 = vst.msk [vmem:[#allocation2 + $0xc8] sm:$0xff] %vm172, %v2752
      %2790 = vst.msk [vmem:[#allocation2 + $0xd0] sm:$0xff] %vm172, %v2753
      %2791 = vst.msk [vmem:[#allocation2 + $0xd8] sm:$0xff] %vm172, %v2754
      %2792 = vst.msk [vmem:[#allocation2 + $0xe0] sm:$0xff] %vm172, %v2755
      %2793 = vst.msk [vmem:[#allocation2 + $0xe8] sm:$0xff] %vm172, %v2756
      %2794 = vst.msk [vmem:[#allocation2 + $0xf0] sm:$0xff] %vm172, %v2757
      %2795 = vst.msk [vmem:[#allocation2 + $0xf8] sm:$0xff] %vm172, %v2758
      %2796 = vst.msk [vmem:[#allocation2 + $0x100] sm:$0xff] %vm172, %v2759
      %2797 = vst.msk [vmem:[#allocation2 + $0x108] sm:$0xff] %vm172, %v2760
      %2798 = vst.msk [vmem:[#allocation2 + $0x110] sm:$0xff] %vm172, %v2761
      %2799 = vst.msk [vmem:[#allocation2 + $0x118] sm:$0xff] %vm172, %v2762
      %2800 = vst.msk [vmem:[#allocation2 + $0x120] sm:$0x1] %vm209, %v2763
      %v2801 = vld [vmem:[%s1825] sm:$0xf]
      %v2802 = vld [vmem:[%s1825 + $0x4] sm:$0xf]
      %v2803 = vld [vmem:[%s1825 + $0x8] sm:$0xf]
      %v2804 = vld [vmem:[%s1825 + $0xc] sm:$0xf]
      %v2805 = vld [vmem:[%s1825 + $0x10] sm:$0xf]
      %v2806 = vld [vmem:[%s1825 + $0x14] sm:$0xf]
      %v2807 = vld [vmem:[%s1825 + $0x18] sm:$0xf]
      %v2808 = vld [vmem:[%s1825 + $0x1c] sm:$0xf]
      %v2809 = vld [vmem:[%s1825 + $0x20] sm:$0xf]
      %v2810 = vld [vmem:[%s1825 + $0x24] sm:$0xf]
      %v2811 = vld [vmem:[%s1825 + $0x28] sm:$0xf]
      %v2812 = vld [vmem:[%s1825 + $0x2c] sm:$0xf]
      %v2813 = vld [vmem:[%s1825 + $0x30] sm:$0xf]
      %v2814 = vld [vmem:[%s1825 + $0x34] sm:$0xf]
      %v2815 = vld [vmem:[%s1825 + $0x38] sm:$0xf]
      %v2816 = vld [vmem:[%s1825 + $0x3c] sm:$0xf]
      %v2817 = vld [vmem:[%s1825 + $0x40] sm:$0xf]
      %v2818 = vld [vmem:[%s1825 + $0x44] sm:$0xf]
      %v2819 = vld [vmem:[%s1825 + $0x48] sm:$0xf]
      %v2820 = vld [vmem:[%s1825 + $0x4c] sm:$0xf]
      %v2821 = vld [vmem:[%s1825 + $0x50] sm:$0xf]
      %v2822 = vld [vmem:[%s1825 + $0x54] sm:$0xf]
      %v2823 = vld [vmem:[%s1825 + $0x58] sm:$0xf]
      %v2824 = vld [vmem:[%s1825 + $0x5c] sm:$0xf]
      %v2825 = vld [vmem:[%s1825 + $0x60] sm:$0xf]
      %v2826 = vld [vmem:[%s1825 + $0x64] sm:$0xf]
      %v2827 = vld [vmem:[%s1825 + $0x68] sm:$0xf]
      %v2828 = vld [vmem:[%s1825 + $0x6c] sm:$0xf]
      %v2829 = vld [vmem:[%s1825 + $0x70] sm:$0xf]
      %v2830 = vld [vmem:[%s1825 + $0x74] sm:$0xf]
      %v2831 = vld [vmem:[%s1825 + $0x78] sm:$0xf]
      %v2832 = vld [vmem:[%s1825 + $0x7c] sm:$0xf]
      %v2833 = vld [vmem:[%s1825 + $0x80] sm:$0xf]
      %v2834 = vld [vmem:[%s1825 + $0x84] sm:$0xf]
      %v2835 = vld [vmem:[%s1825 + $0x88] sm:$0xf]
      %v2836 = vld [vmem:[%s1825 + $0x8c] sm:$0xf]
      %v2837 = vld [vmem:[%s1825 + $0x90] sm:$0x1]
      %v2838 = vld [vmem:[#allocation2] sm:$0xff]
      %v2839 = vld [vmem:[#allocation2 + $0x8] sm:$0xff]
      %v2840 = vld [vmem:[#allocation2 + $0x10] sm:$0xff]
      %v2841 = vld [vmem:[#allocation2 + $0x18] sm:$0xff]
      %v2842 = vld [vmem:[#allocation2 + $0x20] sm:$0xff]
      %v2843 = vld [vmem:[#allocation2 + $0x28] sm:$0xff]
      %v2844 = vld [vmem:[#allocation2 + $0x30] sm:$0xff]
      %v2845 = vld [vmem:[#allocation2 + $0x38] sm:$0xff]
      %v2846 = vld [vmem:[#allocation2 + $0x40] sm:$0xff]
      %v2847 = vld [vmem:[#allocation2 + $0x48] sm:$0xff]
      %v2848 = vld [vmem:[#allocation2 + $0x50] sm:$0xff]
      %v2849 = vld [vmem:[#allocation2 + $0x58] sm:$0xff]
      %v2850 = vld [vmem:[#allocation2 + $0x60] sm:$0xff]
      %v2851 = vld [vmem:[#allocation2 + $0x68] sm:$0xff]
      %v2852 = vld [vmem:[#allocation2 + $0x70] sm:$0xff]
      %v2853 = vld [vmem:[#allocation2 + $0x78] sm:$0xff]
      %v2854 = vld [vmem:[#allocation2 + $0x80] sm:$0xff]
      %v2855 = vld [vmem:[#allocation2 + $0x88] sm:$0xff]
      %v2856 = vld [vmem:[#allocation2 + $0x90] sm:$0xff]
      %v2857 = vld [vmem:[#allocation2 + $0x98] sm:$0xff]
      %v2858 = vld [vmem:[#allocation2 + $0xa0] sm:$0xff]
      %v2859 = vld [vmem:[#allocation2 + $0xa8] sm:$0xff]
      %v2860 = vld [vmem:[#allocation2 + $0xb0] sm:$0xff]
      %v2861 = vld [vmem:[#allocation2 + $0xb8] sm:$0xff]
      %v2862 = vld [vmem:[#allocation2 + $0xc0] sm:$0xff]
      %v2863 = vld [vmem:[#allocation2 + $0xc8] sm:$0xff]
      %v2864 = vld [vmem:[#allocation2 + $0xd0] sm:$0xff]
      %v2865 = vld [vmem:[#allocation2 + $0xd8] sm:$0xff]
      %v2866 = vld [vmem:[#allocation2 + $0xe0] sm:$0xff]
      %v2867 = vld [vmem:[#allocation2 + $0xe8] sm:$0xff]
      %v2868 = vld [vmem:[#allocation2 + $0xf0] sm:$0xff]
      %v2869 = vld [vmem:[#allocation2 + $0xf8] sm:$0xff]
      %v2870 = vld [vmem:[#allocation2 + $0x100] sm:$0xff]
      %v2871 = vld [vmem:[#allocation2 + $0x108] sm:$0xff]
      %v2872 = vld [vmem:[#allocation2 + $0x110] sm:$0xff]
      %v2873 = vld [vmem:[#allocation2 + $0x118] sm:$0xff]
      %v2874 = vld [vmem:[#allocation2 + $0x120] sm:$0x1]
      %s2875 = scalar_lea.vmem %s1, 20
      %v2876 = vld [vmem:[%s2875] sm:$0xf]
      %v2914 = vunpack.c.l.b16 %v2801
      %v2915 = vunpack.c.l.b16 %v2802
      %v2916 = vunpack.c.l.b16 %v2803
      %v2917 = vunpack.c.l.b16 %v2804
      %v2918 = vunpack.c.l.b16 %v2805
      %v2919 = vunpack.c.l.b16 %v2806
      %v2920 = vunpack.c.l.b16 %v2807
      %v2921 = vunpack.c.l.b16 %v2808
      %v2922 = vunpack.c.l.b16 %v2809
      %v2923 = vunpack.c.l.b16 %v2810
      %v2924 = vunpack.c.l.b16 %v2811
      %v2925 = vunpack.c.l.b16 %v2812
      %v2926 = vunpack.c.l.b16 %v2813
      %v2927 = vunpack.c.l.b16 %v2814
      %v2928 = vunpack.c.l.b16 %v2815
      %v2929 = vunpack.c.l.b16 %v2816
      %v2930 = vunpack.c.l.b16 %v2817
      %v2931 = vunpack.c.l.b16 %v2818
      %v2932 = vunpack.c.l.b16 %v2819
      %v2933 = vunpack.c.l.b16 %v2820
      %v2934 = vunpack.c.l.b16 %v2821
      %v2935 = vunpack.c.l.b16 %v2822
      %v2936 = vunpack.c.l.b16 %v2823
      %v2937 = vunpack.c.l.b16 %v2824
      %v2938 = vunpack.c.l.b16 %v2825
      %v2939 = vunpack.c.l.b16 %v2826
      %v2940 = vunpack.c.l.b16 %v2827
      %v2941 = vunpack.c.l.b16 %v2828
      %v2942 = vunpack.c.l.b16 %v2829
      %v2943 = vunpack.c.l.b16 %v2830
      %v2944 = vunpack.c.l.b16 %v2831
      %v2945 = vunpack.c.l.b16 %v2832
      %v2946 = vunpack.c.l.b16 %v2833
      %v2947 = vunpack.c.l.b16 %v2834
      %v2948 = vunpack.c.l.b16 %v2835
      %v2949 = vunpack.c.l.b16 %v2836
      %v2950 = vunpack.c.l.b16 %v2837
      %v2951 = vpack.c.b16 %v2915, %v2914
      %v2952 = vpack.c.b16 %v2917, %v2916
      %v2953 = vpack.c.b16 %v2919, %v2918
      %v2954 = vpack.c.b16 %v2921, %v2920
      %v2955 = vpack.c.b16 %v2923, %v2922
      %v2956 = vpack.c.b16 %v2925, %v2924
      %v2957 = vpack.c.b16 %v2927, %v2926
      %v2958 = vpack.c.b16 %v2929, %v2928
      %v2959 = vpack.c.b16 %v2931, %v2930
      %v2960 = vpack.c.b16 %v2933, %v2932
      %v2961 = vpack.c.b16 %v2935, %v2934
      %v2962 = vpack.c.b16 %v2937, %v2936
      %v2963 = vpack.c.b16 %v2939, %v2938
      %v2964 = vpack.c.b16 %v2941, %v2940
      %v2965 = vpack.c.b16 %v2943, %v2942
      %v2966 = vpack.c.b16 %v2945, %v2944
      %v2967 = vpack.c.b16 %v2947, %v2946
      %v2968 = vpack.c.b16 %v2949, %v2948
      %v2969 = vpack.c.b16 %v2950, %v2950
      %v2971 = vshrl.u32 %v2951, 16
      %v2973 = vshll.u32 %v2951, 16
      %v2975 = vrot.slane %v2973, 1
      %v2976 = vor.u32 %v2971, %v2975
      %v2978 = vshll.u32 %v2952, 16
      %v2980 = vrot.slane %v2978, 1
      %v2981 = vsel %vm1356, %v2976, %v2980
      %v2982 = vshrl.u32 %v2952, 16
      %v2984 = vor.u32 %v2982, %v2980
      %v2986 = vshll.u32 %v2953, 16
      %v2988 = vrot.slane %v2986, 1
      %v2989 = vsel %vm1356, %v2984, %v2988
      %v2990 = vshrl.u32 %v2953, 16
      %v2992 = vor.u32 %v2990, %v2988
      %v2994 = vshll.u32 %v2954, 16
      %v2996 = vrot.slane %v2994, 1
      %v2997 = vsel %vm1356, %v2992, %v2996
      %v2998 = vshrl.u32 %v2954, 16
      %v3000 = vor.u32 %v2998, %v2996
      %v3002 = vshll.u32 %v2955, 16
      %v3004 = vrot.slane %v3002, 1
      %v3005 = vsel %vm1356, %v3000, %v3004
      %v3006 = vshrl.u32 %v2955, 16
      %v3008 = vor.u32 %v3006, %v3004
      %v3010 = vshll.u32 %v2956, 16
      %v3012 = vrot.slane %v3010, 1
      %v3013 = vsel %vm1356, %v3008, %v3012
      %v3014 = vshrl.u32 %v2956, 16
      %v3016 = vor.u32 %v3014, %v3012
      %v3018 = vshll.u32 %v2957, 16
      %v3020 = vrot.slane %v3018, 1
      %v3021 = vsel %vm1356, %v3016, %v3020
      %v3022 = vshrl.u32 %v2957, 16
      %v3024 = vor.u32 %v3022, %v3020
      %v3026 = vshll.u32 %v2958, 16
      %v3028 = vrot.slane %v3026, 1
      %v3029 = vsel %vm1356, %v3024, %v3028
      %v3030 = vshrl.u32 %v2958, 16
      %v3032 = vor.u32 %v3030, %v3028
      %v3034 = vshll.u32 %v2959, 16
      %v3036 = vrot.slane %v3034, 1
      %v3037 = vsel %vm1356, %v3032, %v3036
      %v3038 = vshrl.u32 %v2959, 16
      %v3040 = vor.u32 %v3038, %v3036
      %v3042 = vshll.u32 %v2960, 16
      %v3044 = vrot.slane %v3042, 1
      %v3045 = vsel %vm1356, %v3040, %v3044
      %v3046 = vshrl.u32 %v2960, 16
      %v3048 = vor.u32 %v3046, %v3044
      %v3050 = vshll.u32 %v2961, 16
      %v3052 = vrot.slane %v3050, 1
      %v3053 = vsel %vm1356, %v3048, %v3052
      %v3054 = vshrl.u32 %v2961, 16
      %v3056 = vor.u32 %v3054, %v3052
      %v3058 = vshll.u32 %v2962, 16
      %v3060 = vrot.slane %v3058, 1
      %v3061 = vsel %vm1356, %v3056, %v3060
      %v3062 = vshrl.u32 %v2962, 16
      %v3064 = vor.u32 %v3062, %v3060
      %v3066 = vshll.u32 %v2963, 16
      %v3068 = vrot.slane %v3066, 1
      %v3069 = vsel %vm1356, %v3064, %v3068
      %v3070 = vshrl.u32 %v2963, 16
      %v3072 = vor.u32 %v3070, %v3068
      %v3074 = vshll.u32 %v2964, 16
      %v3076 = vrot.slane %v3074, 1
      %v3077 = vsel %vm1356, %v3072, %v3076
      %v3078 = vshrl.u32 %v2964, 16
      %v3080 = vor.u32 %v3078, %v3076
      %v3082 = vshll.u32 %v2965, 16
      %v3084 = vrot.slane %v3082, 1
      %v3085 = vsel %vm1356, %v3080, %v3084
      %v3086 = vshrl.u32 %v2965, 16
      %v3088 = vor.u32 %v3086, %v3084
      %v3090 = vshll.u32 %v2966, 16
      %v3092 = vrot.slane %v3090, 1
      %v3093 = vsel %vm1356, %v3088, %v3092
      %v3094 = vshrl.u32 %v2966, 16
      %v3096 = vor.u32 %v3094, %v3092
      %v3098 = vshll.u32 %v2967, 16
      %v3100 = vrot.slane %v3098, 1
      %v3101 = vsel %vm1356, %v3096, %v3100
      %v3102 = vshrl.u32 %v2967, 16
      %v3104 = vor.u32 %v3102, %v3100
      %v3106 = vshll.u32 %v2968, 16
      %v3108 = vrot.slane %v3106, 1
      %v3109 = vsel %vm1356, %v3104, %v3108
      %v3110 = vshrl.u32 %v2968, 16
      %v3112 = vor.u32 %v3110, %v3108
      %v3114 = vshll.u32 %v2969, 16
      %v3116 = vrot.slane %v3114, 1
      %v3117 = vsel %vm1356, %v3112, %v3116
      %v3118 = vshrl.u32 %v2969, 16
      %v3121 = vsel %vm379, %v2981, 0
      %v3124 = vsel %vm379, %v2989, 0
      %v3127 = vsel %vm379, %v2997, 0
      %v3130 = vsel %vm379, %v3005, 0
      %v3133 = vsel %vm379, %v3013, 0
      %v3136 = vsel %vm379, %v3021, 0
      %v3139 = vsel %vm379, %v3029, 0
      %v3142 = vsel %vm379, %v3037, 0
      %v3145 = vsel %vm379, %v3045, 0
      %v3148 = vsel %vm379, %v3053, 0
      %v3151 = vsel %vm379, %v3061, 0
      %v3154 = vsel %vm379, %v3069, 0
      %v3157 = vsel %vm379, %v3077, 0
      %v3160 = vsel %vm379, %v3085, 0
      %v3163 = vsel %vm379, %v3093, 0
      %v3166 = vsel %vm379, %v3101, 0
      %v3169 = vsel %vm379, %v3109, 0
      %v3172 = vsel %vm379, %v3117, 0
      %v3175 = vsel %vm379, %v3118, 0
      %v3178 = vsel %vm437, %v2876, 0
      %3180 = vmatprep.subr.bf16.mxu0 0
      %3181 = vmatpush1.bf16.msra.mxu0 0
      %3182 = vmatprep.subr.bf16.mxu0 0
      %3183 = vmatpush1.bf16.msra.mxu0 0
      %3184 = vmatprep.subr.bf16.mxu0 0
      %3185 = vmatpush1.bf16.msra.mxu0 0
      %3186 = vmatprep.subr.bf16.mxu0 0
      %3187 = vmatpush1.bf16.msra.mxu0 0
      %3188 = vmatprep.subr.bf16.mxu0 0
      %3189 = vmatpush1.bf16.msra.mxu0 0
      %3190 = vmatprep.subr.bf16.mxu0 0
      %3191 = vmatpush1.bf16.msra.mxu0 0
      %3192 = vmatprep.subr.bf16.mxu0 0
      %3193 = vmatpush1.bf16.msra.mxu0 0
      %3194 = vmatprep.subr.bf16.mxu0 0
      %3195 = vmatpush1.bf16.msra.mxu0 %v3178
      %3196 = vmatprep.subr.bf16.mxu0 0
      %3197 = vmatpush2.bf16.msra.mxu0 0
      %3198 = vmatprep.subr.bf16.mxu0 0
      %3199 = vmatpush2.bf16.msra.mxu0 0
      %3200 = vmatprep.subr.bf16.mxu0 0
      %3201 = vmatpush2.bf16.msra.mxu0 0
      %3202 = vmatprep.subr.bf16.mxu0 0
      %3203 = vmatpush2.bf16.msra.mxu0 0
      %3204 = vmatprep.subr.bf16.mxu0 0
      %3205 = vmatpush2.bf16.msra.mxu0 0
      %3206 = vmatprep.subr.bf16.mxu0 0
      %3207 = vmatpush2.bf16.msra.mxu0 0
      %3208 = vmatprep.subr.bf16.mxu0 0
      %3209 = vmatpush2.bf16.msra.mxu0 0
      %3210 = vmatprep.subr.bf16.mxu0 0
      %3211 = vmatpush2.bf16.msra.mxu0 0
      %3212 = vmatprep.mubr.bf16.mxu0 0
      %3213 = vmatmul.mubr.bf16.gmra.mxu0 %v3121
      %v3214 = vpop.f32.mrf.mxu0
      %v3215 = vadd.f32 0.0, %v3214
      %v3216 = vpop.f32.mrf.mxu0
      %v3217 = vpop.f32.mrf.mxu0
      %v3218 = vadd.f32 0.0, %v3217
      %v3219 = vpop.f32.mrf.mxu0
      %3220 = vmatprep.mubr.bf16.mxu0 0
      %3221 = vmatmul.mubr.bf16.gmra.mxu0 %v3124
      %v3222 = vpop.f32.mrf.mxu0
      %v3223 = vadd.f32 0.0, %v3222
      %v3224 = vpop.f32.mrf.mxu0
      %v3225 = vpop.f32.mrf.mxu0
      %v3226 = vadd.f32 0.0, %v3225
      %v3227 = vpop.f32.mrf.mxu0
      %3228 = vmatprep.mubr.bf16.mxu0 0
      %3229 = vmatmul.mubr.bf16.gmra.mxu0 %v3127
      %v3230 = vpop.f32.mrf.mxu0
      %v3231 = vadd.f32 0.0, %v3230
      %v3232 = vpop.f32.mrf.mxu0
      %v3233 = vpop.f32.mrf.mxu0
      %v3234 = vadd.f32 0.0, %v3233
      %v3235 = vpop.f32.mrf.mxu0
      %3236 = vmatprep.mubr.bf16.mxu0 0
      %3237 = vmatmul.mubr.bf16.gmra.mxu0 %v3130
      %v3238 = vpop.f32.mrf.mxu0
      %v3239 = vadd.f32 0.0, %v3238
      %v3240 = vpop.f32.mrf.mxu0
      %v3241 = vpop.f32.mrf.mxu0
      %v3242 = vadd.f32 0.0, %v3241
      %v3243 = vpop.f32.mrf.mxu0
      %3244 = vmatprep.mubr.bf16.mxu0 0
      %3245 = vmatmul.mubr.bf16.gmra.mxu0 %v3133
      %v3246 = vpop.f32.mrf.mxu0
      %v3247 = vadd.f32 0.0, %v3246
      %v3248 = vpop.f32.mrf.mxu0
      %v3249 = vpop.f32.mrf.mxu0
      %v3250 = vadd.f32 0.0, %v3249
      %v3251 = vpop.f32.mrf.mxu0
      %3252 = vmatprep.mubr.bf16.mxu0 0
      %3253 = vmatmul.mubr.bf16.gmra.mxu0 %v3136
      %v3254 = vpop.f32.mrf.mxu0
      %v3255 = vadd.f32 0.0, %v3254
      %v3256 = vpop.f32.mrf.mxu0
      %v3257 = vpop.f32.mrf.mxu0
      %v3258 = vadd.f32 0.0, %v3257
      %v3259 = vpop.f32.mrf.mxu0
      %3260 = vmatprep.mubr.bf16.mxu0 0
      %3261 = vmatmul.mubr.bf16.gmra.mxu0 %v3139
      %v3262 = vpop.f32.mrf.mxu0
      %v3263 = vadd.f32 0.0, %v3262
      %v3264 = vpop.f32.mrf.mxu0
      %v3265 = vpop.f32.mrf.mxu0
      %v3266 = vadd.f32 0.0, %v3265
      %v3267 = vpop.f32.mrf.mxu0
      %3268 = vmatprep.mubr.bf16.mxu0 0
      %3269 = vmatmul.mubr.bf16.gmra.mxu0 %v3142
      %v3270 = vpop.f32.mrf.mxu0
      %v3271 = vadd.f32 0.0, %v3270
      %v3272 = vpop.f32.mrf.mxu0
      %v3273 = vpop.f32.mrf.mxu0
      %v3274 = vadd.f32 0.0, %v3273
      %v3275 = vpop.f32.mrf.mxu0
      %3276 = vmatprep.mubr.bf16.mxu0 0
      %3277 = vmatmul.mubr.bf16.gmra.mxu0 %v3145
      %v3278 = vpop.f32.mrf.mxu0
      %v3279 = vadd.f32 0.0, %v3278
      %v3280 = vpop.f32.mrf.mxu0
      %v3281 = vpop.f32.mrf.mxu0
      %v3282 = vadd.f32 0.0, %v3281
      %v3283 = vpop.f32.mrf.mxu0
      %3284 = vmatprep.mubr.bf16.mxu0 0
      %3285 = vmatmul.mubr.bf16.gmra.mxu0 %v3148
      %v3286 = vpop.f32.mrf.mxu0
      %v3287 = vadd.f32 0.0, %v3286
      %v3288 = vpop.f32.mrf.mxu0
      %v3289 = vpop.f32.mrf.mxu0
      %v3290 = vadd.f32 0.0, %v3289
      %v3291 = vpop.f32.mrf.mxu0
      %3292 = vmatprep.mubr.bf16.mxu0 0
      %3293 = vmatmul.mubr.bf16.gmra.mxu0 %v3151
      %v3294 = vpop.f32.mrf.mxu0
      %v3295 = vadd.f32 0.0, %v3294
      %v3296 = vpop.f32.mrf.mxu0
      %v3297 = vpop.f32.mrf.mxu0
      %v3298 = vadd.f32 0.0, %v3297
      %v3299 = vpop.f32.mrf.mxu0
      %3300 = vmatprep.mubr.bf16.mxu0 0
      %3301 = vmatmul.mubr.bf16.gmra.mxu0 %v3154
      %v3302 = vpop.f32.mrf.mxu0
      %v3303 = vadd.f32 0.0, %v3302
      %v3304 = vpop.f32.mrf.mxu0
      %v3305 = vpop.f32.mrf.mxu0
      %v3306 = vadd.f32 0.0, %v3305
      %v3307 = vpop.f32.mrf.mxu0
      %3308 = vmatprep.mubr.bf16.mxu0 0
      %3309 = vmatmul.mubr.bf16.gmra.mxu0 %v3157
      %v3310 = vpop.f32.mrf.mxu0
      %v3311 = vadd.f32 0.0, %v3310
      %v3312 = vpop.f32.mrf.mxu0
      %v3313 = vpop.f32.mrf.mxu0
      %v3314 = vadd.f32 0.0, %v3313
      %v3315 = vpop.f32.mrf.mxu0
      %3316 = vmatprep.mubr.bf16.mxu0 0
      %3317 = vmatmul.mubr.bf16.gmra.mxu0 %v3160
      %v3318 = vpop.f32.mrf.mxu0
      %v3319 = vadd.f32 0.0, %v3318
      %v3320 = vpop.f32.mrf.mxu0
      %v3321 = vpop.f32.mrf.mxu0
      %v3322 = vadd.f32 0.0, %v3321
      %v3323 = vpop.f32.mrf.mxu0
      %3324 = vmatprep.mubr.bf16.mxu0 0
      %3325 = vmatmul.mubr.bf16.gmra.mxu0 %v3163
      %v3326 = vpop.f32.mrf.mxu0
      %v3327 = vadd.f32 0.0, %v3326
      %v3328 = vpop.f32.mrf.mxu0
      %v3329 = vpop.f32.mrf.mxu0
      %v3330 = vadd.f32 0.0, %v3329
      %v3331 = vpop.f32.mrf.mxu0
      %3332 = vmatprep.mubr.bf16.mxu0 0
      %3333 = vmatmul.mubr.bf16.gmra.mxu0 %v3166
      %v3334 = vpop.f32.mrf.mxu0
      %v3335 = vadd.f32 0.0, %v3334
      %v3336 = vpop.f32.mrf.mxu0
      %v3337 = vpop.f32.mrf.mxu0
      %v3338 = vadd.f32 0.0, %v3337
      %v3339 = vpop.f32.mrf.mxu0
      %3340 = vmatprep.mubr.bf16.mxu0 0
      %3341 = vmatmul.mubr.bf16.gmra.mxu0 %v3169
      %v3342 = vpop.f32.mrf.mxu0
      %v3343 = vadd.f32 0.0, %v3342
      %v3344 = vpop.f32.mrf.mxu0
      %v3345 = vpop.f32.mrf.mxu0
      %v3346 = vadd.f32 0.0, %v3345
      %v3347 = vpop.f32.mrf.mxu0
      %3348 = vmatprep.mubr.bf16.mxu0 0
      %3349 = vmatmul.mubr.bf16.gmra.mxu0 %v3172
      %v3350 = vpop.f32.mrf.mxu0
      %v3351 = vadd.f32 0.0, %v3350
      %v3352 = vpop.f32.mrf.mxu0
      %v3353 = vpop.f32.mrf.mxu0
      %v3354 = vadd.f32 0.0, %v3353
      %v3355 = vpop.f32.mrf.mxu0
      %3356 = vmatprep.mubr.bf16.mxu0 0
      %3357 = vmatmul.mubr.bf16.gmra.mxu0 %v3175
      %v3358 = vpop.f32.mrf.mxu0
      %v3359 = vadd.f32 0.0, %v3358
      %v3360 = vpop.f32.mrf.mxu0
      %v3361 = vpop.f32.mrf.mxu0
      %v3362 = vpop.f32.mrf.mxu0
      %3363 = vdwg.mxu0
      %v3364 = vadd.f32 %v2838, %v3215
      %v3365 = vadd.f32 %v2839, %v3218
      %v3366 = vadd.f32 %v2840, %v3223
      %v3367 = vadd.f32 %v2841, %v3226
      %v3368 = vadd.f32 %v2842, %v3231
      %v3369 = vadd.f32 %v2843, %v3234
      %v3370 = vadd.f32 %v2844, %v3239
      %v3371 = vadd.f32 %v2845, %v3242
      %v3372 = vadd.f32 %v2846, %v3247
      %v3373 = vadd.f32 %v2847, %v3250
      %v3374 = vadd.f32 %v2848, %v3255
      %v3375 = vadd.f32 %v2849, %v3258
      %v3376 = vadd.f32 %v2850, %v3263
      %v3377 = vadd.f32 %v2851, %v3266
      %v3378 = vadd.f32 %v2852, %v3271
      %v3379 = vadd.f32 %v2853, %v3274
      %v3380 = vadd.f32 %v2854, %v3279
      %v3381 = vadd.f32 %v2855, %v3282
      %v3382 = vadd.f32 %v2856, %v3287
      %v3383 = vadd.f32 %v2857, %v3290
      %v3384 = vadd.f32 %v2858, %v3295
      %v3385 = vadd.f32 %v2859, %v3298
      %v3386 = vadd.f32 %v2860, %v3303
      %v3387 = vadd.f32 %v2861, %v3306
      %v3388 = vadd.f32 %v2862, %v3311
      %v3389 = vadd.f32 %v2863, %v3314
      %v3390 = vadd.f32 %v2864, %v3319
      %v3391 = vadd.f32 %v2865, %v3322
      %v3392 = vadd.f32 %v2866, %v3327
      %v3393 = vadd.f32 %v2867, %v3330
      %v3394 = vadd.f32 %v2868, %v3335
      %v3395 = vadd.f32 %v2869, %v3338
      %v3396 = vadd.f32 %v2870, %v3343
      %v3397 = vadd.f32 %v2871, %v3346
      %v3398 = vadd.f32 %v2872, %v3351
      %v3399 = vadd.f32 %v2873, %v3354
      %v3400 = vadd.f32 %v2874, %v3359
      %3401 = vst.msk [vmem:[#allocation2] sm:$0xff] %vm172, %v3364
      %3402 = vst.msk [vmem:[#allocation2 + $0x8] sm:$0xff] %vm172, %v3365
      %3403 = vst.msk [vmem:[#allocation2 + $0x10] sm:$0xff] %vm172, %v3366
      %3404 = vst.msk [vmem:[#allocation2 + $0x18] sm:$0xff] %vm172, %v3367
      %3405 = vst.msk [vmem:[#allocation2 + $0x20] sm:$0xff] %vm172, %v3368
      %3406 = vst.msk [vmem:[#allocation2 + $0x28] sm:$0xff] %vm172, %v3369
      %3407 = vst.msk [vmem:[#allocation2 + $0x30] sm:$0xff] %vm172, %v3370
      %3408 = vst.msk [vmem:[#allocation2 + $0x38] sm:$0xff] %vm172, %v3371
      %3409 = vst.msk [vmem:[#allocation2 + $0x40] sm:$0xff] %vm172, %v3372
      %3410 = vst.msk [vmem:[#allocation2 + $0x48] sm:$0xff] %vm172, %v3373
      %3411 = vst.msk [vmem:[#allocation2 + $0x50] sm:$0xff] %vm172, %v3374
      %3412 = vst.msk [vmem:[#allocation2 + $0x58] sm:$0xff] %vm172, %v3375
      %3413 = vst.msk [vmem:[#allocation2 + $0x60] sm:$0xff] %vm172, %v3376
      %3414 = vst.msk [vmem:[#allocation2 + $0x68] sm:$0xff] %vm172, %v3377
      %3415 = vst.msk [vmem:[#allocation2 + $0x70] sm:$0xff] %vm172, %v3378
      %3416 = vst.msk [vmem:[#allocation2 + $0x78] sm:$0xff] %vm172, %v3379
      %3417 = vst.msk [vmem:[#allocation2 + $0x80] sm:$0xff] %vm172, %v3380
      %3418 = vst.msk [vmem:[#allocation2 + $0x88] sm:$0xff] %vm172, %v3381
      %3419 = vst.msk [vmem:[#allocation2 + $0x90] sm:$0xff] %vm172, %v3382
      %3420 = vst.msk [vmem:[#allocation2 + $0x98] sm:$0xff] %vm172, %v3383
      %3421 = vst.msk [vmem:[#allocation2 + $0xa0] sm:$0xff] %vm172, %v3384
      %3422 = vst.msk [vmem:[#allocation2 + $0xa8] sm:$0xff] %vm172, %v3385
      %3423 = vst.msk [vmem:[#allocation2 + $0xb0] sm:$0xff] %vm172, %v3386
      %3424 = vst.msk [vmem:[#allocation2 + $0xb8] sm:$0xff] %vm172, %v3387
      %3425 = vst.msk [vmem:[#allocation2 + $0xc0] sm:$0xff] %vm172, %v3388
      %3426 = vst.msk [vmem:[#allocation2 + $0xc8] sm:$0xff] %vm172, %v3389
      %3427 = vst.msk [vmem:[#allocation2 + $0xd0] sm:$0xff] %vm172, %v3390
      %3428 = vst.msk [vmem:[#allocation2 + $0xd8] sm:$0xff] %vm172, %v3391
      %3429 = vst.msk [vmem:[#allocation2 + $0xe0] sm:$0xff] %vm172, %v3392
      %3430 = vst.msk [vmem:[#allocation2 + $0xe8] sm:$0xff] %vm172, %v3393
      %3431 = vst.msk [vmem:[#allocation2 + $0xf0] sm:$0xff] %vm172, %v3394
      %3432 = vst.msk [vmem:[#allocation2 + $0xf8] sm:$0xff] %vm172, %v3395
      %3433 = vst.msk [vmem:[#allocation2 + $0x100] sm:$0xff] %vm172, %v3396
      %3434 = vst.msk [vmem:[#allocation2 + $0x108] sm:$0xff] %vm172, %v3397
      %3435 = vst.msk [vmem:[#allocation2 + $0x110] sm:$0xff] %vm172, %v3398
      %3436 = vst.msk [vmem:[#allocation2 + $0x118] sm:$0xff] %vm172, %v3399
      %3437 = vst.msk [vmem:[#allocation2 + $0x120] sm:$0x1] %vm209, %v3400
      %v3438 = vld [vmem:[%s165 + $0x8] sm:$0xf]
      %v3439 = vld [vmem:[%s165 + $0xc] sm:$0xf]
      %v3440 = vld [vmem:[%s165 + $0x10] sm:$0xf]
      %v3441 = vld [vmem:[%s165 + $0x14] sm:$0xf]
      %v3442 = vld [vmem:[%s165 + $0x18] sm:$0xf]
      %v3443 = vld [vmem:[%s165 + $0x1c] sm:$0xf]
      %v3444 = vld [vmem:[%s165 + $0x20] sm:$0xf]
      %v3445 = vld [vmem:[%s165 + $0x24] sm:$0xf]
      %v3446 = vld [vmem:[%s165 + $0x28] sm:$0xf]
      %v3447 = vld [vmem:[%s165 + $0x2c] sm:$0xf]
      %v3448 = vld [vmem:[%s165 + $0x30] sm:$0xf]
      %v3449 = vld [vmem:[%s165 + $0x34] sm:$0xf]
      %v3450 = vld [vmem:[%s165 + $0x38] sm:$0xf]
      %v3451 = vld [vmem:[%s165 + $0x3c] sm:$0xf]
      %v3452 = vld [vmem:[%s165 + $0x40] sm:$0xf]
      %v3453 = vld [vmem:[%s165 + $0x44] sm:$0xf]
      %v3454 = vld [vmem:[%s165 + $0x48] sm:$0xf]
      %v3455 = vld [vmem:[%s165 + $0x4c] sm:$0xf]
      %v3456 = vld [vmem:[%s165 + $0x50] sm:$0xf]
      %v3457 = vld [vmem:[%s165 + $0x54] sm:$0xf]
      %v3458 = vld [vmem:[%s165 + $0x58] sm:$0xf]
      %v3459 = vld [vmem:[%s165 + $0x5c] sm:$0xf]
      %v3460 = vld [vmem:[%s165 + $0x60] sm:$0xf]
      %v3461 = vld [vmem:[%s165 + $0x64] sm:$0xf]
      %v3462 = vld [vmem:[%s165 + $0x68] sm:$0xf]
      %v3463 = vld [vmem:[%s165 + $0x6c] sm:$0xf]
      %v3464 = vld [vmem:[%s165 + $0x70] sm:$0xf]
      %v3465 = vld [vmem:[%s165 + $0x74] sm:$0xf]
      %v3466 = vld [vmem:[%s165 + $0x78] sm:$0xf]
      %v3467 = vld [vmem:[%s165 + $0x7c] sm:$0xf]
      %v3468 = vld [vmem:[%s165 + $0x80] sm:$0xf]
      %v3469 = vld [vmem:[%s165 + $0x84] sm:$0xf]
      %v3470 = vld [vmem:[%s165 + $0x88] sm:$0xf]
      %v3471 = vld [vmem:[%s165 + $0x8c] sm:$0xf]
      %v3472 = vld [vmem:[%s165 + $0x90] sm:$0xf]
      %v3473 = vld [vmem:[%s165 + $0x94] sm:$0xf]
      %v3474 = vld [vmem:[%s165 + $0x98] sm:$0x1]
      %v3475 = vld [vmem:[#allocation2] sm:$0xff]
      %v3476 = vld [vmem:[#allocation2 + $0x8] sm:$0xff]
      %v3477 = vld [vmem:[#allocation2 + $0x10] sm:$0xff]
      %v3478 = vld [vmem:[#allocation2 + $0x18] sm:$0xff]
      %v3479 = vld [vmem:[#allocation2 + $0x20] sm:$0xff]
      %v3480 = vld [vmem:[#allocation2 + $0x28] sm:$0xff]
      %v3481 = vld [vmem:[#allocation2 + $0x30] sm:$0xff]
      %v3482 = vld [vmem:[#allocation2 + $0x38] sm:$0xff]
      %v3483 = vld [vmem:[#allocation2 + $0x40] sm:$0xff]
      %v3484 = vld [vmem:[#allocation2 + $0x48] sm:$0xff]
      %v3485 = vld [vmem:[#allocation2 + $0x50] sm:$0xff]
      %v3486 = vld [vmem:[#allocation2 + $0x58] sm:$0xff]
      %v3487 = vld [vmem:[#allocation2 + $0x60] sm:$0xff]
      %v3488 = vld [vmem:[#allocation2 + $0x68] sm:$0xff]
      %v3489 = vld [vmem:[#allocation2 + $0x70] sm:$0xff]
      %v3490 = vld [vmem:[#allocation2 + $0x78] sm:$0xff]
      %v3491 = vld [vmem:[#allocation2 + $0x80] sm:$0xff]
      %v3492 = vld [vmem:[#allocation2 + $0x88] sm:$0xff]
      %v3493 = vld [vmem:[#allocation2 + $0x90] sm:$0xff]
      %v3494 = vld [vmem:[#allocation2 + $0x98] sm:$0xff]
      %v3495 = vld [vmem:[#allocation2 + $0xa0] sm:$0xff]
      %v3496 = vld [vmem:[#allocation2 + $0xa8] sm:$0xff]
      %v3497 = vld [vmem:[#allocation2 + $0xb0] sm:$0xff]
      %v3498 = vld [vmem:[#allocation2 + $0xb8] sm:$0xff]
      %v3499 = vld [vmem:[#allocation2 + $0xc0] sm:$0xff]
      %v3500 = vld [vmem:[#allocation2 + $0xc8] sm:$0xff]
      %v3501 = vld [vmem:[#allocation2 + $0xd0] sm:$0xff]
      %v3502 = vld [vmem:[#allocation2 + $0xd8] sm:$0xff]
      %v3503 = vld [vmem:[#allocation2 + $0xe0] sm:$0xff]
      %v3504 = vld [vmem:[#allocation2 + $0xe8] sm:$0xff]
      %v3505 = vld [vmem:[#allocation2 + $0xf0] sm:$0xff]
      %v3506 = vld [vmem:[#allocation2 + $0xf8] sm:$0xff]
      %v3507 = vld [vmem:[#allocation2 + $0x100] sm:$0xff]
      %v3508 = vld [vmem:[#allocation2 + $0x108] sm:$0xff]
      %v3509 = vld [vmem:[#allocation2 + $0x110] sm:$0xff]
      %v3510 = vld [vmem:[#allocation2 + $0x118] sm:$0xff]
      %v3511 = vld [vmem:[#allocation2 + $0x120] sm:$0x1]
      %s3512 = scalar_lea.vmem %s1, 24
      %v3513 = vld [vmem:[%s3512] sm:$0xf]
      %v3551 = vunpack.c.l.b16 %v3438
      %v3552 = vunpack.c.l.b16 %v3439
      %v3553 = vunpack.c.l.b16 %v3440
      %v3554 = vunpack.c.l.b16 %v3441
      %v3555 = vunpack.c.l.b16 %v3442
      %v3556 = vunpack.c.l.b16 %v3443
      %v3557 = vunpack.c.l.b16 %v3444
      %v3558 = vunpack.c.l.b16 %v3445
      %v3559 = vunpack.c.l.b16 %v3446
      %v3560 = vunpack.c.l.b16 %v3447
      %v3561 = vunpack.c.l.b16 %v3448
      %v3562 = vunpack.c.l.b16 %v3449
      %v3563 = vunpack.c.l.b16 %v3450
      %v3564 = vunpack.c.l.b16 %v3451
      %v3565 = vunpack.c.l.b16 %v3452
      %v3566 = vunpack.c.l.b16 %v3453
      %v3567 = vunpack.c.l.b16 %v3454
      %v3568 = vunpack.c.l.b16 %v3455
      %v3569 = vunpack.c.l.b16 %v3456
      %v3570 = vunpack.c.l.b16 %v3457
      %v3571 = vunpack.c.l.b16 %v3458
      %v3572 = vunpack.c.l.b16 %v3459
      %v3573 = vunpack.c.l.b16 %v3460
      %v3574 = vunpack.c.l.b16 %v3461
      %v3575 = vunpack.c.l.b16 %v3462
      %v3576 = vunpack.c.l.b16 %v3463
      %v3577 = vunpack.c.l.b16 %v3464
      %v3578 = vunpack.c.l.b16 %v3465
      %v3579 = vunpack.c.l.b16 %v3466
      %v3580 = vunpack.c.l.b16 %v3467
      %v3581 = vunpack.c.l.b16 %v3468
      %v3582 = vunpack.c.l.b16 %v3469
      %v3583 = vunpack.c.l.b16 %v3470
      %v3584 = vunpack.c.l.b16 %v3471
      %v3585 = vunpack.c.l.b16 %v3472
      %v3586 = vunpack.c.l.b16 %v3473
      %v3587 = vunpack.c.l.b16 %v3474
      %v3588 = vpack.c.b16 %v3552, %v3551
      %v3589 = vpack.c.b16 %v3554, %v3553
      %v3590 = vpack.c.b16 %v3556, %v3555
      %v3591 = vpack.c.b16 %v3558, %v3557
      %v3592 = vpack.c.b16 %v3560, %v3559
      %v3593 = vpack.c.b16 %v3562, %v3561
      %v3594 = vpack.c.b16 %v3564, %v3563
      %v3595 = vpack.c.b16 %v3566, %v3565
      %v3596 = vpack.c.b16 %v3568, %v3567
      %v3597 = vpack.c.b16 %v3570, %v3569
      %v3598 = vpack.c.b16 %v3572, %v3571
      %v3599 = vpack.c.b16 %v3574, %v3573
      %v3600 = vpack.c.b16 %v3576, %v3575
      %v3601 = vpack.c.b16 %v3578, %v3577
      %v3602 = vpack.c.b16 %v3580, %v3579
      %v3603 = vpack.c.b16 %v3582, %v3581
      %v3604 = vpack.c.b16 %v3584, %v3583
      %v3605 = vpack.c.b16 %v3586, %v3585
      %v3606 = vpack.c.b16 %v3587, %v3587
      %v3608 = vshrl.u32 %v3588, 16
      %v3610 = vshll.u32 %v3588, 16
      %v3612 = vrot.slane %v3610, 1
      %v3613 = vor.u32 %v3608, %v3612
      %v3615 = vshll.u32 %v3589, 16
      %v3617 = vrot.slane %v3615, 1
      %v3618 = vsel %vm1356, %v3613, %v3617
      %v3619 = vshrl.u32 %v3589, 16
      %v3621 = vor.u32 %v3619, %v3617
      %v3623 = vshll.u32 %v3590, 16
      %v3625 = vrot.slane %v3623, 1
      %v3626 = vsel %vm1356, %v3621, %v3625
      %v3627 = vshrl.u32 %v3590, 16
      %v3629 = vor.u32 %v3627, %v3625
      %v3631 = vshll.u32 %v3591, 16
      %v3633 = vrot.slane %v3631, 1
      %v3634 = vsel %vm1356, %v3629, %v3633
      %v3635 = vshrl.u32 %v3591, 16
      %v3637 = vor.u32 %v3635, %v3633
      %v3639 = vshll.u32 %v3592, 16
      %v3641 = vrot.slane %v3639, 1
      %v3642 = vsel %vm1356, %v3637, %v3641
      %v3643 = vshrl.u32 %v3592, 16
      %v3645 = vor.u32 %v3643, %v3641
      %v3647 = vshll.u32 %v3593, 16
      %v3649 = vrot.slane %v3647, 1
      %v3650 = vsel %vm1356, %v3645, %v3649
      %v3651 = vshrl.u32 %v3593, 16
      %v3653 = vor.u32 %v3651, %v3649
      %v3655 = vshll.u32 %v3594, 16
      %v3657 = vrot.slane %v3655, 1
      %v3658 = vsel %vm1356, %v3653, %v3657
      %v3659 = vshrl.u32 %v3594, 16
      %v3661 = vor.u32 %v3659, %v3657
      %v3663 = vshll.u32 %v3595, 16
      %v3665 = vrot.slane %v3663, 1
      %v3666 = vsel %vm1356, %v3661, %v3665
      %v3667 = vshrl.u32 %v3595, 16
      %v3669 = vor.u32 %v3667, %v3665
      %v3671 = vshll.u32 %v3596, 16
      %v3673 = vrot.slane %v3671, 1
      %v3674 = vsel %vm1356, %v3669, %v3673
      %v3675 = vshrl.u32 %v3596, 16
      %v3677 = vor.u32 %v3675, %v3673
      %v3679 = vshll.u32 %v3597, 16
      %v3681 = vrot.slane %v3679, 1
      %v3682 = vsel %vm1356, %v3677, %v3681
      %v3683 = vshrl.u32 %v3597, 16
      %v3685 = vor.u32 %v3683, %v3681
      %v3687 = vshll.u32 %v3598, 16
      %v3689 = vrot.slane %v3687, 1
      %v3690 = vsel %vm1356, %v3685, %v3689
      %v3691 = vshrl.u32 %v3598, 16
      %v3693 = vor.u32 %v3691, %v3689
      %v3695 = vshll.u32 %v3599, 16
      %v3697 = vrot.slane %v3695, 1
      %v3698 = vsel %vm1356, %v3693, %v3697
      %v3699 = vshrl.u32 %v3599, 16
      %v3701 = vor.u32 %v3699, %v3697
      %v3703 = vshll.u32 %v3600, 16
      %v3705 = vrot.slane %v3703, 1
      %v3706 = vsel %vm1356, %v3701, %v3705
      %v3707 = vshrl.u32 %v3600, 16
      %v3709 = vor.u32 %v3707, %v3705
      %v3711 = vshll.u32 %v3601, 16
      %v3713 = vrot.slane %v3711, 1
      %v3714 = vsel %vm1356, %v3709, %v3713
      %v3715 = vshrl.u32 %v3601, 16
      %v3717 = vor.u32 %v3715, %v3713
      %v3719 = vshll.u32 %v3602, 16
      %v3721 = vrot.slane %v3719, 1
      %v3722 = vsel %vm1356, %v3717, %v3721
      %v3723 = vshrl.u32 %v3602, 16
      %v3725 = vor.u32 %v3723, %v3721
      %v3727 = vshll.u32 %v3603, 16
      %v3729 = vrot.slane %v3727, 1
      %v3730 = vsel %vm1356, %v3725, %v3729
      %v3731 = vshrl.u32 %v3603, 16
      %v3733 = vor.u32 %v3731, %v3729
      %v3735 = vshll.u32 %v3604, 16
      %v3737 = vrot.slane %v3735, 1
      %v3738 = vsel %vm1356, %v3733, %v3737
      %v3739 = vshrl.u32 %v3604, 16
      %v3741 = vor.u32 %v3739, %v3737
      %v3743 = vshll.u32 %v3605, 16
      %v3745 = vrot.slane %v3743, 1
      %v3746 = vsel %vm1356, %v3741, %v3745
      %v3747 = vshrl.u32 %v3605, 16
      %v3749 = vor.u32 %v3747, %v3745
      %v3751 = vshll.u32 %v3606, 16
      %v3753 = vrot.slane %v3751, 1
      %v3754 = vsel %vm1356, %v3749, %v3753
      %v3755 = vshrl.u32 %v3606, 16
      %v3758 = vsel %vm379, %v3618, 0
      %v3761 = vsel %vm379, %v3626, 0
      %v3764 = vsel %vm379, %v3634, 0
      %v3767 = vsel %vm379, %v3642, 0
      %v3770 = vsel %vm379, %v3650, 0
      %v3773 = vsel %vm379, %v3658, 0
      %v3776 = vsel %vm379, %v3666, 0
      %v3779 = vsel %vm379, %v3674, 0
      %v3782 = vsel %vm379, %v3682, 0
      %v3785 = vsel %vm379, %v3690, 0
      %v3788 = vsel %vm379, %v3698, 0
      %v3791 = vsel %vm379, %v3706, 0
      %v3794 = vsel %vm379, %v3714, 0
      %v3797 = vsel %vm379, %v3722, 0
      %v3800 = vsel %vm379, %v3730, 0
      %v3803 = vsel %vm379, %v3738, 0
      %v3806 = vsel %vm379, %v3746, 0
      %v3809 = vsel %vm379, %v3754, 0
      %v3812 = vsel %vm379, %v3755, 0
      %v3815 = vsel %vm437, %v3513, 0
      %3817 = vmatprep.subr.bf16.mxu0 0
      %3818 = vmatpush1.bf16.msra.mxu0 0
      %3819 = vmatprep.subr.bf16.mxu0 0
      %3820 = vmatpush1.bf16.msra.mxu0 0
      %3821 = vmatprep.subr.bf16.mxu0 0
      %3822 = vmatpush1.bf16.msra.mxu0 0
      %3823 = vmatprep.subr.bf16.mxu0 0
      %3824 = vmatpush1.bf16.msra.mxu0 0
      %3825 = vmatprep.subr.bf16.mxu0 0
      %3826 = vmatpush1.bf16.msra.mxu0 0
      %3827 = vmatprep.subr.bf16.mxu0 0
      %3828 = vmatpush1.bf16.msra.mxu0 0
      %3829 = vmatprep.subr.bf16.mxu0 0
      %3830 = vmatpush1.bf16.msra.mxu0 0
      %3831 = vmatprep.subr.bf16.mxu0 0
      %3832 = vmatpush1.bf16.msra.mxu0 %v3815
      %3833 = vmatprep.subr.bf16.mxu0 0
      %3834 = vmatpush2.bf16.msra.mxu0 0
      %3835 = vmatprep.subr.bf16.mxu0 0
      %3836 = vmatpush2.bf16.msra.mxu0 0
      %3837 = vmatprep.subr.bf16.mxu0 0
      %3838 = vmatpush2.bf16.msra.mxu0 0
      %3839 = vmatprep.subr.bf16.mxu0 0
      %3840 = vmatpush2.bf16.msra.mxu0 0
      %3841 = vmatprep.subr.bf16.mxu0 0
      %3842 = vmatpush2.bf16.msra.mxu0 0
      %3843 = vmatprep.subr.bf16.mxu0 0
      %3844 = vmatpush2.bf16.msra.mxu0 0
      %3845 = vmatprep.subr.bf16.mxu0 0
      %3846 = vmatpush2.bf16.msra.mxu0 0
      %3847 = vmatprep.subr.bf16.mxu0 0
      %3848 = vmatpush2.bf16.msra.mxu0 0
      %3849 = vmatprep.mubr.bf16.mxu0 0
      %3850 = vmatmul.mubr.bf16.gmra.mxu0 %v3758
      %v3851 = vpop.f32.mrf.mxu0
      %v3852 = vadd.f32 0.0, %v3851
      %v3853 = vpop.f32.mrf.mxu0
      %v3854 = vpop.f32.mrf.mxu0
      %v3855 = vadd.f32 0.0, %v3854
      %v3856 = vpop.f32.mrf.mxu0
      %3857 = vmatprep.mubr.bf16.mxu0 0
      %3858 = vmatmul.mubr.bf16.gmra.mxu0 %v3761
      %v3859 = vpop.f32.mrf.mxu0
      %v3860 = vadd.f32 0.0, %v3859
      %v3861 = vpop.f32.mrf.mxu0
      %v3862 = vpop.f32.mrf.mxu0
      %v3863 = vadd.f32 0.0, %v3862
      %v3864 = vpop.f32.mrf.mxu0
      %3865 = vmatprep.mubr.bf16.mxu0 0
      %3866 = vmatmul.mubr.bf16.gmra.mxu0 %v3764
      %v3867 = vpop.f32.mrf.mxu0
      %v3868 = vadd.f32 0.0, %v3867
      %v3869 = vpop.f32.mrf.mxu0
      %v3870 = vpop.f32.mrf.mxu0
      %v3871 = vadd.f32 0.0, %v3870
      %v3872 = vpop.f32.mrf.mxu0
      %3873 = vmatprep.mubr.bf16.mxu0 0
      %3874 = vmatmul.mubr.bf16.gmra.mxu0 %v3767
      %v3875 = vpop.f32.mrf.mxu0
      %v3876 = vadd.f32 0.0, %v3875
      %v3877 = vpop.f32.mrf.mxu0
      %v3878 = vpop.f32.mrf.mxu0
      %v3879 = vadd.f32 0.0, %v3878
      %v3880 = vpop.f32.mrf.mxu0
      %3881 = vmatprep.mubr.bf16.mxu0 0
      %3882 = vmatmul.mubr.bf16.gmra.mxu0 %v3770
      %v3883 = vpop.f32.mrf.mxu0
      %v3884 = vadd.f32 0.0, %v3883
      %v3885 = vpop.f32.mrf.mxu0
      %v3886 = vpop.f32.mrf.mxu0
      %v3887 = vadd.f32 0.0, %v3886
      %v3888 = vpop.f32.mrf.mxu0
      %3889 = vmatprep.mubr.bf16.mxu0 0
      %3890 = vmatmul.mubr.bf16.gmra.mxu0 %v3773
      %v3891 = vpop.f32.mrf.mxu0
      %v3892 = vadd.f32 0.0, %v3891
      %v3893 = vpop.f32.mrf.mxu0
      %v3894 = vpop.f32.mrf.mxu0
      %v3895 = vadd.f32 0.0, %v3894
      %v3896 = vpop.f32.mrf.mxu0
      %3897 = vmatprep.mubr.bf16.mxu0 0
      %3898 = vmatmul.mubr.bf16.gmra.mxu0 %v3776
      %v3899 = vpop.f32.mrf.mxu0
      %v3900 = vadd.f32 0.0, %v3899
      %v3901 = vpop.f32.mrf.mxu0
      %v3902 = vpop.f32.mrf.mxu0
      %v3903 = vadd.f32 0.0, %v3902
      %v3904 = vpop.f32.mrf.mxu0
      %3905 = vmatprep.mubr.bf16.mxu0 0
      %3906 = vmatmul.mubr.bf16.gmra.mxu0 %v3779
      %v3907 = vpop.f32.mrf.mxu0
      %v3908 = vadd.f32 0.0, %v3907
      %v3909 = vpop.f32.mrf.mxu0
      %v3910 = vpop.f32.mrf.mxu0
      %v3911 = vadd.f32 0.0, %v3910
      %v3912 = vpop.f32.mrf.mxu0
      %3913 = vmatprep.mubr.bf16.mxu0 0
      %3914 = vmatmul.mubr.bf16.gmra.mxu0 %v3782
      %v3915 = vpop.f32.mrf.mxu0
      %v3916 = vadd.f32 0.0, %v3915
      %v3917 = vpop.f32.mrf.mxu0
      %v3918 = vpop.f32.mrf.mxu0
      %v3919 = vadd.f32 0.0, %v3918
      %v3920 = vpop.f32.mrf.mxu0
      %3921 = vmatprep.mubr.bf16.mxu0 0
      %3922 = vmatmul.mubr.bf16.gmra.mxu0 %v3785
      %v3923 = vpop.f32.mrf.mxu0
      %v3924 = vadd.f32 0.0, %v3923
      %v3925 = vpop.f32.mrf.mxu0
      %v3926 = vpop.f32.mrf.mxu0
      %v3927 = vadd.f32 0.0, %v3926
      %v3928 = vpop.f32.mrf.mxu0
      %3929 = vmatprep.mubr.bf16.mxu0 0
      %3930 = vmatmul.mubr.bf16.gmra.mxu0 %v3788
      %v3931 = vpop.f32.mrf.mxu0
      %v3932 = vadd.f32 0.0, %v3931
      %v3933 = vpop.f32.mrf.mxu0
      %v3934 = vpop.f32.mrf.mxu0
      %v3935 = vadd.f32 0.0, %v3934
      %v3936 = vpop.f32.mrf.mxu0
      %3937 = vmatprep.mubr.bf16.mxu0 0
      %3938 = vmatmul.mubr.bf16.gmra.mxu0 %v3791
      %v3939 = vpop.f32.mrf.mxu0
      %v3940 = vadd.f32 0.0, %v3939
      %v3941 = vpop.f32.mrf.mxu0
      %v3942 = vpop.f32.mrf.mxu0
      %v3943 = vadd.f32 0.0, %v3942
      %v3944 = vpop.f32.mrf.mxu0
      %3945 = vmatprep.mubr.bf16.mxu0 0
      %3946 = vmatmul.mubr.bf16.gmra.mxu0 %v3794
      %v3947 = vpop.f32.mrf.mxu0
      %v3948 = vadd.f32 0.0, %v3947
      %v3949 = vpop.f32.mrf.mxu0
      %v3950 = vpop.f32.mrf.mxu0
      %v3951 = vadd.f32 0.0, %v3950
      %v3952 = vpop.f32.mrf.mxu0
      %3953 = vmatprep.mubr.bf16.mxu0 0
      %3954 = vmatmul.mubr.bf16.gmra.mxu0 %v3797
      %v3955 = vpop.f32.mrf.mxu0
      %v3956 = vadd.f32 0.0, %v3955
      %v3957 = vpop.f32.mrf.mxu0
      %v3958 = vpop.f32.mrf.mxu0
      %v3959 = vadd.f32 0.0, %v3958
      %v3960 = vpop.f32.mrf.mxu0
      %3961 = vmatprep.mubr.bf16.mxu0 0
      %3962 = vmatmul.mubr.bf16.gmra.mxu0 %v3800
      %v3963 = vpop.f32.mrf.mxu0
      %v3964 = vadd.f32 0.0, %v3963
      %v3965 = vpop.f32.mrf.mxu0
      %v3966 = vpop.f32.mrf.mxu0
      %v3967 = vadd.f32 0.0, %v3966
      %v3968 = vpop.f32.mrf.mxu0
      %3969 = vmatprep.mubr.bf16.mxu0 0
      %3970 = vmatmul.mubr.bf16.gmra.mxu0 %v3803
      %v3971 = vpop.f32.mrf.mxu0
      %v3972 = vadd.f32 0.0, %v3971
      %v3973 = vpop.f32.mrf.mxu0
      %v3974 = vpop.f32.mrf.mxu0
      %v3975 = vadd.f32 0.0, %v3974
      %v3976 = vpop.f32.mrf.mxu0
      %3977 = vmatprep.mubr.bf16.mxu0 0
      %3978 = vmatmul.mubr.bf16.gmra.mxu0 %v3806
      %v3979 = vpop.f32.mrf.mxu0
      %v3980 = vadd.f32 0.0, %v3979
      %v3981 = vpop.f32.mrf.mxu0
      %v3982 = vpop.f32.mrf.mxu0
      %v3983 = vadd.f32 0.0, %v3982
      %v3984 = vpop.f32.mrf.mxu0
      %3985 = vmatprep.mubr.bf16.mxu0 0
      %3986 = vmatmul.mubr.bf16.gmra.mxu0 %v3809
      %v3987 = vpop.f32.mrf.mxu0
      %v3988 = vadd.f32 0.0, %v3987
      %v3989 = vpop.f32.mrf.mxu0
      %v3990 = vpop.f32.mrf.mxu0
      %v3991 = vadd.f32 0.0, %v3990
      %v3992 = vpop.f32.mrf.mxu0
      %3993 = vmatprep.mubr.bf16.mxu0 0
      %3994 = vmatmul.mubr.bf16.gmra.mxu0 %v3812
      %v3995 = vpop.f32.mrf.mxu0
      %v3996 = vadd.f32 0.0, %v3995
      %v3997 = vpop.f32.mrf.mxu0
      %v3998 = vpop.f32.mrf.mxu0
      %v3999 = vpop.f32.mrf.mxu0
      %4000 = vdwg.mxu0
      %v4001 = vadd.f32 %v3475, %v3852
      %v4002 = vadd.f32 %v3476, %v3855
      %v4003 = vadd.f32 %v3477, %v3860
      %v4004 = vadd.f32 %v3478, %v3863
      %v4005 = vadd.f32 %v3479, %v3868
      %v4006 = vadd.f32 %v3480, %v3871
      %v4007 = vadd.f32 %v3481, %v3876
      %v4008 = vadd.f32 %v3482, %v3879
      %v4009 = vadd.f32 %v3483, %v3884
      %v4010 = vadd.f32 %v3484, %v3887
      %v4011 = vadd.f32 %v3485, %v3892
      %v4012 = vadd.f32 %v3486, %v3895
      %v4013 = vadd.f32 %v3487, %v3900
      %v4014 = vadd.f32 %v3488, %v3903
      %v4015 = vadd.f32 %v3489, %v3908
      %v4016 = vadd.f32 %v3490, %v3911
      %v4017 = vadd.f32 %v3491, %v3916
      %v4018 = vadd.f32 %v3492, %v3919
      %v4019 = vadd.f32 %v3493, %v3924
      %v4020 = vadd.f32 %v3494, %v3927
      %v4021 = vadd.f32 %v3495, %v3932
      %v4022 = vadd.f32 %v3496, %v3935
      %v4023 = vadd.f32 %v3497, %v3940
      %v4024 = vadd.f32 %v3498, %v3943
      %v4025 = vadd.f32 %v3499, %v3948
      %v4026 = vadd.f32 %v3500, %v3951
      %v4027 = vadd.f32 %v3501, %v3956
      %v4028 = vadd.f32 %v3502, %v3959
      %v4029 = vadd.f32 %v3503, %v3964
      %v4030 = vadd.f32 %v3504, %v3967
      %v4031 = vadd.f32 %v3505, %v3972
      %v4032 = vadd.f32 %v3506, %v3975
      %v4033 = vadd.f32 %v3507, %v3980
      %v4034 = vadd.f32 %v3508, %v3983
      %v4035 = vadd.f32 %v3509, %v3988
      %v4036 = vadd.f32 %v3510, %v3991
      %v4037 = vadd.f32 %v3511, %v3996
      %4038 = vst.msk [vmem:[#allocation2] sm:$0xff] %vm172, %v4001
      %4039 = vst.msk [vmem:[#allocation2 + $0x8] sm:$0xff] %vm172, %v4002
      %4040 = vst.msk [vmem:[#allocation2 + $0x10] sm:$0xff] %vm172, %v4003
      %4041 = vst.msk [vmem:[#allocation2 + $0x18] sm:$0xff] %vm172, %v4004
      %4042 = vst.msk [vmem:[#allocation2 + $0x20] sm:$0xff] %vm172, %v4005
      %4043 = vst.msk [vmem:[#allocation2 + $0x28] sm:$0xff] %vm172, %v4006
      %4044 = vst.msk [vmem:[#allocation2 + $0x30] sm:$0xff] %vm172, %v4007
      %4045 = vst.msk [vmem:[#allocation2 + $0x38] sm:$0xff] %vm172, %v4008
      %4046 = vst.msk [vmem:[#allocation2 + $0x40] sm:$0xff] %vm172, %v4009
      %4047 = vst.msk [vmem:[#allocation2 + $0x48] sm:$0xff] %vm172, %v4010
      %4048 = vst.msk [vmem:[#allocation2 + $0x50] sm:$0xff] %vm172, %v4011
      %4049 = vst.msk [vmem:[#allocation2 + $0x58] sm:$0xff] %vm172, %v4012
      %4050 = vst.msk [vmem:[#allocation2 + $0x60] sm:$0xff] %vm172, %v4013
      %4051 = vst.msk [vmem:[#allocation2 + $0x68] sm:$0xff] %vm172, %v4014
      %4052 = vst.msk [vmem:[#allocation2 + $0x70] sm:$0xff] %vm172, %v4015
      %4053 = vst.msk [vmem:[#allocation2 + $0x78] sm:$0xff] %vm172, %v4016
      %4054 = vst.msk [vmem:[#allocation2 + $0x80] sm:$0xff] %vm172, %v4017
      %4055 = vst.msk [vmem:[#allocation2 + $0x88] sm:$0xff] %vm172, %v4018
      %4056 = vst.msk [vmem:[#allocation2 + $0x90] sm:$0xff] %vm172, %v4019
      %4057 = vst.msk [vmem:[#allocation2 + $0x98] sm:$0xff] %vm172, %v4020
      %4058 = vst.msk [vmem:[#allocation2 + $0xa0] sm:$0xff] %vm172, %v4021
      %4059 = vst.msk [vmem:[#allocation2 + $0xa8] sm:$0xff] %vm172, %v4022
      %4060 = vst.msk [vmem:[#allocation2 + $0xb0] sm:$0xff] %vm172, %v4023
      %4061 = vst.msk [vmem:[#allocation2 + $0xb8] sm:$0xff] %vm172, %v4024
      %4062 = vst.msk [vmem:[#allocation2 + $0xc0] sm:$0xff] %vm172, %v4025
      %4063 = vst.msk [vmem:[#allocation2 + $0xc8] sm:$0xff] %vm172, %v4026
      %4064 = vst.msk [vmem:[#allocation2 + $0xd0] sm:$0xff] %vm172, %v4027
      %4065 = vst.msk [vmem:[#allocation2 + $0xd8] sm:$0xff] %vm172, %v4028
      %4066 = vst.msk [vmem:[#allocation2 + $0xe0] sm:$0xff] %vm172, %v4029
      %4067 = vst.msk [vmem:[#allocation2 + $0xe8] sm:$0xff] %vm172, %v4030
      %4068 = vst.msk [vmem:[#allocation2 + $0xf0] sm:$0xff] %vm172, %v4031
      %4069 = vst.msk [vmem:[#allocation2 + $0xf8] sm:$0xff] %vm172, %v4032
      %4070 = vst.msk [vmem:[#allocation2 + $0x100] sm:$0xff] %vm172, %v4033
      %4071 = vst.msk [vmem:[#allocation2 + $0x108] sm:$0xff] %vm172, %v4034
      %4072 = vst.msk [vmem:[#allocation2 + $0x110] sm:$0xff] %vm172, %v4035
      %4073 = vst.msk [vmem:[#allocation2 + $0x118] sm:$0xff] %vm172, %v4036
      %4074 = vst.msk [vmem:[#allocation2 + $0x120] sm:$0x1] %vm209, %v4037
      %v4075 = vld [vmem:[%s699 + $0x8] sm:$0xf]
      %v4076 = vld [vmem:[%s699 + $0xc] sm:$0xf]
      %v4077 = vld [vmem:[%s699 + $0x10] sm:$0xf]
      %v4078 = vld [vmem:[%s699 + $0x14] sm:$0xf]
      %v4079 = vld [vmem:[%s699 + $0x18] sm:$0xf]
      %v4080 = vld [vmem:[%s699 + $0x1c] sm:$0xf]
      %v4081 = vld [vmem:[%s699 + $0x20] sm:$0xf]
      %v4082 = vld [vmem:[%s699 + $0x24] sm:$0xf]
      %v4083 = vld [vmem:[%s699 + $0x28] sm:$0xf]
      %v4084 = vld [vmem:[%s699 + $0x2c] sm:$0xf]
      %v4085 = vld [vmem:[%s699 + $0x30] sm:$0xf]
      %v4086 = vld [vmem:[%s699 + $0x34] sm:$0xf]
      %v4087 = vld [vmem:[%s699 + $0x38] sm:$0xf]
      %v4088 = vld [vmem:[%s699 + $0x3c] sm:$0xf]
      %v4089 = vld [vmem:[%s699 + $0x40] sm:$0xf]
      %v4090 = vld [vmem:[%s699 + $0x44] sm:$0xf]
      %v4091 = vld [vmem:[%s699 + $0x48] sm:$0xf]
      %v4092 = vld [vmem:[%s699 + $0x4c] sm:$0xf]
      %v4093 = vld [vmem:[%s699 + $0x50] sm:$0xf]
      %v4094 = vld [vmem:[%s699 + $0x54] sm:$0xf]
      %v4095 = vld [vmem:[%s699 + $0x58] sm:$0xf]
      %v4096 = vld [vmem:[%s699 + $0x5c] sm:$0xf]
      %v4097 = vld [vmem:[%s699 + $0x60] sm:$0xf]
      %v4098 = vld [vmem:[%s699 + $0x64] sm:$0xf]
      %v4099 = vld [vmem:[%s699 + $0x68] sm:$0xf]
      %v4100 = vld [vmem:[%s699 + $0x6c] sm:$0xf]
      %v4101 = vld [vmem:[%s699 + $0x70] sm:$0xf]
      %v4102 = vld [vmem:[%s699 + $0x74] sm:$0xf]
      %v4103 = vld [vmem:[%s699 + $0x78] sm:$0xf]
      %v4104 = vld [vmem:[%s699 + $0x7c] sm:$0xf]
      %v4105 = vld [vmem:[%s699 + $0x80] sm:$0xf]
      %v4106 = vld [vmem:[%s699 + $0x84] sm:$0xf]
      %v4107 = vld [vmem:[%s699 + $0x88] sm:$0xf]
      %v4108 = vld [vmem:[%s699 + $0x8c] sm:$0xf]
      %v4109 = vld [vmem:[%s699 + $0x90] sm:$0xf]
      %v4110 = vld [vmem:[%s699 + $0x94] sm:$0xf]
      %v4111 = vld [vmem:[%s699 + $0x98] sm:$0x1]
      %v4112 = vld [vmem:[#allocation2] sm:$0xff]
      %v4113 = vld [vmem:[#allocation2 + $0x8] sm:$0xff]
      %v4114 = vld [vmem:[#allocation2 + $0x10] sm:$0xff]
      %v4115 = vld [vmem:[#allocation2 + $0x18] sm:$0xff]
      %v4116 = vld [vmem:[#allocation2 + $0x20] sm:$0xff]
      %v4117 = vld [vmem:[#allocation2 + $0x28] sm:$0xff]
      %v4118 = vld [vmem:[#allocation2 + $0x30] sm:$0xff]
      %v4119 = vld [vmem:[#allocation2 + $0x38] sm:$0xff]
      %v4120 = vld [vmem:[#allocation2 + $0x40] sm:$0xff]
      %v4121 = vld [vmem:[#allocation2 + $0x48] sm:$0xff]
      %v4122 = vld [vmem:[#allocation2 + $0x50] sm:$0xff]
      %v4123 = vld [vmem:[#allocation2 + $0x58] sm:$0xff]
      %v4124 = vld [vmem:[#allocation2 + $0x60] sm:$0xff]
      %v4125 = vld [vmem:[#allocation2 + $0x68] sm:$0xff]
      %v4126 = vld [vmem:[#allocation2 + $0x70] sm:$0xff]
      %v4127 = vld [vmem:[#allocation2 + $0x78] sm:$0xff]
      %v4128 = vld [vmem:[#allocation2 + $0x80] sm:$0xff]
      %v4129 = vld [vmem:[#allocation2 + $0x88] sm:$0xff]
      %v4130 = vld [vmem:[#allocation2 + $0x90] sm:$0xff]
      %v4131 = vld [vmem:[#allocation2 + $0x98] sm:$0xff]
      %v4132 = vld [vmem:[#allocation2 + $0xa0] sm:$0xff]
      %v4133 = vld [vmem:[#allocation2 + $0xa8] sm:$0xff]
      %v4134 = vld [vmem:[#allocation2 + $0xb0] sm:$0xff]
      %v4135 = vld [vmem:[#allocation2 + $0xb8] sm:$0xff]
      %v4136 = vld [vmem:[#allocation2 + $0xc0] sm:$0xff]
      %v4137 = vld [vmem:[#allocation2 + $0xc8] sm:$0xff]
      %v4138 = vld [vmem:[#allocation2 + $0xd0] sm:$0xff]
      %v4139 = vld [vmem:[#allocation2 + $0xd8] sm:$0xff]
      %v4140 = vld [vmem:[#allocation2 + $0xe0] sm:$0xff]
      %v4141 = vld [vmem:[#allocation2 + $0xe8] sm:$0xff]
      %v4142 = vld [vmem:[#allocation2 + $0xf0] sm:$0xff]
      %v4143 = vld [vmem:[#allocation2 + $0xf8] sm:$0xff]
      %v4144 = vld [vmem:[#allocation2 + $0x100] sm:$0xff]
      %v4145 = vld [vmem:[#allocation2 + $0x108] sm:$0xff]
      %v4146 = vld [vmem:[#allocation2 + $0x110] sm:$0xff]
      %v4147 = vld [vmem:[#allocation2 + $0x118] sm:$0xff]
      %v4148 = vld [vmem:[#allocation2 + $0x120] sm:$0x1]
      %s4149 = scalar_lea.vmem %s1, 28
      %v4150 = vld [vmem:[%s4149] sm:$0xf]
      %v4188 = vunpack.c.l.b16 %v4075
      %v4189 = vunpack.c.l.b16 %v4076
      %v4190 = vunpack.c.l.b16 %v4077
      %v4191 = vunpack.c.l.b16 %v4078
      %v4192 = vunpack.c.l.b16 %v4079
      %v4193 = vunpack.c.l.b16 %v4080
      %v4194 = vunpack.c.l.b16 %v4081
      %v4195 = vunpack.c.l.b16 %v4082
      %v4196 = vunpack.c.l.b16 %v4083
      %v4197 = vunpack.c.l.b16 %v4084
      %v4198 = vunpack.c.l.b16 %v4085
      %v4199 = vunpack.c.l.b16 %v4086
      %v4200 = vunpack.c.l.b16 %v4087
      %v4201 = vunpack.c.l.b16 %v4088
      %v4202 = vunpack.c.l.b16 %v4089
      %v4203 = vunpack.c.l.b16 %v4090
      %v4204 = vunpack.c.l.b16 %v4091
      %v4205 = vunpack.c.l.b16 %v4092
      %v4206 = vunpack.c.l.b16 %v4093
      %v4207 = vunpack.c.l.b16 %v4094
      %v4208 = vunpack.c.l.b16 %v4095
      %v4209 = vunpack.c.l.b16 %v4096
      %v4210 = vunpack.c.l.b16 %v4097
      %v4211 = vunpack.c.l.b16 %v4098
      %v4212 = vunpack.c.l.b16 %v4099
      %v4213 = vunpack.c.l.b16 %v4100
      %v4214 = vunpack.c.l.b16 %v4101
      %v4215 = vunpack.c.l.b16 %v4102
      %v4216 = vunpack.c.l.b16 %v4103
      %v4217 = vunpack.c.l.b16 %v4104
      %v4218 = vunpack.c.l.b16 %v4105
      %v4219 = vunpack.c.l.b16 %v4106
      %v4220 = vunpack.c.l.b16 %v4107
      %v4221 = vunpack.c.l.b16 %v4108
      %v4222 = vunpack.c.l.b16 %v4109
      %v4223 = vunpack.c.l.b16 %v4110
      %v4224 = vunpack.c.l.b16 %v4111
      %v4225 = vpack.c.b16 %v4189, %v4188
      %v4226 = vpack.c.b16 %v4191, %v4190
      %v4227 = vpack.c.b16 %v4193, %v4192
      %v4228 = vpack.c.b16 %v4195, %v4194
      %v4229 = vpack.c.b16 %v4197, %v4196
      %v4230 = vpack.c.b16 %v4199, %v4198
      %v4231 = vpack.c.b16 %v4201, %v4200
      %v4232 = vpack.c.b16 %v4203, %v4202
      %v4233 = vpack.c.b16 %v4205, %v4204
      %v4234 = vpack.c.b16 %v4207, %v4206
      %v4235 = vpack.c.b16 %v4209, %v4208
      %v4236 = vpack.c.b16 %v4211, %v4210
      %v4237 = vpack.c.b16 %v4213, %v4212
      %v4238 = vpack.c.b16 %v4215, %v4214
      %v4239 = vpack.c.b16 %v4217, %v4216
      %v4240 = vpack.c.b16 %v4219, %v4218
      %v4241 = vpack.c.b16 %v4221, %v4220
      %v4242 = vpack.c.b16 %v4223, %v4222
      %v4243 = vpack.c.b16 %v4224, %v4224
      %v4245 = vshrl.u32 %v4225, 16
      %v4247 = vshll.u32 %v4225, 16
      %v4249 = vrot.slane %v4247, 1
      %v4250 = vor.u32 %v4245, %v4249
      %v4252 = vshll.u32 %v4226, 16
      %v4254 = vrot.slane %v4252, 1
      %v4255 = vsel %vm1356, %v4250, %v4254
      %v4256 = vshrl.u32 %v4226, 16
      %v4258 = vor.u32 %v4256, %v4254
      %v4260 = vshll.u32 %v4227, 16
      %v4262 = vrot.slane %v4260, 1
      %v4263 = vsel %vm1356, %v4258, %v4262
      %v4264 = vshrl.u32 %v4227, 16
      %v4266 = vor.u32 %v4264, %v4262
      %v4268 = vshll.u32 %v4228, 16
      %v4270 = vrot.slane %v4268, 1
      %v4271 = vsel %vm1356, %v4266, %v4270
      %v4272 = vshrl.u32 %v4228, 16
      %v4274 = vor.u32 %v4272, %v4270
      %v4276 = vshll.u32 %v4229, 16
      %v4278 = vrot.slane %v4276, 1
      %v4279 = vsel %vm1356, %v4274, %v4278
      %v4280 = vshrl.u32 %v4229, 16
      %v4282 = vor.u32 %v4280, %v4278
      %v4284 = vshll.u32 %v4230, 16
      %v4286 = vrot.slane %v4284, 1
      %v4287 = vsel %vm1356, %v4282, %v4286
      %v4288 = vshrl.u32 %v4230, 16
      %v4290 = vor.u32 %v4288, %v4286
      %v4292 = vshll.u32 %v4231, 16
      %v4294 = vrot.slane %v4292, 1
      %v4295 = vsel %vm1356, %v4290, %v4294
      %v4296 = vshrl.u32 %v4231, 16
      %v4298 = vor.u32 %v4296, %v4294
      %v4300 = vshll.u32 %v4232, 16
      %v4302 = vrot.slane %v4300, 1
      %v4303 = vsel %vm1356, %v4298, %v4302
      %v4304 = vshrl.u32 %v4232, 16
      %v4306 = vor.u32 %v4304, %v4302
      %v4308 = vshll.u32 %v4233, 16
      %v4310 = vrot.slane %v4308, 1
      %v4311 = vsel %vm1356, %v4306, %v4310
      %v4312 = vshrl.u32 %v4233, 16
      %v4314 = vor.u32 %v4312, %v4310
      %v4316 = vshll.u32 %v4234, 16
      %v4318 = vrot.slane %v4316, 1
      %v4319 = vsel %vm1356, %v4314, %v4318
      %v4320 = vshrl.u32 %v4234, 16
      %v4322 = vor.u32 %v4320, %v4318
      %v4324 = vshll.u32 %v4235, 16
      %v4326 = vrot.slane %v4324, 1
      %v4327 = vsel %vm1356, %v4322, %v4326
      %v4328 = vshrl.u32 %v4235, 16
      %v4330 = vor.u32 %v4328, %v4326
      %v4332 = vshll.u32 %v4236, 16
      %v4334 = vrot.slane %v4332, 1
      %v4335 = vsel %vm1356, %v4330, %v4334
      %v4336 = vshrl.u32 %v4236, 16
      %v4338 = vor.u32 %v4336, %v4334
      %v4340 = vshll.u32 %v4237, 16
      %v4342 = vrot.slane %v4340, 1
      %v4343 = vsel %vm1356, %v4338, %v4342
      %v4344 = vshrl.u32 %v4237, 16
      %v4346 = vor.u32 %v4344, %v4342
      %v4348 = vshll.u32 %v4238, 16
      %v4350 = vrot.slane %v4348, 1
      %v4351 = vsel %vm1356, %v4346, %v4350
      %v4352 = vshrl.u32 %v4238, 16
      %v4354 = vor.u32 %v4352, %v4350
      %v4356 = vshll.u32 %v4239, 16
      %v4358 = vrot.slane %v4356, 1
      %v4359 = vsel %vm1356, %v4354, %v4358
      %v4360 = vshrl.u32 %v4239, 16
      %v4362 = vor.u32 %v4360, %v4358
      %v4364 = vshll.u32 %v4240, 16
      %v4366 = vrot.slane %v4364, 1
      %v4367 = vsel %vm1356, %v4362, %v4366
      %v4368 = vshrl.u32 %v4240, 16
      %v4370 = vor.u32 %v4368, %v4366
      %v4372 = vshll.u32 %v4241, 16
      %v4374 = vrot.slane %v4372, 1
      %v4375 = vsel %vm1356, %v4370, %v4374
      %v4376 = vshrl.u32 %v4241, 16
      %v4378 = vor.u32 %v4376, %v4374
      %v4380 = vshll.u32 %v4242, 16
      %v4382 = vrot.slane %v4380, 1
      %v4383 = vsel %vm1356, %v4378, %v4382
      %v4384 = vshrl.u32 %v4242, 16
      %v4386 = vor.u32 %v4384, %v4382
      %v4388 = vshll.u32 %v4243, 16
      %v4390 = vrot.slane %v4388, 1
      %v4391 = vsel %vm1356, %v4386, %v4390
      %v4392 = vshrl.u32 %v4243, 16
      %v4395 = vsel %vm379, %v4255, 0
      %v4398 = vsel %vm379, %v4263, 0
      %v4401 = vsel %vm379, %v4271, 0
      %v4404 = vsel %vm379, %v4279, 0
      %v4407 = vsel %vm379, %v4287, 0
      %v4410 = vsel %vm379, %v4295, 0
      %v4413 = vsel %vm379, %v4303, 0
      %v4416 = vsel %vm379, %v4311, 0
      %v4419 = vsel %vm379, %v4319, 0
      %v4422 = vsel %vm379, %v4327, 0
      %v4425 = vsel %vm379, %v4335, 0
      %v4428 = vsel %vm379, %v4343, 0
      %v4431 = vsel %vm379, %v4351, 0
      %v4434 = vsel %vm379, %v4359, 0
      %v4437 = vsel %vm379, %v4367, 0
      %v4440 = vsel %vm379, %v4375, 0
      %v4443 = vsel %vm379, %v4383, 0
      %v4446 = vsel %vm379, %v4391, 0
      %v4449 = vsel %vm379, %v4392, 0
      %v4452 = vsel %vm437, %v4150, 0
      %4454 = vmatprep.subr.bf16.mxu0 0
      %4455 = vmatpush1.bf16.msra.mxu0 0
      %4456 = vmatprep.subr.bf16.mxu0 0
      %4457 = vmatpush1.bf16.msra.mxu0 0
      %4458 = vmatprep.subr.bf16.mxu0 0
      %4459 = vmatpush1.bf16.msra.mxu0 0
      %4460 = vmatprep.subr.bf16.mxu0 0
      %4461 = vmatpush1.bf16.msra.mxu0 0
      %4462 = vmatprep.subr.bf16.mxu0 0
      %4463 = vmatpush1.bf16.msra.mxu0 0
      %4464 = vmatprep.subr.bf16.mxu0 0
      %4465 = vmatpush1.bf16.msra.mxu0 0
      %4466 = vmatprep.subr.bf16.mxu0 0
      %4467 = vmatpush1.bf16.msra.mxu0 0
      %4468 = vmatprep.subr.bf16.mxu0 0
      %4469 = vmatpush1.bf16.msra.mxu0 %v4452
      %4470 = vmatprep.subr.bf16.mxu0 0
      %4471 = vmatpush2.bf16.msra.mxu0 0
      %4472 = vmatprep.subr.bf16.mxu0 0
      %4473 = vmatpush2.bf16.msra.mxu0 0
      %4474 = vmatprep.subr.bf16.mxu0 0
      %4475 = vmatpush2.bf16.msra.mxu0 0
      %4476 = vmatprep.subr.bf16.mxu0 0
      %4477 = vmatpush2.bf16.msra.mxu0 0
      %4478 = vmatprep.subr.bf16.mxu0 0
      %4479 = vmatpush2.bf16.msra.mxu0 0
      %4480 = vmatprep.subr.bf16.mxu0 0
      %4481 = vmatpush2.bf16.msra.mxu0 0
      %4482 = vmatprep.subr.bf16.mxu0 0
      %4483 = vmatpush2.bf16.msra.mxu0 0
      %4484 = vmatprep.subr.bf16.mxu0 0
      %4485 = vmatpush2.bf16.msra.mxu0 0
      %4486 = vmatprep.mubr.bf16.mxu0 0
      %4487 = vmatmul.mubr.bf16.gmra.mxu0 %v4395
      %v4488 = vpop.f32.mrf.mxu0
      %v4489 = vadd.f32 0.0, %v4488
      %v4490 = vpop.f32.mrf.mxu0
      %v4491 = vpop.f32.mrf.mxu0
      %v4492 = vadd.f32 0.0, %v4491
      %v4493 = vpop.f32.mrf.mxu0
      %4494 = vmatprep.mubr.bf16.mxu0 0
      %4495 = vmatmul.mubr.bf16.gmra.mxu0 %v4398
      %v4496 = vpop.f32.mrf.mxu0
      %v4497 = vadd.f32 0.0, %v4496
      %v4498 = vpop.f32.mrf.mxu0
      %v4499 = vpop.f32.mrf.mxu0
      %v4500 = vadd.f32 0.0, %v4499
      %v4501 = vpop.f32.mrf.mxu0
      %4502 = vmatprep.mubr.bf16.mxu0 0
      %4503 = vmatmul.mubr.bf16.gmra.mxu0 %v4401
      %v4504 = vpop.f32.mrf.mxu0
      %v4505 = vadd.f32 0.0, %v4504
      %v4506 = vpop.f32.mrf.mxu0
      %v4507 = vpop.f32.mrf.mxu0
      %v4508 = vadd.f32 0.0, %v4507
      %v4509 = vpop.f32.mrf.mxu0
      %4510 = vmatprep.mubr.bf16.mxu0 0
      %4511 = vmatmul.mubr.bf16.gmra.mxu0 %v4404
      %v4512 = vpop.f32.mrf.mxu0
      %v4513 = vadd.f32 0.0, %v4512
      %v4514 = vpop.f32.mrf.mxu0
      %v4515 = vpop.f32.mrf.mxu0
      %v4516 = vadd.f32 0.0, %v4515
      %v4517 = vpop.f32.mrf.mxu0
      %4518 = vmatprep.mubr.bf16.mxu0 0
      %4519 = vmatmul.mubr.bf16.gmra.mxu0 %v4407
      %v4520 = vpop.f32.mrf.mxu0
      %v4521 = vadd.f32 0.0, %v4520
      %v4522 = vpop.f32.mrf.mxu0
      %v4523 = vpop.f32.mrf.mxu0
      %v4524 = vadd.f32 0.0, %v4523
      %v4525 = vpop.f32.mrf.mxu0
      %4526 = vmatprep.mubr.bf16.mxu0 0
      %4527 = vmatmul.mubr.bf16.gmra.mxu0 %v4410
      %v4528 = vpop.f32.mrf.mxu0
      %v4529 = vadd.f32 0.0, %v4528
      %v4530 = vpop.f32.mrf.mxu0
      %v4531 = vpop.f32.mrf.mxu0
      %v4532 = vadd.f32 0.0, %v4531
      %v4533 = vpop.f32.mrf.mxu0
      %4534 = vmatprep.mubr.bf16.mxu0 0
      %4535 = vmatmul.mubr.bf16.gmra.mxu0 %v4413
      %v4536 = vpop.f32.mrf.mxu0
      %v4537 = vadd.f32 0.0, %v4536
      %v4538 = vpop.f32.mrf.mxu0
      %v4539 = vpop.f32.mrf.mxu0
      %v4540 = vadd.f32 0.0, %v4539
      %v4541 = vpop.f32.mrf.mxu0
      %4542 = vmatprep.mubr.bf16.mxu0 0
      %4543 = vmatmul.mubr.bf16.gmra.mxu0 %v4416
      %v4544 = vpop.f32.mrf.mxu0
      %v4545 = vadd.f32 0.0, %v4544
      %v4546 = vpop.f32.mrf.mxu0
      %v4547 = vpop.f32.mrf.mxu0
      %v4548 = vadd.f32 0.0, %v4547
      %v4549 = vpop.f32.mrf.mxu0
      %4550 = vmatprep.mubr.bf16.mxu0 0
      %4551 = vmatmul.mubr.bf16.gmra.mxu0 %v4419
      %v4552 = vpop.f32.mrf.mxu0
      %v4553 = vadd.f32 0.0, %v4552
      %v4554 = vpop.f32.mrf.mxu0
      %v4555 = vpop.f32.mrf.mxu0
      %v4556 = vadd.f32 0.0, %v4555
      %v4557 = vpop.f32.mrf.mxu0
      %4558 = vmatprep.mubr.bf16.mxu0 0
      %4559 = vmatmul.mubr.bf16.gmra.mxu0 %v4422
      %v4560 = vpop.f32.mrf.mxu0
      %v4561 = vadd.f32 0.0, %v4560
      %v4562 = vpop.f32.mrf.mxu0
      %v4563 = vpop.f32.mrf.mxu0
      %v4564 = vadd.f32 0.0, %v4563
      %v4565 = vpop.f32.mrf.mxu0
      %4566 = vmatprep.mubr.bf16.mxu0 0
      %4567 = vmatmul.mubr.bf16.gmra.mxu0 %v4425
      %v4568 = vpop.f32.mrf.mxu0
      %v4569 = vadd.f32 0.0, %v4568
      %v4570 = vpop.f32.mrf.mxu0
      %v4571 = vpop.f32.mrf.mxu0
      %v4572 = vadd.f32 0.0, %v4571
      %v4573 = vpop.f32.mrf.mxu0
      %4574 = vmatprep.mubr.bf16.mxu0 0
      %4575 = vmatmul.mubr.bf16.gmra.mxu0 %v4428
      %v4576 = vpop.f32.mrf.mxu0
      %v4577 = vadd.f32 0.0, %v4576
      %v4578 = vpop.f32.mrf.mxu0
      %v4579 = vpop.f32.mrf.mxu0
      %v4580 = vadd.f32 0.0, %v4579
      %v4581 = vpop.f32.mrf.mxu0
      %4582 = vmatprep.mubr.bf16.mxu0 0
      %4583 = vmatmul.mubr.bf16.gmra.mxu0 %v4431
      %v4584 = vpop.f32.mrf.mxu0
      %v4585 = vadd.f32 0.0, %v4584
      %v4586 = vpop.f32.mrf.mxu0
      %v4587 = vpop.f32.mrf.mxu0
      %v4588 = vadd.f32 0.0, %v4587
      %v4589 = vpop.f32.mrf.mxu0
      %4590 = vmatprep.mubr.bf16.mxu0 0
      %4591 = vmatmul.mubr.bf16.gmra.mxu0 %v4434
      %v4592 = vpop.f32.mrf.mxu0
      %v4593 = vadd.f32 0.0, %v4592
      %v4594 = vpop.f32.mrf.mxu0
      %v4595 = vpop.f32.mrf.mxu0
      %v4596 = vadd.f32 0.0, %v4595
      %v4597 = vpop.f32.mrf.mxu0
      %4598 = vmatprep.mubr.bf16.mxu0 0
      %4599 = vmatmul.mubr.bf16.gmra.mxu0 %v4437
      %v4600 = vpop.f32.mrf.mxu0
      %v4601 = vadd.f32 0.0, %v4600
      %v4602 = vpop.f32.mrf.mxu0
      %v4603 = vpop.f32.mrf.mxu0
      %v4604 = vadd.f32 0.0, %v4603
      %v4605 = vpop.f32.mrf.mxu0
      %4606 = vmatprep.mubr.bf16.mxu0 0
      %4607 = vmatmul.mubr.bf16.gmra.mxu0 %v4440
      %v4608 = vpop.f32.mrf.mxu0
      %v4609 = vadd.f32 0.0, %v4608
      %v4610 = vpop.f32.mrf.mxu0
      %v4611 = vpop.f32.mrf.mxu0
      %v4612 = vadd.f32 0.0, %v4611
      %v4613 = vpop.f32.mrf.mxu0
      %4614 = vmatprep.mubr.bf16.mxu0 0
      %4615 = vmatmul.mubr.bf16.gmra.mxu0 %v4443
      %v4616 = vpop.f32.mrf.mxu0
      %v4617 = vadd.f32 0.0, %v4616
      %v4618 = vpop.f32.mrf.mxu0
      %v4619 = vpop.f32.mrf.mxu0
      %v4620 = vadd.f32 0.0, %v4619
      %v4621 = vpop.f32.mrf.mxu0
      %4622 = vmatprep.mubr.bf16.mxu0 0
      %4623 = vmatmul.mubr.bf16.gmra.mxu0 %v4446
      %v4624 = vpop.f32.mrf.mxu0
      %v4625 = vadd.f32 0.0, %v4624
      %v4626 = vpop.f32.mrf.mxu0
      %v4627 = vpop.f32.mrf.mxu0
      %v4628 = vadd.f32 0.0, %v4627
      %v4629 = vpop.f32.mrf.mxu0
      %4630 = vmatprep.mubr.bf16.mxu0 0
      %4631 = vmatmul.mubr.bf16.gmra.mxu0 %v4449
      %v4632 = vpop.f32.mrf.mxu0
      %v4633 = vadd.f32 0.0, %v4632
      %v4634 = vpop.f32.mrf.mxu0
      %v4635 = vpop.f32.mrf.mxu0
      %v4636 = vpop.f32.mrf.mxu0
      %4637 = vdwg.mxu0
      %v4638 = vadd.f32 %v4112, %v4489
      %v4639 = vadd.f32 %v4113, %v4492
      %v4640 = vadd.f32 %v4114, %v4497
      %v4641 = vadd.f32 %v4115, %v4500
      %v4642 = vadd.f32 %v4116, %v4505
      %v4643 = vadd.f32 %v4117, %v4508
      %v4644 = vadd.f32 %v4118, %v4513
      %v4645 = vadd.f32 %v4119, %v4516
      %v4646 = vadd.f32 %v4120, %v4521
      %v4647 = vadd.f32 %v4121, %v4524
      %v4648 = vadd.f32 %v4122, %v4529
      %v4649 = vadd.f32 %v4123, %v4532
      %v4650 = vadd.f32 %v4124, %v4537
      %v4651 = vadd.f32 %v4125, %v4540
      %v4652 = vadd.f32 %v4126, %v4545
      %v4653 = vadd.f32 %v4127, %v4548
      %v4654 = vadd.f32 %v4128, %v4553
      %v4655 = vadd.f32 %v4129, %v4556
      %v4656 = vadd.f32 %v4130, %v4561
      %v4657 = vadd.f32 %v4131, %v4564
      %v4658 = vadd.f32 %v4132, %v4569
      %v4659 = vadd.f32 %v4133, %v4572
      %v4660 = vadd.f32 %v4134, %v4577
      %v4661 = vadd.f32 %v4135, %v4580
      %v4662 = vadd.f32 %v4136, %v4585
      %v4663 = vadd.f32 %v4137, %v4588
      %v4664 = vadd.f32 %v4138, %v4593
      %v4665 = vadd.f32 %v4139, %v4596
      %v4666 = vadd.f32 %v4140, %v4601
      %v4667 = vadd.f32 %v4141, %v4604
      %v4668 = vadd.f32 %v4142, %v4609
      %v4669 = vadd.f32 %v4143, %v4612
      %v4670 = vadd.f32 %v4144, %v4617
      %v4671 = vadd.f32 %v4145, %v4620
      %v4672 = vadd.f32 %v4146, %v4625
      %v4673 = vadd.f32 %v4147, %v4628
      %v4674 = vadd.f32 %v4148, %v4633
      %4675 = vst.msk [vmem:[#allocation2] sm:$0xff] %vm172, %v4638
      %4676 = vst.msk [vmem:[#allocation2 + $0x8] sm:$0xff] %vm172, %v4639
      %4677 = vst.msk [vmem:[#allocation2 + $0x10] sm:$0xff] %vm172, %v4640
      %4678 = vst.msk [vmem:[#allocation2 + $0x18] sm:$0xff] %vm172, %v4641
      %4679 = vst.msk [vmem:[#allocation2 + $0x20] sm:$0xff] %vm172, %v4642
      %4680 = vst.msk [vmem:[#allocation2 + $0x28] sm:$0xff] %vm172, %v4643
      %4681 = vst.msk [vmem:[#allocation2 + $0x30] sm:$0xff] %vm172, %v4644
      %4682 = vst.msk [vmem:[#allocation2 + $0x38] sm:$0xff] %vm172, %v4645
      %4683 = vst.msk [vmem:[#allocation2 + $0x40] sm:$0xff] %vm172, %v4646
      %4684 = vst.msk [vmem:[#allocation2 + $0x48] sm:$0xff] %vm172, %v4647
      %4685 = vst.msk [vmem:[#allocation2 + $0x50] sm:$0xff] %vm172, %v4648
      %4686 = vst.msk [vmem:[#allocation2 + $0x58] sm:$0xff] %vm172, %v4649
      %4687 = vst.msk [vmem:[#allocation2 + $0x60] sm:$0xff] %vm172, %v4650
      %4688 = vst.msk [vmem:[#allocation2 + $0x68] sm:$0xff] %vm172, %v4651
      %4689 = vst.msk [vmem:[#allocation2 + $0x70] sm:$0xff] %vm172, %v4652
      %4690 = vst.msk [vmem:[#allocation2 + $0x78] sm:$0xff] %vm172, %v4653
      %4691 = vst.msk [vmem:[#allocation2 + $0x80] sm:$0xff] %vm172, %v4654
      %4692 = vst.msk [vmem:[#allocation2 + $0x88] sm:$0xff] %vm172, %v4655
      %4693 = vst.msk [vmem:[#allocation2 + $0x90] sm:$0xff] %vm172, %v4656
      %4694 = vst.msk [vmem:[#allocation2 + $0x98] sm:$0xff] %vm172, %v4657
      %4695 = vst.msk [vmem:[#allocation2 + $0xa0] sm:$0xff] %vm172, %v4658
      %4696 = vst.msk [vmem:[#allocation2 + $0xa8] sm:$0xff] %vm172, %v4659
      %4697 = vst.msk [vmem:[#allocation2 + $0xb0] sm:$0xff] %vm172, %v4660
      %4698 = vst.msk [vmem:[#allocation2 + $0xb8] sm:$0xff] %vm172, %v4661
      %4699 = vst.msk [vmem:[#allocation2 + $0xc0] sm:$0xff] %vm172, %v4662
      %4700 = vst.msk [vmem:[#allocation2 + $0xc8] sm:$0xff] %vm172, %v4663
      %4701 = vst.msk [vmem:[#allocation2 + $0xd0] sm:$0xff] %vm172, %v4664
      %4702 = vst.msk [vmem:[#allocation2 + $0xd8] sm:$0xff] %vm172, %v4665
      %4703 = vst.msk [vmem:[#allocation2 + $0xe0] sm:$0xff] %vm172, %v4666
      %4704 = vst.msk [vmem:[#allocation2 + $0xe8] sm:$0xff] %vm172, %v4667
      %4705 = vst.msk [vmem:[#allocation2 + $0xf0] sm:$0xff] %vm172, %v4668
      %4706 = vst.msk [vmem:[#allocation2 + $0xf8] sm:$0xff] %vm172, %v4669
      %4707 = vst.msk [vmem:[#allocation2 + $0x100] sm:$0xff] %vm172, %v4670
      %4708 = vst.msk [vmem:[#allocation2 + $0x108] sm:$0xff] %vm172, %v4671
      %4709 = vst.msk [vmem:[#allocation2 + $0x110] sm:$0xff] %vm172, %v4672
      %4710 = vst.msk [vmem:[#allocation2 + $0x118] sm:$0xff] %vm172, %v4673
      %4711 = vst.msk [vmem:[#allocation2 + $0x120] sm:$0x1] %vm209, %v4674
      %v4712 = vld [vmem:[%s165 + $0x8] sm:$0xe]
      %v4713 = vld [vmem:[%s165 + $0xc] sm:$0xf]
      %v4714 = vld [vmem:[%s165 + $0x10] sm:$0xf]
      %v4715 = vld [vmem:[%s165 + $0x14] sm:$0xf]
      %v4716 = vld [vmem:[%s165 + $0x18] sm:$0xf]
      %v4717 = vld [vmem:[%s165 + $0x1c] sm:$0xf]
      %v4718 = vld [vmem:[%s165 + $0x20] sm:$0xf]
      %v4719 = vld [vmem:[%s165 + $0x24] sm:$0xf]
      %v4720 = vld [vmem:[%s165 + $0x28] sm:$0xf]
      %v4721 = vld [vmem:[%s165 + $0x2c] sm:$0xf]
      %v4722 = vld [vmem:[%s165 + $0x30] sm:$0xf]
      %v4723 = vld [vmem:[%s165 + $0x34] sm:$0xf]
      %v4724 = vld [vmem:[%s165 + $0x38] sm:$0xf]
      %v4725 = vld [vmem:[%s165 + $0x3c] sm:$0xf]
      %v4726 = vld [vmem:[%s165 + $0x40] sm:$0xf]
      %v4727 = vld [vmem:[%s165 + $0x44] sm:$0xf]
      %v4728 = vld [vmem:[%s165 + $0x48] sm:$0xf]
      %v4729 = vld [vmem:[%s165 + $0x4c] sm:$0xf]
      %v4730 = vld [vmem:[%s165 + $0x50] sm:$0xf]
      %v4731 = vld [vmem:[%s165 + $0x54] sm:$0xf]
      %v4732 = vld [vmem:[%s165 + $0x58] sm:$0xf]
      %v4733 = vld [vmem:[%s165 + $0x5c] sm:$0xf]
      %v4734 = vld [vmem:[%s165 + $0x60] sm:$0xf]
      %v4735 = vld [vmem:[%s165 + $0x64] sm:$0xf]
      %v4736 = vld [vmem:[%s165 + $0x68] sm:$0xf]
      %v4737 = vld [vmem:[%s165 + $0x6c] sm:$0xf]
      %v4738 = vld [vmem:[%s165 + $0x70] sm:$0xf]
      %v4739 = vld [vmem:[%s165 + $0x74] sm:$0xf]
      %v4740 = vld [vmem:[%s165 + $0x78] sm:$0xf]
      %v4741 = vld [vmem:[%s165 + $0x7c] sm:$0xf]
      %v4742 = vld [vmem:[%s165 + $0x80] sm:$0xf]
      %v4743 = vld [vmem:[%s165 + $0x84] sm:$0xf]
      %v4744 = vld [vmem:[%s165 + $0x88] sm:$0xf]
      %v4745 = vld [vmem:[%s165 + $0x8c] sm:$0xf]
      %v4746 = vld [vmem:[%s165 + $0x90] sm:$0xf]
      %v4747 = vld [vmem:[%s165 + $0x94] sm:$0xf]
      %v4748 = vld [vmem:[%s165 + $0x98] sm:$0x3]
      %v4749 = vld [vmem:[#allocation2] sm:$0xff]
      %v4750 = vld [vmem:[#allocation2 + $0x8] sm:$0xff]
      %v4751 = vld [vmem:[#allocation2 + $0x10] sm:$0xff]
      %v4752 = vld [vmem:[#allocation2 + $0x18] sm:$0xff]
      %v4753 = vld [vmem:[#allocation2 + $0x20] sm:$0xff]
      %v4754 = vld [vmem:[#allocation2 + $0x28] sm:$0xff]
      %v4755 = vld [vmem:[#allocation2 + $0x30] sm:$0xff]
      %v4756 = vld [vmem:[#allocation2 + $0x38] sm:$0xff]
      %v4757 = vld [vmem:[#allocation2 + $0x40] sm:$0xff]
      %v4758 = vld [vmem:[#allocation2 + $0x48] sm:$0xff]
      %v4759 = vld [vmem:[#allocation2 + $0x50] sm:$0xff]
      %v4760 = vld [vmem:[#allocation2 + $0x58] sm:$0xff]
      %v4761 = vld [vmem:[#allocation2 + $0x60] sm:$0xff]
      %v4762 = vld [vmem:[#allocation2 + $0x68] sm:$0xff]
      %v4763 = vld [vmem:[#allocation2 + $0x70] sm:$0xff]
      %v4764 = vld [vmem:[#allocation2 + $0x78] sm:$0xff]
      %v4765 = vld [vmem:[#allocation2 + $0x80] sm:$0xff]
      %v4766 = vld [vmem:[#allocation2 + $0x88] sm:$0xff]
      %v4767 = vld [vmem:[#allocation2 + $0x90] sm:$0xff]
      %v4768 = vld [vmem:[#allocation2 + $0x98] sm:$0xff]
      %v4769 = vld [vmem:[#allocation2 + $0xa0] sm:$0xff]
      %v4770 = vld [vmem:[#allocation2 + $0xa8] sm:$0xff]
      %v4771 = vld [vmem:[#allocation2 + $0xb0] sm:$0xff]
      %v4772 = vld [vmem:[#allocation2 + $0xb8] sm:$0xff]
      %v4773 = vld [vmem:[#allocation2 + $0xc0] sm:$0xff]
      %v4774 = vld [vmem:[#allocation2 + $0xc8] sm:$0xff]
      %v4775 = vld [vmem:[#allocation2 + $0xd0] sm:$0xff]
      %v4776 = vld [vmem:[#allocation2 + $0xd8] sm:$0xff]
      %v4777 = vld [vmem:[#allocation2 + $0xe0] sm:$0xff]
      %v4778 = vld [vmem:[#allocation2 + $0xe8] sm:$0xff]
      %v4779 = vld [vmem:[#allocation2 + $0xf0] sm:$0xff]
      %v4780 = vld [vmem:[#allocation2 + $0xf8] sm:$0xff]
      %v4781 = vld [vmem:[#allocation2 + $0x100] sm:$0xff]
      %v4782 = vld [vmem:[#allocation2 + $0x108] sm:$0xff]
      %v4783 = vld [vmem:[#allocation2 + $0x110] sm:$0xff]
      %v4784 = vld [vmem:[#allocation2 + $0x118] sm:$0xff]
      %v4785 = vld [vmem:[#allocation2 + $0x120] sm:$0x1]
      %s4786 = scalar_lea.vmem %s1, 32
      %v4787 = vld [vmem:[%s4786] sm:$0xf]
      %v4825 = vunpack.c.l.b16 %v4712
      %v4826 = vunpack.c.l.b16 %v4713
      %v4827 = vunpack.c.l.b16 %v4714
      %v4828 = vunpack.c.l.b16 %v4715
      %v4829 = vunpack.c.l.b16 %v4716
      %v4830 = vunpack.c.l.b16 %v4717
      %v4831 = vunpack.c.l.b16 %v4718
      %v4832 = vunpack.c.l.b16 %v4719
      %v4833 = vunpack.c.l.b16 %v4720
      %v4834 = vunpack.c.l.b16 %v4721
      %v4835 = vunpack.c.l.b16 %v4722
      %v4836 = vunpack.c.l.b16 %v4723
      %v4837 = vunpack.c.l.b16 %v4724
      %v4838 = vunpack.c.l.b16 %v4725
      %v4839 = vunpack.c.l.b16 %v4726
      %v4840 = vunpack.c.l.b16 %v4727
      %v4841 = vunpack.c.l.b16 %v4728
      %v4842 = vunpack.c.l.b16 %v4729
      %v4843 = vunpack.c.l.b16 %v4730
      %v4844 = vunpack.c.l.b16 %v4731
      %v4845 = vunpack.c.l.b16 %v4732
      %v4846 = vunpack.c.l.b16 %v4733
      %v4847 = vunpack.c.l.b16 %v4734
      %v4848 = vunpack.c.l.b16 %v4735
      %v4849 = vunpack.c.l.b16 %v4736
      %v4850 = vunpack.c.l.b16 %v4737
      %v4851 = vunpack.c.l.b16 %v4738
      %v4852 = vunpack.c.l.b16 %v4739
      %v4853 = vunpack.c.l.b16 %v4740
      %v4854 = vunpack.c.l.b16 %v4741
      %v4855 = vunpack.c.l.b16 %v4742
      %v4856 = vunpack.c.l.b16 %v4743
      %v4857 = vunpack.c.l.b16 %v4744
      %v4858 = vunpack.c.l.b16 %v4745
      %v4859 = vunpack.c.l.b16 %v4746
      %v4860 = vunpack.c.l.b16 %v4747
      %v4861 = vunpack.c.l.b16 %v4748
      %v4862 = vpack.c.b16 %v4826, %v4825
      %v4863 = vpack.c.b16 %v4828, %v4827
      %v4864 = vpack.c.b16 %v4830, %v4829
      %v4865 = vpack.c.b16 %v4832, %v4831
      %v4866 = vpack.c.b16 %v4834, %v4833
      %v4867 = vpack.c.b16 %v4836, %v4835
      %v4868 = vpack.c.b16 %v4838, %v4837
      %v4869 = vpack.c.b16 %v4840, %v4839
      %v4870 = vpack.c.b16 %v4842, %v4841
      %v4871 = vpack.c.b16 %v4844, %v4843
      %v4872 = vpack.c.b16 %v4846, %v4845
      %v4873 = vpack.c.b16 %v4848, %v4847
      %v4874 = vpack.c.b16 %v4850, %v4849
      %v4875 = vpack.c.b16 %v4852, %v4851
      %v4876 = vpack.c.b16 %v4854, %v4853
      %v4877 = vpack.c.b16 %v4856, %v4855
      %v4878 = vpack.c.b16 %v4858, %v4857
      %v4879 = vpack.c.b16 %v4860, %v4859
      %v4880 = vpack.c.b16 %v4861, %v4861
      %vm4881 = vcmask 1046528
      %v4882 = vrot.slane %v4862, 1
      %v4883 = vrot.slane %v4863, 1
      %v4884 = vsel %vm4881, %v4882, %v4883
      %v4885 = vrot.slane %v4864, 1
      %v4886 = vsel %vm4881, %v4883, %v4885
      %v4887 = vrot.slane %v4865, 1
      %v4888 = vsel %vm4881, %v4885, %v4887
      %v4889 = vrot.slane %v4866, 1
      %v4890 = vsel %vm4881, %v4887, %v4889
      %v4891 = vrot.slane %v4867, 1
      %v4892 = vsel %vm4881, %v4889, %v4891
      %v4893 = vrot.slane %v4868, 1
      %v4894 = vsel %vm4881, %v4891, %v4893
      %v4895 = vrot.slane %v4869, 1
      %v4896 = vsel %vm4881, %v4893, %v4895
      %v4897 = vrot.slane %v4870, 1
      %v4898 = vsel %vm4881, %v4895, %v4897
      %v4899 = vrot.slane %v4871, 1
      %v4900 = vsel %vm4881, %v4897, %v4899
      %v4901 = vrot.slane %v4872, 1
      %v4902 = vsel %vm4881, %v4899, %v4901
      %v4903 = vrot.slane %v4873, 1
      %v4904 = vsel %vm4881, %v4901, %v4903
      %v4905 = vrot.slane %v4874, 1
      %v4906 = vsel %vm4881, %v4903, %v4905
      %v4907 = vrot.slane %v4875, 1
      %v4908 = vsel %vm4881, %v4905, %v4907
      %v4909 = vrot.slane %v4876, 1
      %v4910 = vsel %vm4881, %v4907, %v4909
      %v4911 = vrot.slane %v4877, 1
      %v4912 = vsel %vm4881, %v4909, %v4911
      %v4913 = vrot.slane %v4878, 1
      %v4914 = vsel %vm4881, %v4911, %v4913
      %v4915 = vrot.slane %v4879, 1
      %v4916 = vsel %vm4881, %v4913, %v4915
      %v4917 = vrot.slane %v4880, 1
      %v4918 = vsel %vm4881, %v4915, %v4917
      %v4920 = vsel %vm379, %v4884, 0
      %v4923 = vsel %vm379, %v4886, 0
      %v4926 = vsel %vm379, %v4888, 0
      %v4929 = vsel %vm379, %v4890, 0
      %v4932 = vsel %vm379, %v4892, 0
      %v4935 = vsel %vm379, %v4894, 0
      %v4938 = vsel %vm379, %v4896, 0
      %v4941 = vsel %vm379, %v4898, 0
      %v4944 = vsel %vm379, %v4900, 0
      %v4947 = vsel %vm379, %v4902, 0
      %v4950 = vsel %vm379, %v4904, 0
      %v4953 = vsel %vm379, %v4906, 0
      %v4956 = vsel %vm379, %v4908, 0
      %v4959 = vsel %vm379, %v4910, 0
      %v4962 = vsel %vm379, %v4912, 0
      %v4965 = vsel %vm379, %v4914, 0
      %v4968 = vsel %vm379, %v4916, 0
      %v4971 = vsel %vm379, %v4918, 0
      %v4974 = vsel %vm379, %v4917, 0
      %v4977 = vsel %vm437, %v4787, 0
      %4979 = vmatprep.subr.bf16.mxu0 0
      %4980 = vmatpush1.bf16.msra.mxu0 0
      %4981 = vmatprep.subr.bf16.mxu0 0
      %4982 = vmatpush1.bf16.msra.mxu0 0
      %4983 = vmatprep.subr.bf16.mxu0 0
      %4984 = vmatpush1.bf16.msra.mxu0 0
      %4985 = vmatprep.subr.bf16.mxu0 0
      %4986 = vmatpush1.bf16.msra.mxu0 0
      %4987 = vmatprep.subr.bf16.mxu0 0
      %4988 = vmatpush1.bf16.msra.mxu0 0
      %4989 = vmatprep.subr.bf16.mxu0 0
      %4990 = vmatpush1.bf16.msra.mxu0 0
      %4991 = vmatprep.subr.bf16.mxu0 0
      %4992 = vmatpush1.bf16.msra.mxu0 0
      %4993 = vmatprep.subr.bf16.mxu0 0
      %4994 = vmatpush1.bf16.msra.mxu0 %v4977
      %4995 = vmatprep.subr.bf16.mxu0 0
      %4996 = vmatpush2.bf16.msra.mxu0 0
      %4997 = vmatprep.subr.bf16.mxu0 0
      %4998 = vmatpush2.bf16.msra.mxu0 0
      %4999 = vmatprep.subr.bf16.mxu0 0
      %5000 = vmatpush2.bf16.msra.mxu0 0
      %5001 = vmatprep.subr.bf16.mxu0 0
      %5002 = vmatpush2.bf16.msra.mxu0 0
      %5003 = vmatprep.subr.bf16.mxu0 0
      %5004 = vmatpush2.bf16.msra.mxu0 0
      %5005 = vmatprep.subr.bf16.mxu0 0
      %5006 = vmatpush2.bf16.msra.mxu0 0
      %5007 = vmatprep.subr.bf16.mxu0 0
      %5008 = vmatpush2.bf16.msra.mxu0 0
      %5009 = vmatprep.subr.bf16.mxu0 0
      %5010 = vmatpush2.bf16.msra.mxu0 0
      %5011 = vmatprep.mubr.bf16.mxu0 0
      %5012 = vmatmul.mubr.bf16.gmra.mxu0 %v4920
      %v5013 = vpop.f32.mrf.mxu0
      %v5014 = vadd.f32 0.0, %v5013
      %v5015 = vpop.f32.mrf.mxu0
      %v5016 = vpop.f32.mrf.mxu0
      %v5017 = vadd.f32 0.0, %v5016
      %v5018 = vpop.f32.mrf.mxu0
      %5019 = vmatprep.mubr.bf16.mxu0 0
      %5020 = vmatmul.mubr.bf16.gmra.mxu0 %v4923
      %v5021 = vpop.f32.mrf.mxu0
      %v5022 = vadd.f32 0.0, %v5021
      %v5023 = vpop.f32.mrf.mxu0
      %v5024 = vpop.f32.mrf.mxu0
      %v5025 = vadd.f32 0.0, %v5024
      %v5026 = vpop.f32.mrf.mxu0
      %5027 = vmatprep.mubr.bf16.mxu0 0
      %5028 = vmatmul.mubr.bf16.gmra.mxu0 %v4926
      %v5029 = vpop.f32.mrf.mxu0
      %v5030 = vadd.f32 0.0, %v5029
      %v5031 = vpop.f32.mrf.mxu0
      %v5032 = vpop.f32.mrf.mxu0
      %v5033 = vadd.f32 0.0, %v5032
      %v5034 = vpop.f32.mrf.mxu0
      %5035 = vmatprep.mubr.bf16.mxu0 0
      %5036 = vmatmul.mubr.bf16.gmra.mxu0 %v4929
      %v5037 = vpop.f32.mrf.mxu0
      %v5038 = vadd.f32 0.0, %v5037
      %v5039 = vpop.f32.mrf.mxu0
      %v5040 = vpop.f32.mrf.mxu0
      %v5041 = vadd.f32 0.0, %v5040
      %v5042 = vpop.f32.mrf.mxu0
      %5043 = vmatprep.mubr.bf16.mxu0 0
      %5044 = vmatmul.mubr.bf16.gmra.mxu0 %v4932
      %v5045 = vpop.f32.mrf.mxu0
      %v5046 = vadd.f32 0.0, %v5045
      %v5047 = vpop.f32.mrf.mxu0
      %v5048 = vpop.f32.mrf.mxu0
      %v5049 = vadd.f32 0.0, %v5048
      %v5050 = vpop.f32.mrf.mxu0
      %5051 = vmatprep.mubr.bf16.mxu0 0
      %5052 = vmatmul.mubr.bf16.gmra.mxu0 %v4935
      %v5053 = vpop.f32.mrf.mxu0
      %v5054 = vadd.f32 0.0, %v5053
      %v5055 = vpop.f32.mrf.mxu0
      %v5056 = vpop.f32.mrf.mxu0
      %v5057 = vadd.f32 0.0, %v5056
      %v5058 = vpop.f32.mrf.mxu0
      %5059 = vmatprep.mubr.bf16.mxu0 0
      %5060 = vmatmul.mubr.bf16.gmra.mxu0 %v4938
      %v5061 = vpop.f32.mrf.mxu0
      %v5062 = vadd.f32 0.0, %v5061
      %v5063 = vpop.f32.mrf.mxu0
      %v5064 = vpop.f32.mrf.mxu0
      %v5065 = vadd.f32 0.0, %v5064
      %v5066 = vpop.f32.mrf.mxu0
      %5067 = vmatprep.mubr.bf16.mxu0 0
      %5068 = vmatmul.mubr.bf16.gmra.mxu0 %v4941
      %v5069 = vpop.f32.mrf.mxu0
      %v5070 = vadd.f32 0.0, %v5069
      %v5071 = vpop.f32.mrf.mxu0
      %v5072 = vpop.f32.mrf.mxu0
      %v5073 = vadd.f32 0.0, %v5072
      %v5074 = vpop.f32.mrf.mxu0
      %5075 = vmatprep.mubr.bf16.mxu0 0
      %5076 = vmatmul.mubr.bf16.gmra.mxu0 %v4944
      %v5077 = vpop.f32.mrf.mxu0
      %v5078 = vadd.f32 0.0, %v5077
      %v5079 = vpop.f32.mrf.mxu0
      %v5080 = vpop.f32.mrf.mxu0
      %v5081 = vadd.f32 0.0, %v5080
      %v5082 = vpop.f32.mrf.mxu0
      %5083 = vmatprep.mubr.bf16.mxu0 0
      %5084 = vmatmul.mubr.bf16.gmra.mxu0 %v4947
      %v5085 = vpop.f32.mrf.mxu0
      %v5086 = vadd.f32 0.0, %v5085
      %v5087 = vpop.f32.mrf.mxu0
      %v5088 = vpop.f32.mrf.mxu0
      %v5089 = vadd.f32 0.0, %v5088
      %v5090 = vpop.f32.mrf.mxu0
      %5091 = vmatprep.mubr.bf16.mxu0 0
      %5092 = vmatmul.mubr.bf16.gmra.mxu0 %v4950
      %v5093 = vpop.f32.mrf.mxu0
      %v5094 = vadd.f32 0.0, %v5093
      %v5095 = vpop.f32.mrf.mxu0
      %v5096 = vpop.f32.mrf.mxu0
      %v5097 = vadd.f32 0.0, %v5096
      %v5098 = vpop.f32.mrf.mxu0
      %5099 = vmatprep.mubr.bf16.mxu0 0
      %5100 = vmatmul.mubr.bf16.gmra.mxu0 %v4953
      %v5101 = vpop.f32.mrf.mxu0
      %v5102 = vadd.f32 0.0, %v5101
      %v5103 = vpop.f32.mrf.mxu0
      %v5104 = vpop.f32.mrf.mxu0
      %v5105 = vadd.f32 0.0, %v5104
      %v5106 = vpop.f32.mrf.mxu0
      %5107 = vmatprep.mubr.bf16.mxu0 0
      %5108 = vmatmul.mubr.bf16.gmra.mxu0 %v4956
      %v5109 = vpop.f32.mrf.mxu0
      %v5110 = vadd.f32 0.0, %v5109
      %v5111 = vpop.f32.mrf.mxu0
      %v5112 = vpop.f32.mrf.mxu0
      %v5113 = vadd.f32 0.0, %v5112
      %v5114 = vpop.f32.mrf.mxu0
      %5115 = vmatprep.mubr.bf16.mxu0 0
      %5116 = vmatmul.mubr.bf16.gmra.mxu0 %v4959
      %v5117 = vpop.f32.mrf.mxu0
      %v5118 = vadd.f32 0.0, %v5117
      %v5119 = vpop.f32.mrf.mxu0
      %v5120 = vpop.f32.mrf.mxu0
      %v5121 = vadd.f32 0.0, %v5120
      %v5122 = vpop.f32.mrf.mxu0
      %5123 = vmatprep.mubr.bf16.mxu0 0
      %5124 = vmatmul.mubr.bf16.gmra.mxu0 %v4962
      %v5125 = vpop.f32.mrf.mxu0
      %v5126 = vadd.f32 0.0, %v5125
      %v5127 = vpop.f32.mrf.mxu0
      %v5128 = vpop.f32.mrf.mxu0
      %v5129 = vadd.f32 0.0, %v5128
      %v5130 = vpop.f32.mrf.mxu0
      %5131 = vmatprep.mubr.bf16.mxu0 0
      %5132 = vmatmul.mubr.bf16.gmra.mxu0 %v4965
      %v5133 = vpop.f32.mrf.mxu0
      %v5134 = vadd.f32 0.0, %v5133
      %v5135 = vpop.f32.mrf.mxu0
      %v5136 = vpop.f32.mrf.mxu0
      %v5137 = vadd.f32 0.0, %v5136
      %v5138 = vpop.f32.mrf.mxu0
      %5139 = vmatprep.mubr.bf16.mxu0 0
      %5140 = vmatmul.mubr.bf16.gmra.mxu0 %v4968
      %v5141 = vpop.f32.mrf.mxu0
      %v5142 = vadd.f32 0.0, %v5141
      %v5143 = vpop.f32.mrf.mxu0
      %v5144 = vpop.f32.mrf.mxu0
      %v5145 = vadd.f32 0.0, %v5144
      %v5146 = vpop.f32.mrf.mxu0
      %5147 = vmatprep.mubr.bf16.mxu0 0
      %5148 = vmatmul.mubr.bf16.gmra.mxu0 %v4971
      %v5149 = vpop.f32.mrf.mxu0
      %v5150 = vadd.f32 0.0, %v5149
      %v5151 = vpop.f32.mrf.mxu0
      %v5152 = vpop.f32.mrf.mxu0
      %v5153 = vadd.f32 0.0, %v5152
      %v5154 = vpop.f32.mrf.mxu0
      %5155 = vmatprep.mubr.bf16.mxu0 0
      %5156 = vmatmul.mubr.bf16.gmra.mxu0 %v4974
      %v5157 = vpop.f32.mrf.mxu0
      %v5158 = vadd.f32 0.0, %v5157
      %v5159 = vpop.f32.mrf.mxu0
      %v5160 = vpop.f32.mrf.mxu0
      %v5161 = vpop.f32.mrf.mxu0
      %5162 = vdwg.mxu0
      %v5163 = vadd.f32 %v4749, %v5014
      %v5164 = vadd.f32 %v4750, %v5017
      %v5165 = vadd.f32 %v4751, %v5022
      %v5166 = vadd.f32 %v4752, %v5025
      %v5167 = vadd.f32 %v4753, %v5030
      %v5168 = vadd.f32 %v4754, %v5033
      %v5169 = vadd.f32 %v4755, %v5038
      %v5170 = vadd.f32 %v4756, %v5041
      %v5171 = vadd.f32 %v4757, %v5046
      %v5172 = vadd.f32 %v4758, %v5049
      %v5173 = vadd.f32 %v4759, %v5054
      %v5174 = vadd.f32 %v4760, %v5057
      %v5175 = vadd.f32 %v4761, %v5062
      %v5176 = vadd.f32 %v4762, %v5065
      %v5177 = vadd.f32 %v4763, %v5070
      %v5178 = vadd.f32 %v4764, %v5073
      %v5179 = vadd.f32 %v4765, %v5078
      %v5180 = vadd.f32 %v4766, %v5081
      %v5181 = vadd.f32 %v4767, %v5086
      %v5182 = vadd.f32 %v4768, %v5089
      %v5183 = vadd.f32 %v4769, %v5094
      %v5184 = vadd.f32 %v4770, %v5097
      %v5185 = vadd.f32 %v4771, %v5102
      %v5186 = vadd.f32 %v4772, %v5105
      %v5187 = vadd.f32 %v4773, %v5110
      %v5188 = vadd.f32 %v4774, %v5113
      %v5189 = vadd.f32 %v4775, %v5118
      %v5190 = vadd.f32 %v4776, %v5121
      %v5191 = vadd.f32 %v4777, %v5126
      %v5192 = vadd.f32 %v4778, %v5129
      %v5193 = vadd.f32 %v4779, %v5134
      %v5194 = vadd.f32 %v4780, %v5137
      %v5195 = vadd.f32 %v4781, %v5142
      %v5196 = vadd.f32 %v4782, %v5145
      %v5197 = vadd.f32 %v4783, %v5150
      %v5198 = vadd.f32 %v4784, %v5153
      %v5199 = vadd.f32 %v4785, %v5158
      %5200 = vst.msk [vmem:[#allocation2] sm:$0xff] %vm172, %v5163
      %5201 = vst.msk [vmem:[#allocation2 + $0x8] sm:$0xff] %vm172, %v5164
      %5202 = vst.msk [vmem:[#allocation2 + $0x10] sm:$0xff] %vm172, %v5165
      %5203 = vst.msk [vmem:[#allocation2 + $0x18] sm:$0xff] %vm172, %v5166
      %5204 = vst.msk [vmem:[#allocation2 + $0x20] sm:$0xff] %vm172, %v5167
      %5205 = vst.msk [vmem:[#allocation2 + $0x28] sm:$0xff] %vm172, %v5168
      %5206 = vst.msk [vmem:[#allocation2 + $0x30] sm:$0xff] %vm172, %v5169
      %5207 = vst.msk [vmem:[#allocation2 + $0x38] sm:$0xff] %vm172, %v5170
      %5208 = vst.msk [vmem:[#allocation2 + $0x40] sm:$0xff] %vm172, %v5171
      %5209 = vst.msk [vmem:[#allocation2 + $0x48] sm:$0xff] %vm172, %v5172
      %5210 = vst.msk [vmem:[#allocation2 + $0x50] sm:$0xff] %vm172, %v5173
      %5211 = vst.msk [vmem:[#allocation2 + $0x58] sm:$0xff] %vm172, %v5174
      %5212 = vst.msk [vmem:[#allocation2 + $0x60] sm:$0xff] %vm172, %v5175
      %5213 = vst.msk [vmem:[#allocation2 + $0x68] sm:$0xff] %vm172, %v5176
      %5214 = vst.msk [vmem:[#allocation2 + $0x70] sm:$0xff] %vm172, %v5177
      %5215 = vst.msk [vmem:[#allocation2 + $0x78] sm:$0xff] %vm172, %v5178
      %5216 = vst.msk [vmem:[#allocation2 + $0x80] sm:$0xff] %vm172, %v5179
      %5217 = vst.msk [vmem:[#allocation2 + $0x88] sm:$0xff] %vm172, %v5180
      %5218 = vst.msk [vmem:[#allocation2 + $0x90] sm:$0xff] %vm172, %v5181
      %5219 = vst.msk [vmem:[#allocation2 + $0x98] sm:$0xff] %vm172, %v5182
      %5220 = vst.msk [vmem:[#allocation2 + $0xa0] sm:$0xff] %vm172, %v5183
      %5221 = vst.msk [vmem:[#allocation2 + $0xa8] sm:$0xff] %vm172, %v5184
      %5222 = vst.msk [vmem:[#allocation2 + $0xb0] sm:$0xff] %vm172, %v5185
      %5223 = vst.msk [vmem:[#allocation2 + $0xb8] sm:$0xff] %vm172, %v5186
      %5224 = vst.msk [vmem:[#allocation2 + $0xc0] sm:$0xff] %vm172, %v5187
      %5225 = vst.msk [vmem:[#allocation2 + $0xc8] sm:$0xff] %vm172, %v5188
      %5226 = vst.msk [vmem:[#allocation2 + $0xd0] sm:$0xff] %vm172, %v5189
      %5227 = vst.msk [vmem:[#allocation2 + $0xd8] sm:$0xff] %vm172, %v5190
      %5228 = vst.msk [vmem:[#allocation2 + $0xe0] sm:$0xff] %vm172, %v5191
      %5229 = vst.msk [vmem:[#allocation2 + $0xe8] sm:$0xff] %vm172, %v5192
      %5230 = vst.msk [vmem:[#allocation2 + $0xf0] sm:$0xff] %vm172, %v5193
      %5231 = vst.msk [vmem:[#allocation2 + $0xf8] sm:$0xff] %vm172, %v5194
      %5232 = vst.msk [vmem:[#allocation2 + $0x100] sm:$0xff] %vm172, %v5195
      %5233 = vst.msk [vmem:[#allocation2 + $0x108] sm:$0xff] %vm172, %v5196
      %5234 = vst.msk [vmem:[#allocation2 + $0x110] sm:$0xff] %vm172, %v5197
      %5235 = vst.msk [vmem:[#allocation2 + $0x118] sm:$0xff] %vm172, %v5198
      %5236 = vst.msk [vmem:[#allocation2 + $0x120] sm:$0x1] %vm209, %v5199
      %v5237 = vld [vmem:[#allocation2] sm:$0xff]
      %v5238 = vld [vmem:[#allocation2 + $0x8] sm:$0xff]
      %v5239 = vld [vmem:[#allocation2 + $0x10] sm:$0xff]
      %v5240 = vld [vmem:[#allocation2 + $0x18] sm:$0xff]
      %v5241 = vld [vmem:[#allocation2 + $0x20] sm:$0xff]
      %v5242 = vld [vmem:[#allocation2 + $0x28] sm:$0xff]
      %v5243 = vld [vmem:[#allocation2 + $0x30] sm:$0xff]
      %v5244 = vld [vmem:[#allocation2 + $0x38] sm:$0xff]
      %v5245 = vld [vmem:[#allocation2 + $0x40] sm:$0xff]
      %v5246 = vld [vmem:[#allocation2 + $0x48] sm:$0xff]
      %v5247 = vld [vmem:[#allocation2 + $0x50] sm:$0xff]
      %v5248 = vld [vmem:[#allocation2 + $0x58] sm:$0xff]
      %v5249 = vld [vmem:[#allocation2 + $0x60] sm:$0xff]
      %v5250 = vld [vmem:[#allocation2 + $0x68] sm:$0xff]
      %v5251 = vld [vmem:[#allocation2 + $0x70] sm:$0xff]
      %v5252 = vld [vmem:[#allocation2 + $0x78] sm:$0xff]
      %v5253 = vld [vmem:[#allocation2 + $0x80] sm:$0xff]
      %v5254 = vld [vmem:[#allocation2 + $0x88] sm:$0xff]
      %v5255 = vld [vmem:[#allocation2 + $0x90] sm:$0xff]
      %v5256 = vld [vmem:[#allocation2 + $0x98] sm:$0xff]
      %v5257 = vld [vmem:[#allocation2 + $0xa0] sm:$0xff]
      %v5258 = vld [vmem:[#allocation2 + $0xa8] sm:$0xff]
      %v5259 = vld [vmem:[#allocation2 + $0xb0] sm:$0xff]
      %v5260 = vld [vmem:[#allocation2 + $0xb8] sm:$0xff]
      %v5261 = vld [vmem:[#allocation2 + $0xc0] sm:$0xff]
      %v5262 = vld [vmem:[#allocation2 + $0xc8] sm:$0xff]
      %v5263 = vld [vmem:[#allocation2 + $0xd0] sm:$0xff]
      %v5264 = vld [vmem:[#allocation2 + $0xd8] sm:$0xff]
      %v5265 = vld [vmem:[#allocation2 + $0xe0] sm:$0xff]
      %v5266 = vld [vmem:[#allocation2 + $0xe8] sm:$0xff]
      %v5267 = vld [vmem:[#allocation2 + $0xf0] sm:$0xff]
      %v5268 = vld [vmem:[#allocation2 + $0xf8] sm:$0xff]
      %v5269 = vld [vmem:[#allocation2 + $0x100] sm:$0xff]
      %v5270 = vld [vmem:[#allocation2 + $0x108] sm:$0xff]
      %v5271 = vld [vmem:[#allocation2 + $0x110] sm:$0xff]
      %v5272 = vld [vmem:[#allocation2 + $0x118] sm:$0xff]
      %v5273 = vld [vmem:[#allocation2 + $0x120] sm:$0x1]
      %v5274 = vld [vmem:[%s2] sm:$0x1]
      %v5276 = vlaneseq
      %v5277 = vshrl.u32 %v5276, 7
      %v5278 = vsub.s32 0, %v5277
      %v5279 = vrot.slane %v5274, %v5278
      %v5281 = vadd.f32 %v5237, %v5279
      %v5282 = vadd.f32 %v5238, %v5279
      %v5283 = vadd.f32 %v5239, %v5279
      %v5284 = vadd.f32 %v5240, %v5279
      %v5285 = vadd.f32 %v5241, %v5279
      %v5286 = vadd.f32 %v5242, %v5279
      %v5287 = vadd.f32 %v5243, %v5279
      %v5288 = vadd.f32 %v5244, %v5279
      %v5289 = vadd.f32 %v5245, %v5279
      %v5290 = vadd.f32 %v5246, %v5279
      %v5291 = vadd.f32 %v5247, %v5279
      %v5292 = vadd.f32 %v5248, %v5279
      %v5293 = vadd.f32 %v5249, %v5279
      %v5294 = vadd.f32 %v5250, %v5279
      %v5295 = vadd.f32 %v5251, %v5279
      %v5296 = vadd.f32 %v5252, %v5279
      %v5297 = vadd.f32 %v5253, %v5279
      %v5298 = vadd.f32 %v5254, %v5279
      %v5299 = vadd.f32 %v5255, %v5279
      %v5300 = vadd.f32 %v5256, %v5279
      %v5301 = vadd.f32 %v5257, %v5279
      %v5302 = vadd.f32 %v5258, %v5279
      %v5303 = vadd.f32 %v5259, %v5279
      %v5304 = vadd.f32 %v5260, %v5279
      %v5305 = vadd.f32 %v5261, %v5279
      %v5306 = vadd.f32 %v5262, %v5279
      %v5307 = vadd.f32 %v5263, %v5279
      %v5308 = vadd.f32 %v5264, %v5279
      %v5309 = vadd.f32 %v5265, %v5279
      %v5310 = vadd.f32 %v5266, %v5279
      %v5311 = vadd.f32 %v5267, %v5279
      %v5312 = vadd.f32 %v5268, %v5279
      %v5313 = vadd.f32 %v5269, %v5279
      %v5314 = vadd.f32 %v5270, %v5279
      %v5315 = vadd.f32 %v5271, %v5279
      %v5316 = vadd.f32 %v5272, %v5279
      %v5317 = vadd.f32 %v5273, %v5279
      %v5318 = vmax.f32 %v5281, 0.0
      %v5319 = vmax.f32 %v5282, 0.0
      %v5320 = vmax.f32 %v5283, 0.0
      %v5321 = vmax.f32 %v5284, 0.0
      %v5322 = vmax.f32 %v5285, 0.0
      %v5323 = vmax.f32 %v5286, 0.0
      %v5324 = vmax.f32 %v5287, 0.0
      %v5325 = vmax.f32 %v5288, 0.0
      %v5326 = vmax.f32 %v5289, 0.0
      %v5327 = vmax.f32 %v5290, 0.0
      %v5328 = vmax.f32 %v5291, 0.0
      %v5329 = vmax.f32 %v5292, 0.0
      %v5330 = vmax.f32 %v5293, 0.0
      %v5331 = vmax.f32 %v5294, 0.0
      %v5332 = vmax.f32 %v5295, 0.0
      %v5333 = vmax.f32 %v5296, 0.0
      %v5334 = vmax.f32 %v5297, 0.0
      %v5335 = vmax.f32 %v5298, 0.0
      %v5336 = vmax.f32 %v5299, 0.0
      %v5337 = vmax.f32 %v5300, 0.0
      %v5338 = vmax.f32 %v5301, 0.0
      %v5339 = vmax.f32 %v5302, 0.0
      %v5340 = vmax.f32 %v5303, 0.0
      %v5341 = vmax.f32 %v5304, 0.0
      %v5342 = vmax.f32 %v5305, 0.0
      %v5343 = vmax.f32 %v5306, 0.0
      %v5344 = vmax.f32 %v5307, 0.0
      %v5345 = vmax.f32 %v5308, 0.0
      %v5346 = vmax.f32 %v5309, 0.0
      %v5347 = vmax.f32 %v5310, 0.0
      %v5348 = vmax.f32 %v5311, 0.0
      %v5349 = vmax.f32 %v5312, 0.0
      %v5350 = vmax.f32 %v5313, 0.0
      %v5351 = vmax.f32 %v5314, 0.0
      %v5352 = vmax.f32 %v5315, 0.0
      %v5353 = vmax.f32 %v5316, 0.0
      %v5354 = vmax.f32 %v5317, 0.0
      %5355 = vst.msk [vmem:[%s170] sm:$0xff] %vm172, %v5318
      %5356 = vst.msk [vmem:[%s170 + $0x8] sm:$0xff] %vm172, %v5319
      %5357 = vst.msk [vmem:[%s170 + $0x10] sm:$0xff] %vm172, %v5320
      %5358 = vst.msk [vmem:[%s170 + $0x18] sm:$0xff] %vm172, %v5321
      %5359 = vst.msk [vmem:[%s170 + $0x20] sm:$0xff] %vm172, %v5322
      %5360 = vst.msk [vmem:[%s170 + $0x28] sm:$0xff] %vm172, %v5323
      %5361 = vst.msk [vmem:[%s170 + $0x30] sm:$0xff] %vm172, %v5324
      %5362 = vst.msk [vmem:[%s170 + $0x38] sm:$0xff] %vm172, %v5325
      %5363 = vst.msk [vmem:[%s170 + $0x40] sm:$0xff] %vm172, %v5326
      %5364 = vst.msk [vmem:[%s170 + $0x48] sm:$0xff] %vm172, %v5327
      %5365 = vst.msk [vmem:[%s170 + $0x50] sm:$0xff] %vm172, %v5328
      %5366 = vst.msk [vmem:[%s170 + $0x58] sm:$0xff] %vm172, %v5329
      %5367 = vst.msk [vmem:[%s170 + $0x60] sm:$0xff] %vm172, %v5330
      %5368 = vst.msk [vmem:[%s170 + $0x68] sm:$0xff] %vm172, %v5331
      %5369 = vst.msk [vmem:[%s170 + $0x70] sm:$0xff] %vm172, %v5332
      %5370 = vst.msk [vmem:[%s170 + $0x78] sm:$0xff] %vm172, %v5333
      %5371 = vst.msk [vmem:[%s170 + $0x80] sm:$0xff] %vm172, %v5334
      %5372 = vst.msk [vmem:[%s170 + $0x88] sm:$0xff] %vm172, %v5335
      %5373 = vst.msk [vmem:[%s170 + $0x90] sm:$0xff] %vm172, %v5336
      %5374 = vst.msk [vmem:[%s170 + $0x98] sm:$0xff] %vm172, %v5337
      %5375 = vst.msk [vmem:[%s170 + $0xa0] sm:$0xff] %vm172, %v5338
      %5376 = vst.msk [vmem:[%s170 + $0xa8] sm:$0xff] %vm172, %v5339
      %5377 = vst.msk [vmem:[%s170 + $0xb0] sm:$0xff] %vm172, %v5340
      %5378 = vst.msk [vmem:[%s170 + $0xb8] sm:$0xff] %vm172, %v5341
      %5379 = vst.msk [vmem:[%s170 + $0xc0] sm:$0xff] %vm172, %v5342
      %5380 = vst.msk [vmem:[%s170 + $0xc8] sm:$0xff] %vm172, %v5343
      %5381 = vst.msk [vmem:[%s170 + $0xd0] sm:$0xff] %vm172, %v5344
      %5382 = vst.msk [vmem:[%s170 + $0xd8] sm:$0xff] %vm172, %v5345
      %5383 = vst.msk [vmem:[%s170 + $0xe0] sm:$0xff] %vm172, %v5346
      %5384 = vst.msk [vmem:[%s170 + $0xe8] sm:$0xff] %vm172, %v5347
      %5385 = vst.msk [vmem:[%s170 + $0xf0] sm:$0xff] %vm172, %v5348
      %5386 = vst.msk [vmem:[%s170 + $0xf8] sm:$0xff] %vm172, %v5349
      %5387 = vst.msk [vmem:[%s170 + $0x100] sm:$0xff] %vm172, %v5350
      %5388 = vst.msk [vmem:[%s170 + $0x108] sm:$0xff] %vm172, %v5351
      %5389 = vst.msk [vmem:[%s170 + $0x110] sm:$0xff] %vm172, %v5352
      %5390 = vst.msk [vmem:[%s170 + $0x118] sm:$0xff] %vm172, %v5353
      %5391 = vst.msk [vmem:[%s170 + $0x120] sm:$0x1] %vm209, %v5354
      %p5392 = scmp.lt.s32.totalorder %s14, 9
      %s5393 = scalar_select %p5392, %s14, 9
      %s5394 = smul.addr %s5393, 37
      %s5395 = smul.addr %s5394, 8
      %s5396 = scalar_lea.vmem %s3, %s5395
      // Predicated region
      $region33: #{tpu_custom_call.1} parent=31 // pred_check
        %p5397 = pneg %p100
      $region34: #{tpu_custom_call.1} parent=31 // pred_check_branch
        %5399 = sbr.rel (%p5397) target = $region36
      $region35: #{tpu_custom_call.1} parent=31 // pred_region
        _
      $region36: #{tpu_custom_call.1} parent=31 // pred_fallthru
        _
    $region32: #{tpu_custom_call.1} parent=5 // pred_fallthru
      _
    %p5400 = scmp.le.s32.totalorder 2, %s9
    // Predicated region
    $region37: #{tpu_custom_call.1} parent=5 // pred_check
      %p5401 = pneg %p5400
    $region38: #{tpu_custom_call.1} parent=5 // pred_check_branch
      %5403 = sbr.rel (%p5401) target = $region40
    $region39: #{tpu_custom_call.1} parent=5 // pred_region
      %s5404 = ssub.s32 %s9, 2
      // Predicated region
      $region41: #{tpu_custom_call.1} parent=39 // pred_check
        %p5405 = pneg %p106
      $region42: #{tpu_custom_call.1} parent=39 // pred_check_branch
        %5407 = sbr.rel (%p5405) target = $region44
      $region43: #{tpu_custom_call.1} parent=39 // pred_region
        %p5408 = scmp.lt.s32.totalorder %s15, 9
        %s5409 = scalar_select %p5408, %s15, 9
        %s5410 = smul.addr %s5409, 37
        %s5411 = smul.addr %s5410, 8
        %s5412 = scalar_lea.vmem %s3, %s5411
      $region44: #{tpu_custom_call.1} parent=39 // pred_fallthru
        _
    $region40: #{tpu_custom_call.1} parent=5 // pred_fallthru
      _
  $region6: #{tpu_custom_call.1} parent=0 // loop_footer
    %s13 = sadd.s32 1, %s9
  $region7: #{tpu_custom_call.1} parent=0 // loop_footer_branch
    %8 = sbr.rel target = $region3
  $region8: #{tpu_custom_call.1} parent=0 // loop_exit
    _

</llo_original>
